<compile_context>
chip_gen: v5e
topology: v5e:2x2
jax: 0.10.0
libtpu: 0.0.40
codegen_flags: <defaults>
</compile_context>

<pallas_src>
import jax
import jax.numpy as jnp
from jax import lax
from jax.experimental import pallas as pl
from jax.experimental.pallas import tpu as pltpu


def _round_up(x, m):
    return ((x + m - 1) // m) * m


def cbr2d_kernel(xp_ref, w1_ref, b1_ref, w2_ref, b2_ref, out_ref, mid_ref):
    # xp_ref : (1, H+2, W+2, Cin_p)   spatially padded input tile (one image)
    # w1_ref : (3, 3, Cin_p, Cout_p)  conv1 weight, BN1 scale folded in
    # b1_ref : (1, Cout_p)            BN1 folded bias
    # w2_ref : (3, 3, Cout_p, Cout_p) conv2 weight, BN2 scale folded in
    # b2_ref : (1, Cout_p)            BN2 folded bias
    # out_ref: (1, H, W, Cout_p)      lane-dense output (Cout_p % 128 == 0)
    # mid_ref: (H+2, W+2, Cout_p)     f32 scratch, 1-px border stays zero
    H, W, Cp = out_ref.shape[1], out_ref.shape[2], out_ref.shape[3]
    Cin_p = xp_ref.shape[3]

    # Scratch persists across grid iterations and the interior is fully
    # rewritten every step; zero it (border included) only once.
    @pl.when(pl.program_id(0) == 0)
    def _():
        mid_ref[...] = jnp.zeros_like(mid_ref)

    # ---- conv1: 3x3 "same" conv as 9 shifted matmuls on the MXU ----
    # Feed the input dtype straight to the MXU (bf16-friendly); accumulate f32.
    x = xp_ref[0]  # (H+2, W+2, Cin_p)
    acc1 = None
    for kx in range(3):
        # One sublane-shift relayout per kx (3 total, reused across ky),
        # instead of 9 unaligned slice+reshape copies.
        xs = x[:, kx:kx + W, :]                       # (H+2, W, Cin_p)
        for ky in range(3):
            tap = xs[ky:ky + H].reshape(H * W, Cin_p)  # major-axis slice: free
            d = jnp.dot(tap, w1_ref[ky, kx],
                        preferred_element_type=jnp.float32)
            acc1 = d if acc1 is None else acc1 + d
    # BN scale already folded into w1; only bias + ReLU here.
    y1 = jnp.maximum(acc1 + b1_ref[...], 0.0)
    mid_ref[1:H + 1, 1:W + 1, :] = y1.reshape(H, W, Cp)

    # ---- conv2: same structure, reading the zero-bordered intermediate ----
    # TODO(synk): store mid in bf16 to halve scratch when inputs are bf16.
    acc2 = None
    for kx in range(3):
        ms = mid_ref[:, kx:kx + W, :]                 # (H+2, W, Cout_p)
        for ky in range(3):
            tap = ms[ky:ky + H].reshape(H * W, Cp)
            d = jnp.dot(tap, w2_ref[ky, kx],
                        preferred_element_type=jnp.float32)
            acc2 = d if acc2 is None else acc2 + d
    y2 = jnp.maximum(acc2 + b2_ref[...], 0.0)
    out_ref[0] = y2.reshape(H, W, Cp).astype(out_ref.dtype)


def cbr2d_forward(x_nchw, params, eps=1e-5):
    """x_nchw: (N, Cin, H, W). Returns (N, Cout, H, W)."""
    w1, g1, be1, rm1, rv1, w2, g2, be2, rm2, rv2 = params

    # Fold BN (inference) into per-channel scale/bias; fold the scale into the
    # conv weights (standard conv-BN folding, done once on tiny arrays).
    s1 = g1 / jnp.sqrt(rv1 + eps)
    b1 = be1 - rm1 * s1
    s2 = g2 / jnp.sqrt(rv2 + eps)
    b2 = be2 - rm2 * s2

    N, Cin, H, W = x_nchw.shape
    Cout = w1.shape[0]
    Cin_p = _round_up(Cin, 128)    # lane-dense contraction dim
    Cout_p = _round_up(Cout, 128)  # lane-dense output dim

    # NCHW -> NHWC, pad spatially by 1 (conv padding=1) and channels to 128.
    x = jnp.transpose(x_nchw, (0, 2, 3, 1))
    xp = jnp.pad(x, ((0, 0), (1, 1), (1, 1), (0, Cin_p - Cin)))

    # PyTorch conv weight (Cout, Cin, kh, kw) -> (kh, kw, Cin, Cout),
    # BN scale folded per output channel, zero-padded channels (so padded
    # channels stay exactly zero through conv1 -> ReLU -> conv2).
    w1hw = jnp.transpose(w1, (2, 3, 1, 0)) * s1[None, None, None, :]
    w2hw = jnp.transpose(w2, (2, 3, 1, 0)) * s2[None, None, None, :]
    w1hw = jnp.pad(w1hw, ((0, 0), (0, 0), (0, Cin_p - Cin),
                          (0, Cout_p - Cout))).astype(jnp.float32)
    w2hw = jnp.pad(w2hw, ((0, 0), (0, 0), (0, Cout_p - Cout),
                          (0, Cout_p - Cout))).astype(jnp.float32)
    b1r = jnp.pad(b1, (0, Cout_p - Cout)).reshape(1, Cout_p)
    b2r = jnp.pad(b2, (0, Cout_p - Cout)).reshape(1, Cout_p)

    out_nhwc = pl.pallas_call(
        cbr2d_kernel,
        out_shape=jax.ShapeDtypeStruct((N, H, W, Cout_p), x.dtype),
        grid_spec=pltpu.PrefetchScalarGridSpec(
            num_scalar_prefetch=0,
            grid=(N,),
            in_specs=[
                pl.BlockSpec((1, H + 2, W + 2, Cin_p), lambda n: (n, 0, 0, 0)),
                pl.BlockSpec((3, 3, Cin_p, Cout_p), lambda n: (0, 0, 0, 0)),
                pl.BlockSpec((1, Cout_p), lambda n: (0, 0)),
                pl.BlockSpec((3, 3, Cout_p, Cout_p), lambda n: (0, 0, 0, 0)),
                pl.BlockSpec((1, Cout_p), lambda n: (0, 0)),
            ],
            out_specs=pl.BlockSpec((1, H, W, Cout_p), lambda n: (n, 0, 0, 0)),
            scratch_shapes=[pltpu.VMEM((H + 2, W + 2, Cout_p), jnp.float32)],
        ),
        compiler_params=pltpu.CompilerParams(
            dimension_semantics=("parallel",),
            vmem_limit_bytes=32 * 1024 * 1024,
        ),
    )(xp, w1hw, b1r, w2hw, b2r)

    # Slice off channel padding, back to NCHW.
    return jnp.transpose(out_nhwc[..., :Cout], (0, 3, 1, 2))


def _reference(x_nchw, params, eps=1e-5):
    """Pure-JAX reference (lax.conv) for correctness checking."""
    w1, g1, be1, rm1, rv1, w2, g2, be2, rm2, rv2 = params

    def conv(x, w):
        return lax.conv_general_dilated(
            x, w, window_strides=(1, 1), padding=((1, 1), (1, 1)),
            dimension_numbers=("NCHW", "OIHW", "NCHW"))

    def bn_relu(x, g, b, m, v):
        s = (g / jnp.sqrt(v + eps)).reshape(1, -1, 1, 1)
        sh = (b - m * g / jnp.sqrt(v + eps)).reshape(1, -1, 1, 1)
        return jnp.maximum(x * s + sh, 0.0)

    y = bn_relu(conv(x_nchw, w1), g1, be1, rm1, rv1)
    y = bn_relu(conv(y, w2), g2, be2, rm2, rv2)
    return y


def init_params(key, in_channel, out_channel):
    k1, k2 = jax.random.split(key)
    # Conv weights: deterministic random init (stand-in for kaiming init).
    w1 = jax.random.normal(k1, (out_channel, in_channel, 3, 3),
                           jnp.float32) * 0.1
    w2 = jax.random.normal(k2, (out_channel, out_channel, 3, 3),
                           jnp.float32) * 0.1
    # BatchNorm params at PyTorch defaults.
    g1 = jnp.ones((out_channel,), jnp.float32)
    be1 = jnp.zeros((out_channel,), jnp.float32)
    rm1 = jnp.zeros((out_channel,), jnp.float32)
    rv1 = jnp.ones((out_channel,), jnp.float32)
    g2 = jnp.ones((out_channel,), jnp.float32)
    be2 = jnp.zeros((out_channel,), jnp.float32)
    rm2 = jnp.zeros((out_channel,), jnp.float32)
    rv2 = jnp.ones((out_channel,), jnp.float32)
    return (w1, g1, be1, rm1, rv1, w2, g2, be2, rm2, rv2)


if __name__ == "__main__":
    key = jax.random.PRNGKey(0)
    k_x, k_p = jax.random.split(key)

    N, Cin, Cout, H, W = 2, 4, 8, 16, 16
    x = jax.random.normal(k_x, (N, Cin, H, W), jnp.float32)
    params = init_params(k_p, Cin, Cout)

    out = cbr2d_forward(x, params)
    out = jax.block_until_ready(out)

    ref = jax.block_until_ready(_reference(x, params))
    assert out.shape == (N, Cout, H, W)
    assert jnp.allclose(out, ref, rtol=1e-4, atol=1e-4)

    print("KERNEL_OK")
</pallas_src>

<mosaic_0001>
module attributes {stable_mosaic.version = 11 : i64} {
  func.func @cbr2d_kernel(%arg0: i32, %arg1: memref<1x18x18x128xf32, #tpu.memory_space<vmem>>, %arg2: memref<3x3x128x128xf32, #tpu.memory_space<vmem>>, %arg3: memref<1x128xf32, #tpu.memory_space<vmem>>, %arg4: memref<3x3x128x128xf32, #tpu.memory_space<vmem>>, %arg5: memref<1x128xf32, #tpu.memory_space<vmem>>, %arg6: memref<1x16x16x128xf32, #tpu.memory_space<vmem>>, %arg7: memref<18x18x128xf32, #tpu.memory_space<vmem>>) attributes {dimension_semantics = [#tpu.dimension_semantics<parallel>], iteration_bounds = array<i64: 2>, scalar_prefetch = 0 : i64, scratch_operands = 1 : i64, tpu.core_type = #tpu.core_type<tc>, window_params = [{transform_indices = @transform_0, window_bounds = array<i64: 1, 18, 18, 128>}, {pipeline_mode = #tpu.pipeline_mode<synchronous>, transform_indices = @transform_1, window_bounds = array<i64: 3, 3, 128, 128>}, {pipeline_mode = #tpu.pipeline_mode<synchronous>, transform_indices = @transform_2, window_bounds = array<i64: 1, 128>}, {pipeline_mode = #tpu.pipeline_mode<synchronous>, transform_indices = @transform_3, window_bounds = array<i64: 3, 3, 128, 128>}, {pipeline_mode = #tpu.pipeline_mode<synchronous>, transform_indices = @transform_4, window_bounds = array<i64: 1, 128>}, {transform_indices = @transform_5, window_bounds = array<i64: 1, 16, 16, 128>}]} {
    %c0_i32 = arith.constant 0 : i32
    %0 = arith.cmpi eq, %arg0, %c0_i32 : i32
    %1 = arith.extui %0 : i1 to i32
    %c0_i32_0 = arith.constant 0 : i32
    %2 = arith.cmpi ne, %1, %c0_i32_0 : i32
    scf.if %2 {
      %cst_113 = arith.constant 0.000000e+00 : f32
      %133 = vector.broadcast %cst_113 : f32 to vector<18x18x128xf32>
      %c0_114 = arith.constant 0 : index
      %c0_115 = arith.constant 0 : index
      %c0_116 = arith.constant 0 : index
      %134 = vector.load %arg7[%c0_114, %c0_115, %c0_116] : memref<18x18x128xf32, #tpu.memory_space<vmem>>, vector<18x18x128xf32>
      tpu.vector_store %arg7[%c0_114, %c0_115, %c0_116], %133 {strides = array<i32>} : memref<18x18x128xf32, #tpu.memory_space<vmem>>, vector<18x18x128xf32>,
    } else {
    }
    %c0 = arith.constant 0 : index
    %c0_1 = arith.constant 0 : index
    %c0_2 = arith.constant 0 : index
    %c0_3 = arith.constant 0 : index
    %3 = vector.load %arg1[%c0, %c0_1, %c0_2, %c0_3] : memref<1x18x18x128xf32, #tpu.memory_space<vmem>>, vector<1x18x18x128xf32>
    %4 = vector.shape_cast %3 : vector<1x18x18x128xf32> to vector<18x18x128xf32>
    %5 = vector.extract_strided_slice %4 {offsets = [0, 0, 0], sizes = [18, 16, 128], strides = [1, 1, 1]} : vector<18x18x128xf32> to vector<18x16x128xf32>
    %6 = vector.extract_strided_slice %5 {offsets = [0, 0, 0], sizes = [16, 16, 128], strides = [1, 1, 1]} : vector<18x16x128xf32> to vector<16x16x128xf32>
    %7 = vector.shape_cast %6 : vector<16x16x128xf32> to vector<256x128xf32>
    %c0_4 = arith.constant 0 : index
    %c0_5 = arith.constant 0 : index
    %c0_6 = arith.constant 0 : index
    %c0_7 = arith.constant 0 : index
    %8 = vector.load %arg2[%c0_4, %c0_5, %c0_6, %c0_7] : memref<3x3x128x128xf32, #tpu.memory_space<vmem>>, vector<1x1x128x128xf32>
    %9 = vector.shape_cast %8 : vector<1x1x128x128xf32> to vector<128x128xf32>
    %cst = arith.constant dense<0.000000e+00> : vector<256x128xf32>
    %10 = tpu.matmul %7, %9, %cst {dimension_numbers = #tpu.dot_dimension_numbers<[1], [0], [0], [1], [0, 0, 1, 1], [], []>} : vector<256x128xf32>, vector<128x128xf32>, vector<256x128xf32> -> vector<256x128xf32>
    %11 = vector.extract_strided_slice %5 {offsets = [1, 0, 0], sizes = [16, 16, 128], strides = [1, 1, 1]} : vector<18x16x128xf32> to vector<16x16x128xf32>
    %12 = vector.shape_cast %11 : vector<16x16x128xf32> to vector<256x128xf32>
    %c1 = arith.constant 1 : index
    %c0_8 = arith.constant 0 : index
    %c0_9 = arith.constant 0 : index
    %c0_10 = arith.constant 0 : index
    %13 = vector.load %arg2[%c1, %c0_8, %c0_9, %c0_10] : memref<3x3x128x128xf32, #tpu.memory_space<vmem>>, vector<1x1x128x128xf32>
    %14 = vector.shape_cast %13 : vector<1x1x128x128xf32> to vector<128x128xf32>
    %cst_11 = arith.constant dense<0.000000e+00> : vector<256x128xf32>
    %15 = tpu.matmul %12, %14, %cst_11 {dimension_numbers = #tpu.dot_dimension_numbers<[1], [0], [0], [1], [0, 0, 1, 1], [], []>} : vector<256x128xf32>, vector<128x128xf32>, vector<256x128xf32> -> vector<256x128xf32>
    %16 = arith.addf %10, %15 : vector<256x128xf32>
    %17 = vector.extract_strided_slice %5 {offsets = [2, 0, 0], sizes = [16, 16, 128], strides = [1, 1, 1]} : vector<18x16x128xf32> to vector<16x16x128xf32>
    %18 = vector.shape_cast %17 : vector<16x16x128xf32> to vector<256x128xf32>
    %c2 = arith.constant 2 : index
    %c0_12 = arith.constant 0 : index
    %c0_13 = arith.constant 0 : index
    %c0_14 = arith.constant 0 : index
    %19 = vector.load %arg2[%c2, %c0_12, %c0_13, %c0_14] : memref<3x3x128x128xf32, #tpu.memory_space<vmem>>, vector<1x1x128x128xf32>
    %20 = vector.shape_cast %19 : vector<1x1x128x128xf32> to vector<128x128xf32>
    %cst_15 = arith.constant dense<0.000000e+00> : vector<256x128xf32>
    %21 = tpu.matmul %18, %20, %cst_15 {dimension_numbers = #tpu.dot_dimension_numbers<[1], [0], [0], [1], [0, 0, 1, 1], [], []>} : vector<256x128xf32>, vector<128x128xf32>, vector<256x128xf32> -> vector<256x128xf32>
    %22 = arith.addf %16, %21 : vector<256x128xf32>
    %23 = vector.extract_strided_slice %4 {offsets = [0, 1, 0], sizes = [18, 16, 128], strides = [1, 1, 1]} : vector<18x18x128xf32> to vector<18x16x128xf32>
    %24 = vector.extract_strided_slice %23 {offsets = [0, 0, 0], sizes = [16, 16, 128], strides = [1, 1, 1]} : vector<18x16x128xf32> to vector<16x16x128xf32>
    %25 = vector.shape_cast %24 : vector<16x16x128xf32> to vector<256x128xf32>
    %c0_16 = arith.constant 0 : index
    %c1_17 = arith.constant 1 : index
    %c0_18 = arith.constant 0 : index
    %c0_19 = arith.constant 0 : index
    %26 = vector.load %arg2[%c0_16, %c1_17, %c0_18, %c0_19] : memref<3x3x128x128xf32, #tpu.memory_space<vmem>>, vector<1x1x128x128xf32>
    %27 = vector.shape_cast %26 : vector<1x1x128x128xf32> to vector<128x128xf32>
    %cst_20 = arith.constant dense<0.000000e+00> : vector<256x128xf32>
    %28 = tpu.matmul %25, %27, %cst_20 {dimension_numbers = #tpu.dot_dimension_numbers<[1], [0], [0], [1], [0, 0, 1, 1], [], []>} : vector<256x128xf32>, vector<128x128xf32>, vector<256x128xf32> -> vector<256x128xf32>
    %29 = arith.addf %22, %28 : vector<256x128xf32>
    %30 = vector.extract_strided_slice %23 {offsets = [1, 0, 0], sizes = [16, 16, 128], strides = [1, 1, 1]} : vector<18x16x128xf32> to vector<16x16x128xf32>
    %31 = vector.shape_cast %30 : vector<16x16x128xf32> to vector<256x128xf32>
    %c1_21 = arith.constant 1 : index
    %c1_22 = arith.constant 1 : index
    %c0_23 = arith.constant 0 : index
    %c0_24 = arith.constant 0 : index
    %32 = vector.load %arg2[%c1_21, %c1_22, %c0_23, %c0_24] : memref<3x3x128x128xf32, #tpu.memory_space<vmem>>, vector<1x1x128x128xf32>
    %33 = vector.shape_cast %32 : vector<1x1x128x128xf32> to vector<128x128xf32>
    %cst_25 = arith.constant dense<0.000000e+00> : vector<256x128xf32>
    %34 = tpu.matmul %31, %33, %cst_25 {dimension_numbers = #tpu.dot_dimension_numbers<[1], [0], [0], [1], [0, 0, 1, 1], [], []>} : vector<256x128xf32>, vector<128x128xf32>, vector<256x128xf32> -> vector<256x128xf32>
    %35 = arith.addf %29, %34 : vector<256x128xf32>
    %36 = vector.extract_strided_slice %23 {offsets = [2, 0, 0], sizes = [16, 16, 128], strides = [1, 1, 1]} : vector<18x16x128xf32> to vector<16x16x128xf32>
    %37 = vector.shape_cast %36 : vector<16x16x128xf32> to vector<256x128xf32>
    %c2_26 = arith.constant 2 : index
    %c1_27 = arith.constant 1 : index
    %c0_28 = arith.constant 0 : index
    %c0_29 = arith.constant 0 : index
    %38 = vector.load %arg2[%c2_26, %c1_27, %c0_28, %c0_29] : memref<3x3x128x128xf32, #tpu.memory_space<vmem>>, vector<1x1x128x128xf32>
    %39 = vector.shape_cast %38 : vector<1x1x128x128xf32> to vector<128x128xf32>
    %cst_30 = arith.constant dense<0.000000e+00> : vector<256x128xf32>
    %40 = tpu.matmul %37, %39, %cst_30 {dimension_numbers = #tpu.dot_dimension_numbers<[1], [0], [0], [1], [0, 0, 1, 1], [], []>} : vector<256x128xf32>, vector<128x128xf32>, vector<256x128xf32> -> vector<256x128xf32>
    %41 = arith.addf %35, %40 : vector<256x128xf32>
    %42 = vector.extract_strided_slice %4 {offsets = [0, 2, 0], sizes = [18, 16, 128], strides = [1, 1, 1]} : vector<18x18x128xf32> to vector<18x16x128xf32>
    %43 = vector.extract_strided_slice %42 {offsets = [0, 0, 0], sizes = [16, 16, 128], strides = [1, 1, 1]} : vector<18x16x128xf32> to vector<16x16x128xf32>
    %44 = vector.shape_cast %43 : vector<16x16x128xf32> to vector<256x128xf32>
    %c0_31 = arith.constant 0 : index
    %c2_32 = arith.constant 2 : index
    %c0_33 = arith.constant 0 : index
    %c0_34 = arith.constant 0 : index
    %45 = vector.load %arg2[%c0_31, %c2_32, %c0_33, %c0_34] : memref<3x3x128x128xf32, #tpu.memory_space<vmem>>, vector<1x1x128x128xf32>
    %46 = vector.shape_cast %45 : vector<1x1x128x128xf32> to vector<128x128xf32>
    %cst_35 = arith.constant dense<0.000000e+00> : vector<256x128xf32>
    %47 = tpu.matmul %44, %46, %cst_35 {dimension_numbers = #tpu.dot_dimension_numbers<[1], [0], [0], [1], [0, 0, 1, 1], [], []>} : vector<256x128xf32>, vector<128x128xf32>, vector<256x128xf32> -> vector<256x128xf32>
    %48 = arith.addf %41, %47 : vector<256x128xf32>
    %49 = vector.extract_strided_slice %42 {offsets = [1, 0, 0], sizes = [16, 16, 128], strides = [1, 1, 1]} : vector<18x16x128xf32> to vector<16x16x128xf32>
    %50 = vector.shape_cast %49 : vector<16x16x128xf32> to vector<256x128xf32>
    %c1_36 = arith.constant 1 : index
    %c2_37 = arith.constant 2 : index
    %c0_38 = arith.constant 0 : index
    %c0_39 = arith.constant 0 : index
    %51 = vector.load %arg2[%c1_36, %c2_37, %c0_38, %c0_39] : memref<3x3x128x128xf32, #tpu.memory_space<vmem>>, vector<1x1x128x128xf32>
    %52 = vector.shape_cast %51 : vector<1x1x128x128xf32> to vector<128x128xf32>
    %cst_40 = arith.constant dense<0.000000e+00> : vector<256x128xf32>
    %53 = tpu.matmul %50, %52, %cst_40 {dimension_numbers = #tpu.dot_dimension_numbers<[1], [0], [0], [1], [0, 0, 1, 1], [], []>} : vector<256x128xf32>, vector<128x128xf32>, vector<256x128xf32> -> vector<256x128xf32>
    %54 = arith.addf %48, %53 : vector<256x128xf32>
    %55 = vector.extract_strided_slice %42 {offsets = [2, 0, 0], sizes = [16, 16, 128], strides = [1, 1, 1]} : vector<18x16x128xf32> to vector<16x16x128xf32>
    %56 = vector.shape_cast %55 : vector<16x16x128xf32> to vector<256x128xf32>
    %c2_41 = arith.constant 2 : index
    %c2_42 = arith.constant 2 : index
    %c0_43 = arith.constant 0 : index
    %c0_44 = arith.constant 0 : index
    %57 = vector.load %arg2[%c2_41, %c2_42, %c0_43, %c0_44] : memref<3x3x128x128xf32, #tpu.memory_space<vmem>>, vector<1x1x128x128xf32>
    %58 = vector.shape_cast %57 : vector<1x1x128x128xf32> to vector<128x128xf32>
    %cst_45 = arith.constant dense<0.000000e+00> : vector<256x128xf32>
    %59 = tpu.matmul %56, %58, %cst_45 {dimension_numbers = #tpu.dot_dimension_numbers<[1], [0], [0], [1], [0, 0, 1, 1], [], []>} : vector<256x128xf32>, vector<128x128xf32>, vector<256x128xf32> -> vector<256x128xf32>
    %60 = arith.addf %54, %59 : vector<256x128xf32>
    %c0_46 = arith.constant 0 : index
    %c0_47 = arith.constant 0 : index
    %61 = vector.load %arg3[%c0_46, %c0_47] : memref<1x128xf32, #tpu.memory_space<vmem>>, vector<1x128xf32>
    %62 = vector.broadcast %61 : vector<1x128xf32> to vector<256x128xf32>
    %63 = arith.addf %60, %62 : vector<256x128xf32>
    %cst_48 = arith.constant 0.000000e+00 : f32
    %64 = vector.broadcast %cst_48 : f32 to vector<256x128xf32>
    %65 = arith.maximumf %63, %64 : vector<256x128xf32>
    %66 = vector.shape_cast %65 : vector<256x128xf32> to vector<16x16x128xf32>
    %c1_49 = arith.constant 1 : index
    %c1_50 = arith.constant 1 : index
    %c0_51 = arith.constant 0 : index
    %67 = vector.load %arg7[%c1_49, %c1_50, %c0_51] : memref<18x18x128xf32, #tpu.memory_space<vmem>>, vector<16x16x128xf32>
    tpu.vector_store %arg7[%c1_49, %c1_50, %c0_51], %66 {strides = array<i32>} : memref<18x18x128xf32, #tpu.memory_space<vmem>>, vector<16x16x128xf32>,
    %c0_52 = arith.constant 0 : index
    %c0_53 = arith.constant 0 : index
    %c0_54 = arith.constant 0 : index
    %68 = vector.load %arg7[%c0_52, %c0_53, %c0_54] : memref<18x18x128xf32, #tpu.memory_space<vmem>>, vector<18x16x128xf32>
    %69 = vector.extract_strided_slice %68 {offsets = [0, 0, 0], sizes = [16, 16, 128], strides = [1, 1, 1]} : vector<18x16x128xf32> to vector<16x16x128xf32>
    %70 = vector.shape_cast %69 : vector<16x16x128xf32> to vector<256x128xf32>
    %c0_55 = arith.constant 0 : index
    %c0_56 = arith.constant 0 : index
    %c0_57 = arith.constant 0 : index
    %c0_58 = arith.constant 0 : index
    %71 = vector.load %arg4[%c0_55, %c0_56, %c0_57, %c0_58] : memref<3x3x128x128xf32, #tpu.memory_space<vmem>>, vector<1x1x128x128xf32>
    %72 = vector.shape_cast %71 : vector<1x1x128x128xf32> to vector<128x128xf32>
    %cst_59 = arith.constant dense<0.000000e+00> : vector<256x128xf32>
    %73 = tpu.matmul %70, %72, %cst_59 {dimension_numbers = #tpu.dot_dimension_numbers<[1], [0], [0], [1], [0, 0, 1, 1], [], []>} : vector<256x128xf32>, vector<128x128xf32>, vector<256x128xf32> -> vector<256x128xf32>
    %74 = vector.extract_strided_slice %68 {offsets = [1, 0, 0], sizes = [16, 16, 128], strides = [1, 1, 1]} : vector<18x16x128xf32> to vector<16x16x128xf32>
    %75 = vector.shape_cast %74 : vector<16x16x128xf32> to vector<256x128xf32>
    %c1_60 = arith.constant 1 : index
    %c0_61 = arith.constant 0 : index
    %c0_62 = arith.constant 0 : index
    %c0_63 = arith.constant 0 : index
    %76 = vector.load %arg4[%c1_60, %c0_61, %c0_62, %c0_63] : memref<3x3x128x128xf32, #tpu.memory_space<vmem>>, vector<1x1x128x128xf32>
    %77 = vector.shape_cast %76 : vector<1x1x128x128xf32> to vector<128x128xf32>
    %cst_64 = arith.constant dense<0.000000e+00> : vector<256x128xf32>
    %78 = tpu.matmul %75, %77, %cst_64 {dimension_numbers = #tpu.dot_dimension_numbers<[1], [0], [0], [1], [0, 0, 1, 1], [], []>} : vector<256x128xf32>, vector<128x128xf32>, vector<256x128xf32> -> vector<256x128xf32>
    %79 = arith.addf %73, %78 : vector<256x128xf32>
    %80 = vector.extract_strided_slice %68 {offsets = [2, 0, 0], sizes = [16, 16, 128], strides = [1, 1, 1]} : vector<18x16x128xf32> to vector<16x16x128xf32>
    %81 = vector.shape_cast %80 : vector<16x16x128xf32> to vector<256x128xf32>
    %c2_65 = arith.constant 2 : index
    %c0_66 = arith.constant 0 : index
    %c0_67 = arith.constant 0 : index
    %c0_68 = arith.constant 0 : index
    %82 = vector.load %arg4[%c2_65, %c0_66, %c0_67, %c0_68] : memref<3x3x128x128xf32, #tpu.memory_space<vmem>>, vector<1x1x128x128xf32>
    %83 = vector.shape_cast %82 : vector<1x1x128x128xf32> to vector<128x128xf32>
    %cst_69 = arith.constant dense<0.000000e+00> : vector<256x128xf32>
    %84 = tpu.matmul %81, %83, %cst_69 {dimension_numbers = #tpu.dot_dimension_numbers<[1], [0], [0], [1], [0, 0, 1, 1], [], []>} : vector<256x128xf32>, vector<128x128xf32>, vector<256x128xf32> -> vector<256x128xf32>
    %85 = arith.addf %79, %84 : vector<256x128xf32>
    %c0_70 = arith.constant 0 : index
    %c1_71 = arith.constant 1 : index
    %c0_72 = arith.constant 0 : index
    %86 = vector.load %arg7[%c0_70, %c1_71, %c0_72] : memref<18x18x128xf32, #tpu.memory_space<vmem>>, vector<18x16x128xf32>
    %87 = vector.extract_strided_slice %86 {offsets = [0, 0, 0], sizes = [16, 16, 128], strides = [1, 1, 1]} : vector<18x16x128xf32> to vector<16x16x128xf32>
    %88 = vector.shape_cast %87 : vector<16x16x128xf32> to vector<256x128xf32>
    %c0_73 = arith.constant 0 : index
    %c1_74 = arith.constant 1 : index
    %c0_75 = arith.constant 0 : index
    %c0_76 = arith.constant 0 : index
    %89 = vector.load %arg4[%c0_73, %c1_74, %c0_75, %c0_76] : memref<3x3x128x128xf32, #tpu.memory_space<vmem>>, vector<1x1x128x128xf32>
    %90 = vector.shape_cast %89 : vector<1x1x128x128xf32> to vector<128x128xf32>
    %cst_77 = arith.constant dense<0.000000e+00> : vector<256x128xf32>
    %91 = tpu.matmul %88, %90, %cst_77 {dimension_numbers = #tpu.dot_dimension_numbers<[1], [0], [0], [1], [0, 0, 1, 1], [], []>} : vector<256x128xf32>, vector<128x128xf32>, vector<256x128xf32> -> vector<256x128xf32>
    %92 = arith.addf %85, %91 : vector<256x128xf32>
    %93 = vector.extract_strided_slice %86 {offsets = [1, 0, 0], sizes = [16, 16, 128], strides = [1, 1, 1]} : vector<18x16x128xf32> to vector<16x16x128xf32>
    %94 = vector.shape_cast %93 : vector<16x16x128xf32> to vector<256x128xf32>
    %c1_78 = arith.constant 1 : index
    %c1_79 = arith.constant 1 : index
    %c0_80 = arith.constant 0 : index
    %c0_81 = arith.constant 0 : index
    %95 = vector.load %arg4[%c1_78, %c1_79, %c0_80, %c0_81] : memref<3x3x128x128xf32, #tpu.memory_space<vmem>>, vector<1x1x128x128xf32>
    %96 = vector.shape_cast %95 : vector<1x1x128x128xf32> to vector<128x128xf32>
    %cst_82 = arith.constant dense<0.000000e+00> : vector<256x128xf32>
    %97 = tpu.matmul %94, %96, %cst_82 {dimension_numbers = #tpu.dot_dimension_numbers<[1], [0], [0], [1], [0, 0, 1, 1], [], []>} : vector<256x128xf32>, vector<128x128xf32>, vector<256x128xf32> -> vector<256x128xf32>
    %98 = arith.addf %92, %97 : vector<256x128xf32>
    %99 = vector.extract_strided_slice %86 {offsets = [2, 0, 0], sizes = [16, 16, 128], strides = [1, 1, 1]} : vector<18x16x128xf32> to vector<16x16x128xf32>
    %100 = vector.shape_cast %99 : vector<16x16x128xf32> to vector<256x128xf32>
    %c2_83 = arith.constant 2 : index
    %c1_84 = arith.constant 1 : index
    %c0_85 = arith.constant 0 : index
    %c0_86 = arith.constant 0 : index
    %101 = vector.load %arg4[%c2_83, %c1_84, %c0_85, %c0_86] : memref<3x3x128x128xf32, #tpu.memory_space<vmem>>, vector<1x1x128x128xf32>
    %102 = vector.shape_cast %101 : vector<1x1x128x128xf32> to vector<128x128xf32>
    %cst_87 = arith.constant dense<0.000000e+00> : vector<256x128xf32>
    %103 = tpu.matmul %100, %102, %cst_87 {dimension_numbers = #tpu.dot_dimension_numbers<[1], [0], [0], [1], [0, 0, 1, 1], [], []>} : vector<256x128xf32>, vector<128x128xf32>, vector<256x128xf32> -> vector<256x128xf32>
    %104 = arith.addf %98, %103 : vector<256x128xf32>
    %c0_88 = arith.constant 0 : index
    %c2_89 = arith.constant 2 : index
    %c0_90 = arith.constant 0 : index
    %105 = vector.load %arg7[%c0_88, %c2_89, %c0_90] : memref<18x18x128xf32, #tpu.memory_space<vmem>>, vector<18x16x128xf32>
    %106 = vector.extract_strided_slice %105 {offsets = [0, 0, 0], sizes = [16, 16, 128], strides = [1, 1, 1]} : vector<18x16x128xf32> to vector<16x16x128xf32>
    %107 = vector.shape_cast %106 : vector<16x16x128xf32> to vector<256x128xf32>
    %c0_91 = arith.constant 0 : index
    %c2_92 = arith.constant 2 : index
    %c0_93 = arith.constant 0 : index
    %c0_94 = arith.constant 0 : index
    %108 = vector.load %arg4[%c0_91, %c2_92, %c0_93, %c0_94] : memref<3x3x128x128xf32, #tpu.memory_space<vmem>>, vector<1x1x128x128xf32>
    %109 = vector.shape_cast %108 : vector<1x1x128x128xf32> to vector<128x128xf32>
    %cst_95 = arith.constant dense<0.000000e+00> : vector<256x128xf32>
    %110 = tpu.matmul %107, %109, %cst_95 {dimension_numbers = #tpu.dot_dimension_numbers<[1], [0], [0], [1], [0, 0, 1, 1], [], []>} : vector<256x128xf32>, vector<128x128xf32>, vector<256x128xf32> -> vector<256x128xf32>
    %111 = arith.addf %104, %110 : vector<256x128xf32>
    %112 = vector.extract_strided_slice %105 {offsets = [1, 0, 0], sizes = [16, 16, 128], strides = [1, 1, 1]} : vector<18x16x128xf32> to vector<16x16x128xf32>
    %113 = vector.shape_cast %112 : vector<16x16x128xf32> to vector<256x128xf32>
    %c1_96 = arith.constant 1 : index
    %c2_97 = arith.constant 2 : index
    %c0_98 = arith.constant 0 : index
    %c0_99 = arith.constant 0 : index
    %114 = vector.load %arg4[%c1_96, %c2_97, %c0_98, %c0_99] : memref<3x3x128x128xf32, #tpu.memory_space<vmem>>, vector<1x1x128x128xf32>
    %115 = vector.shape_cast %114 : vector<1x1x128x128xf32> to vector<128x128xf32>
    %cst_100 = arith.constant dense<0.000000e+00> : vector<256x128xf32>
    %116 = tpu.matmul %113, %115, %cst_100 {dimension_numbers = #tpu.dot_dimension_numbers<[1], [0], [0], [1], [0, 0, 1, 1], [], []>} : vector<256x128xf32>, vector<128x128xf32>, vector<256x128xf32> -> vector<256x128xf32>
    %117 = arith.addf %111, %116 : vector<256x128xf32>
    %118 = vector.extract_strided_slice %105 {offsets = [2, 0, 0], sizes = [16, 16, 128], strides = [1, 1, 1]} : vector<18x16x128xf32> to vector<16x16x128xf32>
    %119 = vector.shape_cast %118 : vector<16x16x128xf32> to vector<256x128xf32>
    %c2_101 = arith.constant 2 : index
    %c2_102 = arith.constant 2 : index
    %c0_103 = arith.constant 0 : index
    %c0_104 = arith.constant 0 : index
    %120 = vector.load %arg4[%c2_101, %c2_102, %c0_103, %c0_104] : memref<3x3x128x128xf32, #tpu.memory_space<vmem>>, vector<1x1x128x128xf32>
    %121 = vector.shape_cast %120 : vector<1x1x128x128xf32> to vector<128x128xf32>
    %cst_105 = arith.constant dense<0.000000e+00> : vector<256x128xf32>
    %122 = tpu.matmul %119, %121, %cst_105 {dimension_numbers = #tpu.dot_dimension_numbers<[1], [0], [0], [1], [0, 0, 1, 1], [], []>} : vector<256x128xf32>, vector<128x128xf32>, vector<256x128xf32> -> vector<256x128xf32>
    %123 = arith.addf %117, %122 : vector<256x128xf32>
    %c0_106 = arith.constant 0 : index
    %c0_107 = arith.constant 0 : index
    %124 = vector.load %arg5[%c0_106, %c0_107] : memref<1x128xf32, #tpu.memory_space<vmem>>, vector<1x128xf32>
    %125 = vector.broadcast %124 : vector<1x128xf32> to vector<256x128xf32>
    %126 = arith.addf %123, %125 : vector<256x128xf32>
    %cst_108 = arith.constant 0.000000e+00 : f32
    %127 = vector.broadcast %cst_108 : f32 to vector<256x128xf32>
    %128 = arith.maximumf %126, %127 : vector<256x128xf32>
    %129 = vector.shape_cast %128 : vector<256x128xf32> to vector<16x16x128xf32>
    %c0_109 = arith.constant 0 : index
    %c0_110 = arith.constant 0 : index
    %c0_111 = arith.constant 0 : index
    %c0_112 = arith.constant 0 : index
    %130 = vector.load %arg6[%c0_109, %c0_110, %c0_111, %c0_112] : memref<1x16x16x128xf32, #tpu.memory_space<vmem>>, vector<1x16x16x128xf32>
    %131 = vector.shape_cast %130 : vector<1x16x16x128xf32> to vector<16x16x128xf32>
    %132 = vector.shape_cast %129 : vector<16x16x128xf32> to vector<1x16x16x128xf32>
    tpu.vector_store %arg6[%c0_109, %c0_110, %c0_111, %c0_112], %132 {strides = array<i32>} : memref<1x16x16x128xf32, #tpu.memory_space<vmem>>, vector<1x16x16x128xf32>,
    return
  }
  func.func @transform_0(%arg0: i32) -> (i32, i32, i32, i32) {
    %c0_i32 = arith.constant 0 : i32
    %c0_i32_0 = arith.constant 0 : i32
    %c0_i32_1 = arith.constant 0 : i32
    %c0_i32_2 = arith.constant 0 : i32
    return %arg0, %c0_i32, %c0_i32_0, %c0_i32_1 : i32, i32, i32, i32
  }
  func.func @transform_1(%arg0: i32) -> (i32, i32, i32, i32) {
    %c0_i32 = arith.constant 0 : i32
    %c0_i32_0 = arith.constant 0 : i32
    %c0_i32_1 = arith.constant 0 : i32
    %c0_i32_2 = arith.constant 0 : i32
    %c0_i32_3 = arith.constant 0 : i32
    return %c0_i32, %c0_i32_0, %c0_i32_1, %c0_i32_2 : i32, i32, i32, i32
  }
  func.func @transform_2(%arg0: i32) -> (i32, i32) {
    %c0_i32 = arith.constant 0 : i32
    %c0_i32_0 = arith.constant 0 : i32
    %c0_i32_1 = arith.constant 0 : i32
    return %c0_i32, %c0_i32_0 : i32, i32
  }
  func.func @transform_3(%arg0: i32) -> (i32, i32, i32, i32) {
    %c0_i32 = arith.constant 0 : i32
    %c0_i32_0 = arith.constant 0 : i32
    %c0_i32_1 = arith.constant 0 : i32
    %c0_i32_2 = arith.constant 0 : i32
    %c0_i32_3 = arith.constant 0 : i32
    return %c0_i32, %c0_i32_0, %c0_i32_1, %c0_i32_2 : i32, i32, i32, i32
  }
  func.func @transform_4(%arg0: i32) -> (i32, i32) {
    %c0_i32 = arith.constant 0 : i32
    %c0_i32_0 = arith.constant 0 : i32
    %c0_i32_1 = arith.constant 0 : i32
    return %c0_i32, %c0_i32_0 : i32, i32
  }
  func.func @transform_5(%arg0: i32) -> (i32, i32, i32, i32) {
    %c0_i32 = arith.constant 0 : i32
    %c0_i32_0 = arith.constant 0 : i32
    %c0_i32_1 = arith.constant 0 : i32
    %c0_i32_2 = arith.constant 0 : i32
    return %arg0, %c0_i32, %c0_i32_0, %c0_i32_1 : i32, i32, i32, i32
  }
}

</mosaic_0001>

<llo_original>
// kernel: tpu_custom_call.1
$region0: #{tpu_custom_call.1}
  #allocation0 [shape = 'u32[]', space=smem, size = 0x4, offset = 0x4, fixed_abs, tag = 'smem constant byte address 0x4 - core index']
  #allocation1 [shape = 'u32[72,128]{1,0:T(1,128)}', space=vmem, size = 0x9000, scoped, tag = 'internal scratch']
  #allocation2 [shape = 'f32[18,18,128]{2,1,0:T(8,128)}', space=vmem, size = 0x36000, scoped, tag = 'scratch operand']
  %s0 = inlined_call_operand.vmem [shape: f32[2,18,18,128], index: 0, kind: input, shape index: {}]
  %s1 = inlined_call_operand.vmem [shape: f32[3,3,128,128], index: 1, kind: input, shape index: {}]
  %s2 = inlined_call_operand.vmem [shape: f32[1,128], index: 2, kind: input, shape index: {}]
  %s3 = inlined_call_operand.hbm [shape: f32[3,3,128,128], index: 3, kind: input, shape index: {}]
  %s4 = inlined_call_operand.vmem [shape: f32[1,128], index: 4, kind: input, shape index: {}]
  %s5 = inlined_call_operand.hbm [shape: f32[2,16,16,128], index: 5, kind: output, shape index: {}]
  %s6 = sld [smem:[#allocation0]]
  $region61: #{tpu_custom_call.1} parent=0
    _
  %s8 = ssub.s32 1, %s6
  %s9 = scalar_select 0, %s8, %s6
  $region1: #{tpu_custom_call.1} parent=0
    #allocation3 [shape = 'u8[589824]{0}', space=vmem, size = 0x90000, scoped, tag = 'input window, operand 3, single buffered']
    #allocation4 [shape = 's32[2]{0}', space=sflag, size = 0x8, scoped, tag = 'scoped memory for tpu_custom_call.1']
    #allocation5 [shape = 's32[2]{0}', space=sflag, size = 0x8, scoped, tag = 'scoped memory for tpu_custom_call.1']
    #allocation6 [shape = 'u8[262144]{0}', space=vmem, size = 0x40000, scoped, tag = 'output window, operand 0']
    %10 = vsyncpa [#allocation4], 0
    %11 = vsyncpa [#allocation5], 0
    %s12 = scalar_lea.sflag [#allocation5], 1
    %13 = vsyncpa %s12, 0
    loop: start=0, step=1, limit=4
    $region2: #{tpu_custom_call.1} parent=1 // loop_pre_header
      _
    $region3: #{tpu_custom_call.1} parent=1 // loop_header
      %s15 = sphi 0, %s19
      %p16 = scmp.ge.s32.totalorder %s15, 4
      %s25 = sphi 0, %s27
      %s28 = sphi 0, %s25
      %s29 = sphi 0, %s28
      %s45 = sphi 0, %s29
      %s49 = sphi 0, %s49
      %s51 = sphi 0, %s49
      %s52 = sphi 0, %s51
      %s66 = sphi 0, %s52
      %s70 = sphi 0, %s70
      %s72 = sphi 0, %s70
      %s73 = sphi 0, %s72
      %s87 = sphi 0, %s73
      %s91 = sphi 0, %s91
      %s93 = sphi 0, %s91
      %s94 = sphi 0, %s93
      %s108 = sphi 0, %s94
      %s112 = sphi 0, %s112
      %s114 = sphi 0, %s112
      %s115 = sphi 0, %s114
      %s129 = sphi 0, %s115
      %s135 = sphi 0, %s137
      %s138 = sphi 0, %s135
      %s139 = sphi 0, %s138
      %s155 = sphi 0, %s139
    $region4: #{tpu_custom_call.1} parent=1 // loop_header_branch
      %18 = sbr.rel (%p16) target = $region8
    $region5: #{tpu_custom_call.1} parent=1 // loop_body
      %s20 = ssub.s32 %s15, 1
      %s21 = ssub.s32 %s15, 2
      %s22 = sadd.s32 %s15, 1
      %s23 = ssub.s32 %s15, %s22
      %p24 = scmp.eq.s32.totalorder %s23, 0
      %s26 = sadd.s32 %s25, 1
      %s27 = scalar_select %p24, %s25, %s26
      %p30 = pneg %p24
      %p31 = scmp.eq.s32.totalorder %s15, 1
      %p32 = por %p30, %p31
      %p33 = scmp.ne.s32.totalorder %s25, %s28
      %p34 = scmp.eq.s32.totalorder %s15, 0
      %p35 = por %p33, %p34
      %p36 = scmp.ne.s32.totalorder %s25, %s28
      %p37 = scmp.eq.s32.totalorder %s20, 1
      %p38 = por %p36, %p37
      %p39 = scmp.ne.s32.totalorder %s28, %s29
      %p40 = scmp.eq.s32.totalorder %s20, 0
      %p41 = por %p39, %p40
      %p42 = scmp.ne.s32.totalorder %s28, %s29
      %p43 = scmp.eq.s32.totalorder %s21, 1
      %p44 = por %p42, %p43
      %p46 = scmp.ne.s32.totalorder %s29, %s45
      %p47 = scmp.eq.s32.totalorder %s21, 0
      %p48 = por %p46, %p47
      %s50 = sadd.s32 %s49, 1
      %p53 = scmp.eq.s32.totalorder %s15, 1
      %p54 = scmp.ne.s32.totalorder %s49, %s51
      %p55 = scmp.eq.s32.totalorder %s15, 0
      %p56 = por %p54, %p55
      %p57 = scmp.ne.s32.totalorder %s49, %s51
      %p58 = scmp.eq.s32.totalorder %s20, 1
      %p59 = por %p57, %p58
      %p60 = scmp.ne.s32.totalorder %s51, %s52
      %p61 = scmp.eq.s32.totalorder %s20, 0
      %p62 = por %p60, %p61
      %p63 = scmp.ne.s32.totalorder %s51, %s52
      %p64 = scmp.eq.s32.totalorder %s21, 1
      %p65 = por %p63, %p64
      %p67 = scmp.ne.s32.totalorder %s52, %s66
      %p68 = scmp.eq.s32.totalorder %s21, 0
      %p69 = por %p67, %p68
      %s71 = sadd.s32 %s70, 1
      %p74 = scmp.eq.s32.totalorder %s15, 1
      %p75 = scmp.ne.s32.totalorder %s70, %s72
      %p76 = scmp.eq.s32.totalorder %s15, 0
      %p77 = por %p75, %p76
      %p78 = scmp.ne.s32.totalorder %s70, %s72
      %p79 = scmp.eq.s32.totalorder %s20, 1
      %p80 = por %p78, %p79
      %p81 = scmp.ne.s32.totalorder %s72, %s73
      %p82 = scmp.eq.s32.totalorder %s20, 0
      %p83 = por %p81, %p82
      %p84 = scmp.ne.s32.totalorder %s72, %s73
      %p85 = scmp.eq.s32.totalorder %s21, 1
      %p86 = por %p84, %p85
      %p88 = scmp.ne.s32.totalorder %s73, %s87
      %p89 = scmp.eq.s32.totalorder %s21, 0
      %p90 = por %p88, %p89
      %s92 = sadd.s32 %s91, 1
      %p95 = scmp.eq.s32.totalorder %s15, 1
      %p96 = scmp.ne.s32.totalorder %s91, %s93
      %p97 = scmp.eq.s32.totalorder %s15, 0
      %p98 = por %p96, %p97
      %p99 = scmp.ne.s32.totalorder %s91, %s93
      %p100 = scmp.eq.s32.totalorder %s20, 1
      %p101 = por %p99, %p100
      %p102 = scmp.ne.s32.totalorder %s93, %s94
      %p103 = scmp.eq.s32.totalorder %s20, 0
      %p104 = por %p102, %p103
      %p105 = scmp.ne.s32.totalorder %s93, %s94
      %p106 = scmp.eq.s32.totalorder %s21, 1
      %p107 = por %p105, %p106
      %p109 = scmp.ne.s32.totalorder %s94, %s108
      %p110 = scmp.eq.s32.totalorder %s21, 0
      %p111 = por %p109, %p110
      %s113 = sadd.s32 %s112, 1
      %p116 = scmp.eq.s32.totalorder %s15, 1
      %p117 = scmp.ne.s32.totalorder %s112, %s114
      %p118 = scmp.eq.s32.totalorder %s15, 0
      %p119 = por %p117, %p118
      %p120 = scmp.ne.s32.totalorder %s112, %s114
      %p121 = scmp.eq.s32.totalorder %s20, 1
      %p122 = por %p120, %p121
      %p123 = scmp.ne.s32.totalorder %s114, %s115
      %p124 = scmp.eq.s32.totalorder %s20, 0
      %p125 = por %p123, %p124
      %p126 = scmp.ne.s32.totalorder %s114, %s115
      %p127 = scmp.eq.s32.totalorder %s21, 1
      %p128 = por %p126, %p127
      %p130 = scmp.ne.s32.totalorder %s115, %s129
      %p131 = scmp.eq.s32.totalorder %s21, 0
      %p132 = por %p130, %p131
      %s133 = ssub.s32 %s15, %s22
      %p134 = scmp.eq.s32.totalorder %s133, 0
      %s136 = sadd.s32 %s135, 1
      %s137 = scalar_select %p134, %s135, %s136
      %p140 = pneg %p134
      %p141 = scmp.eq.s32.totalorder %s15, 1
      %p142 = por %p140, %p141
      %p143 = scmp.ne.s32.totalorder %s135, %s138
      %p144 = scmp.eq.s32.totalorder %s15, 0
      %p145 = por %p143, %p144
      %p146 = scmp.ne.s32.totalorder %s135, %s138
      %p147 = scmp.eq.s32.totalorder %s20, 1
      %p148 = por %p146, %p147
      %p149 = scmp.ne.s32.totalorder %s138, %s139
      %p150 = scmp.eq.s32.totalorder %s20, 0
      %p151 = por %p149, %p150
      %p152 = scmp.ne.s32.totalorder %s138, %s139
      %p153 = scmp.eq.s32.totalorder %s21, 1
      %p154 = por %p152, %p153
      %p156 = scmp.ne.s32.totalorder %s139, %s155
      %p157 = scmp.eq.s32.totalorder %s21, 0
      %p158 = por %p156, %p157
      %p159 = scmp.le.s32.totalorder 1, %s15
      %p160 = scmp.lt.s32.totalorder %s15, 3
      %p161 = pnand %p159, %p160
      %p162 = pneg %p161
      // Predicated region
      $region9: #{tpu_custom_call.1} parent=5 // pred_check
        _
      $region10: #{tpu_custom_call.1} parent=5 // pred_check_branch
        %164 = sbr.rel (%p161) target = $region12
      $region11: #{tpu_custom_call.1} parent=5 // pred_region
        %s165 = ssub.s32 %s15, 1
        // Predicated region
        $region13: #{tpu_custom_call.1} parent=11 // pred_check
          %p166 = pneg %p62
        $region14: #{tpu_custom_call.1} parent=11 // pred_check_branch
          %168 = sbr.rel (%p166) target = $region16
        $region15: #{tpu_custom_call.1} parent=11 // pred_region
          _
        $region16: #{tpu_custom_call.1} parent=11 // pred_fallthru
          _
        // Predicated region
        $region17: #{tpu_custom_call.1} parent=11 // pred_check
          %p169 = pneg %p83
        $region18: #{tpu_custom_call.1} parent=11 // pred_check_branch
          %171 = sbr.rel (%p169) target = $region20
        $region19: #{tpu_custom_call.1} parent=11 // pred_region
          _
        $region20: #{tpu_custom_call.1} parent=11 // pred_fallthru
          _
        // Predicated region
        $region21: #{tpu_custom_call.1} parent=11 // pred_check
          %p172 = pneg %p104
        $region22: #{tpu_custom_call.1} parent=11 // pred_check_branch
          %174 = sbr.rel (%p172) target = $region24
        $region23: #{tpu_custom_call.1} parent=11 // pred_region
          %176 = vsyncadd [#allocation4], 0
          %s177 = sshll.u32 %s3, 4
          %s178 = int_to_ptr.hbm [resolvable:$true] %s177
          %s179 = sshll.u32 [#allocation3], 4
          %s180 = int_to_ptr.vmem [resolvable:$true] %s179
          %185 = dma.hbm_to_vmem [thread:$0]  %s178, 18432, %s180, [#allocation4], 128, 128, 8
        $region24: #{tpu_custom_call.1} parent=11 // pred_fallthru
          _
        // Predicated region
        $region25: #{tpu_custom_call.1} parent=11 // pred_check
          %p186 = pneg %p125
        $region26: #{tpu_custom_call.1} parent=11 // pred_check_branch
          %188 = sbr.rel (%p186) target = $region28
        $region27: #{tpu_custom_call.1} parent=11 // pred_region
          _
        $region28: #{tpu_custom_call.1} parent=11 // pred_fallthru
          _
      $region12: #{tpu_custom_call.1} parent=5 // pred_fallthru
        _
      %p189 = scmp.lt.s32.totalorder %s15, 2
      // Predicated region
      $region29: #{tpu_custom_call.1} parent=5 // pred_check
        %p190 = pneg %p189
      $region30: #{tpu_custom_call.1} parent=5 // pred_check_branch
        %192 = sbr.rel (%p190) target = $region32
      $region31: #{tpu_custom_call.1} parent=5 // pred_region
        // Predicated region
        $region33: #{tpu_custom_call.1} parent=31 // pred_check
          %p193 = pneg %p35
        $region34: #{tpu_custom_call.1} parent=31 // pred_check_branch
          %195 = sbr.rel (%p193) target = $region36
        $region35: #{tpu_custom_call.1} parent=31 // pred_region
          %p196 = scmp.lt.s32.totalorder %s15, 1
          %s197 = scalar_select %p196, %s15, 1
          %s198 = smul.addr %s197, 54
          %s199 = smul.addr %s198, 8
          %s200 = scalar_lea.vmem %s0, %s199
        $region36: #{tpu_custom_call.1} parent=31 // pred_fallthru
          _
      $region32: #{tpu_custom_call.1} parent=5 // pred_fallthru
        _
      %p201 = scmp.le.s32.totalorder 1, %s15
      %p202 = scmp.lt.s32.totalorder %s15, 3
      %p203 = pnand %p201, %p202
      %p204 = pneg %p203
      // Predicated region
      $region37: #{tpu_custom_call.1} parent=5 // pred_check
        _
      $region38: #{tpu_custom_call.1} parent=5 // pred_check_branch
        %206 = sbr.rel (%p203) target = $region40
      $region39: #{tpu_custom_call.1} parent=5 // pred_region
        %s207 = ssub.s32 %s15, 1
        // Predicated region
        $region41: #{tpu_custom_call.1} parent=39 // pred_check
          %p208 = pneg %p104
        $region42: #{tpu_custom_call.1} parent=39 // pred_check_branch
          %210 = sbr.rel (%p208) target = $region44
        $region43: #{tpu_custom_call.1} parent=39 // pred_region
          %212 = dma.done [#allocation4], 18432
        $region44: #{tpu_custom_call.1} parent=39 // pred_fallthru
          _
        %p213 = scmp.lt.s32.totalorder %s20, 1
        %s214 = scalar_select %p213, %s20, 1
        %s215 = smul.addr %s214, 54
        %s216 = smul.addr %s215, 8
        %s217 = scalar_lea.vmem %s0, %s216
        %p218 = pneg %p41
        %p219 = pneg %p38
        %p220 = pneg %p62
        %p221 = pneg %p59
        %p222 = pneg %p83
        %p223 = pneg %p80
        %p224 = pneg %p104
        %p225 = pneg %p101
        %p226 = pneg %p125
        %p227 = pneg %p122
        %p228 = pneg %p151
        %p229 = pneg %p148
        %s230 = sand.u32 %s138, 1
        %s231 = scalar_lea.sflag [#allocation5], %s230
        %s232 = sand.u32 %s138, 1
        %s233 = smul.addr %s232, 256
        %s234 = scalar_lea.vmem [#allocation6], %s233
        %p235 = scmp.lt.s32.totalorder %s20, 1
        %s236 = scalar_select %p235, %s20, 1
        %s237 = smul.addr %s236, 54
        %s238 = smul.addr %s237, 8
        %s239 = scalar_lea.vmem %s0, %s238
        %p240 = scmp.eq.s32.totalorder %s20, 0
        // Predicated region
        $region45: #{tpu_custom_call.1} parent=39 // pred_check
          %p241 = pneg %p240
        $region46: #{tpu_custom_call.1} parent=39 // pred_check_branch
          %243 = sbr.rel (%p241) target = $region48
        $region47: #{tpu_custom_call.1} parent=39 // pred_region
          %244 = vst [vmem:[#allocation2] sm:$0xff] 0.0
          %245 = vst [vmem:[#allocation2 + $0x8] sm:$0xff] 0.0
          %246 = vst [vmem:[#allocation2 + $0x10] sm:$0x3] 0.0
          %247 = vst [vmem:[#allocation2 + $0x18] sm:$0xff] 0.0
          %248 = vst [vmem:[#allocation2 + $0x20] sm:$0xff] 0.0
          %249 = vst [vmem:[#allocation2 + $0x28] sm:$0x3] 0.0
          %250 = vst [vmem:[#allocation2 + $0x30] sm:$0xff] 0.0
          %251 = vst [vmem:[#allocation2 + $0x38] sm:$0xff] 0.0
          %252 = vst [vmem:[#allocation2 + $0x40] sm:$0x3] 0.0
          %253 = vst [vmem:[#allocation2 + $0x48] sm:$0xff] 0.0
          %254 = vst [vmem:[#allocation2 + $0x50] sm:$0xff] 0.0
          %255 = vst [vmem:[#allocation2 + $0x58] sm:$0x3] 0.0
          %256 = vst [vmem:[#allocation2 + $0x60] sm:$0xff] 0.0
          %257 = vst [vmem:[#allocation2 + $0x68] sm:$0xff] 0.0
          %258 = vst [vmem:[#allocation2 + $0x70] sm:$0x3] 0.0
          %259 = vst [vmem:[#allocation2 + $0x78] sm:$0xff] 0.0
          %260 = vst [vmem:[#allocation2 + $0x80] sm:$0xff] 0.0
          %261 = vst [vmem:[#allocation2 + $0x88] sm:$0x3] 0.0
          %262 = vst [vmem:[#allocation2 + $0x90] sm:$0xff] 0.0
          %263 = vst [vmem:[#allocation2 + $0x98] sm:$0xff] 0.0
          %264 = vst [vmem:[#allocation2 + $0xa0] sm:$0x3] 0.0
          %265 = vst [vmem:[#allocation2 + $0xa8] sm:$0xff] 0.0
          %266 = vst [vmem:[#allocation2 + $0xb0] sm:$0xff] 0.0
          %267 = vst [vmem:[#allocation2 + $0xb8] sm:$0x3] 0.0
          %268 = vst [vmem:[#allocation2 + $0xc0] sm:$0xff] 0.0
          %269 = vst [vmem:[#allocation2 + $0xc8] sm:$0xff] 0.0
          %270 = vst [vmem:[#allocation2 + $0xd0] sm:$0x3] 0.0
          %271 = vst [vmem:[#allocation2 + $0xd8] sm:$0xff] 0.0
          %272 = vst [vmem:[#allocation2 + $0xe0] sm:$0xff] 0.0
          %273 = vst [vmem:[#allocation2 + $0xe8] sm:$0x3] 0.0
          %274 = vst [vmem:[#allocation2 + $0xf0] sm:$0xff] 0.0
          %275 = vst [vmem:[#allocation2 + $0xf8] sm:$0xff] 0.0
          %276 = vst [vmem:[#allocation2 + $0x100] sm:$0x3] 0.0
          %277 = vst [vmem:[#allocation2 + $0x108] sm:$0xff] 0.0
          %278 = vst [vmem:[#allocation2 + $0x110] sm:$0xff] 0.0
          %279 = vst [vmem:[#allocation2 + $0x118] sm:$0x3] 0.0
          %280 = vst [vmem:[#allocation2 + $0x120] sm:$0xff] 0.0
          %281 = vst [vmem:[#allocation2 + $0x128] sm:$0xff] 0.0
          %282 = vst [vmem:[#allocation2 + $0x130] sm:$0x3] 0.0
          %283 = vst [vmem:[#allocation2 + $0x138] sm:$0xff] 0.0
          %284 = vst [vmem:[#allocation2 + $0x140] sm:$0xff] 0.0
          %285 = vst [vmem:[#allocation2 + $0x148] sm:$0x3] 0.0
          %286 = vst [vmem:[#allocation2 + $0x150] sm:$0xff] 0.0
          %287 = vst [vmem:[#allocation2 + $0x158] sm:$0xff] 0.0
          %288 = vst [vmem:[#allocation2 + $0x160] sm:$0x3] 0.0
          %289 = vst [vmem:[#allocation2 + $0x168] sm:$0xff] 0.0
          %290 = vst [vmem:[#allocation2 + $0x170] sm:$0xff] 0.0
          %291 = vst [vmem:[#allocation2 + $0x178] sm:$0x3] 0.0
          %292 = vst [vmem:[#allocation2 + $0x180] sm:$0xff] 0.0
          %293 = vst [vmem:[#allocation2 + $0x188] sm:$0xff] 0.0
          %294 = vst [vmem:[#allocation2 + $0x190] sm:$0x3] 0.0
          %295 = vst [vmem:[#allocation2 + $0x198] sm:$0xff] 0.0
          %296 = vst [vmem:[#allocation2 + $0x1a0] sm:$0xff] 0.0
          %297 = vst [vmem:[#allocation2 + $0x1a8] sm:$0x3] 0.0
        $region48: #{tpu_custom_call.1} parent=39 // pred_fallthru
          _
        %v298 = vld [vmem:[%s239] sm:$0xff]
        %v299 = vld [vmem:[%s239 + $0x8] sm:$0xff]
        %v300 = vld [vmem:[%s239 + $0x10] sm:$0x3]
        %v301 = vld [vmem:[%s239 + $0x18] sm:$0xff]
        %v302 = vld [vmem:[%s239 + $0x20] sm:$0xff]
        %v303 = vld [vmem:[%s239 + $0x28] sm:$0x3]
        %v304 = vld [vmem:[%s239 + $0x30] sm:$0xff]
        %v305 = vld [vmem:[%s239 + $0x38] sm:$0xff]
        %v306 = vld [vmem:[%s239 + $0x40] sm:$0x3]
        %v307 = vld [vmem:[%s239 + $0x48] sm:$0xff]
        %v308 = vld [vmem:[%s239 + $0x50] sm:$0xff]
        %v309 = vld [vmem:[%s239 + $0x58] sm:$0x3]
        %v310 = vld [vmem:[%s239 + $0x60] sm:$0xff]
        %v311 = vld [vmem:[%s239 + $0x68] sm:$0xff]
        %v312 = vld [vmem:[%s239 + $0x70] sm:$0x3]
        %v313 = vld [vmem:[%s239 + $0x78] sm:$0xff]
        %v314 = vld [vmem:[%s239 + $0x80] sm:$0xff]
        %v315 = vld [vmem:[%s239 + $0x88] sm:$0x3]
        %v316 = vld [vmem:[%s239 + $0x90] sm:$0xff]
        %v317 = vld [vmem:[%s239 + $0x98] sm:$0xff]
        %v318 = vld [vmem:[%s239 + $0xa0] sm:$0x3]
        %v319 = vld [vmem:[%s239 + $0xa8] sm:$0xff]
        %v320 = vld [vmem:[%s239 + $0xb0] sm:$0xff]
        %v321 = vld [vmem:[%s239 + $0xb8] sm:$0x3]
        %v322 = vld [vmem:[%s239 + $0xc0] sm:$0xff]
        %v323 = vld [vmem:[%s239 + $0xc8] sm:$0xff]
        %v324 = vld [vmem:[%s239 + $0xd0] sm:$0x3]
        %v325 = vld [vmem:[%s239 + $0xd8] sm:$0xff]
        %v326 = vld [vmem:[%s239 + $0xe0] sm:$0xff]
        %v327 = vld [vmem:[%s239 + $0xe8] sm:$0x3]
        %v328 = vld [vmem:[%s239 + $0xf0] sm:$0xff]
        %v329 = vld [vmem:[%s239 + $0xf8] sm:$0xff]
        %v330 = vld [vmem:[%s239 + $0x100] sm:$0x3]
        %v331 = vld [vmem:[%s239 + $0x108] sm:$0xff]
        %v332 = vld [vmem:[%s239 + $0x110] sm:$0xff]
        %v333 = vld [vmem:[%s239 + $0x118] sm:$0x3]
        %v334 = vld [vmem:[%s239 + $0x120] sm:$0xff]
        %v335 = vld [vmem:[%s239 + $0x128] sm:$0xff]
        %v336 = vld [vmem:[%s239 + $0x130] sm:$0x3]
        %v337 = vld [vmem:[%s239 + $0x138] sm:$0xff]
        %v338 = vld [vmem:[%s239 + $0x140] sm:$0xff]
        %v339 = vld [vmem:[%s239 + $0x148] sm:$0x3]
        %v340 = vld [vmem:[%s239 + $0x150] sm:$0xff]
        %v341 = vld [vmem:[%s239 + $0x158] sm:$0xff]
        %v342 = vld [vmem:[%s239 + $0x160] sm:$0x3]
        %v343 = vld [vmem:[%s239 + $0x168] sm:$0xff]
        %v344 = vld [vmem:[%s239 + $0x170] sm:$0xff]
        %v345 = vld [vmem:[%s239 + $0x178] sm:$0x3]
        %v346 = vld [vmem:[%s239 + $0x180] sm:$0xff]
        %v347 = vld [vmem:[%s239 + $0x188] sm:$0xff]
        %v348 = vld [vmem:[%s239 + $0x190] sm:$0x3]
        %v349 = vld [vmem:[%s239 + $0x198] sm:$0xff]
        %v350 = vld [vmem:[%s239 + $0x1a0] sm:$0xff]
        %v351 = vld [vmem:[%s239 + $0x1a8] sm:$0x3]
        %v352 = vld [vmem:[%s1] sm:$0xff]
        %v353 = vld [vmem:[%s1 + $0x8] sm:$0xff]
        %v354 = vld [vmem:[%s1 + $0x10] sm:$0xff]
        %v355 = vld [vmem:[%s1 + $0x18] sm:$0xff]
        %v356 = vld [vmem:[%s1 + $0x20] sm:$0xff]
        %v357 = vld [vmem:[%s1 + $0x28] sm:$0xff]
        %v358 = vld [vmem:[%s1 + $0x30] sm:$0xff]
        %v359 = vld [vmem:[%s1 + $0x38] sm:$0xff]
        %v360 = vld [vmem:[%s1 + $0x40] sm:$0xff]
        %v361 = vld [vmem:[%s1 + $0x48] sm:$0xff]
        %v362 = vld [vmem:[%s1 + $0x50] sm:$0xff]
        %v363 = vld [vmem:[%s1 + $0x58] sm:$0xff]
        %v364 = vld [vmem:[%s1 + $0x60] sm:$0xff]
        %v365 = vld [vmem:[%s1 + $0x68] sm:$0xff]
        %v366 = vld [vmem:[%s1 + $0x70] sm:$0xff]
        %v367 = vld [vmem:[%s1 + $0x78] sm:$0xff]
        %s368 = scalar_lea.vmem %s1, 384
        %v369 = vld [vmem:[%s368] sm:$0xff]
        %v370 = vld [vmem:[%s368 + $0x8] sm:$0xff]
        %v371 = vld [vmem:[%s368 + $0x10] sm:$0xff]
        %v372 = vld [vmem:[%s368 + $0x18] sm:$0xff]
        %v373 = vld [vmem:[%s368 + $0x20] sm:$0xff]
        %v374 = vld [vmem:[%s368 + $0x28] sm:$0xff]
        %v375 = vld [vmem:[%s368 + $0x30] sm:$0xff]
        %v376 = vld [vmem:[%s368 + $0x38] sm:$0xff]
        %v377 = vld [vmem:[%s368 + $0x40] sm:$0xff]
        %v378 = vld [vmem:[%s368 + $0x48] sm:$0xff]
        %v379 = vld [vmem:[%s368 + $0x50] sm:$0xff]
        %v380 = vld [vmem:[%s368 + $0x58] sm:$0xff]
        %v381 = vld [vmem:[%s368 + $0x60] sm:$0xff]
        %v382 = vld [vmem:[%s368 + $0x68] sm:$0xff]
        %v383 = vld [vmem:[%s368 + $0x70] sm:$0xff]
        %v384 = vld [vmem:[%s368 + $0x78] sm:$0xff]
        %385 = vmatpush.msra.mxu0 %v384
        %386 = vmatpush.msra.mxu0 %v383
        %387 = vmatpush.msra.mxu0 %v382
        %388 = vmatpush.msra.mxu0 %v381
        %389 = vmatpush.msra.mxu0 %v380
        %390 = vmatpush.msra.mxu0 %v379
        %391 = vmatpush.msra.mxu0 %v378
        %392 = vmatpush.msra.mxu0 %v377
        %393 = vmatpush.msra.mxu0 %v376
        %394 = vmatpush.msra.mxu0 %v375
        %395 = vmatpush.msra.mxu0 %v374
        %396 = vmatpush.msra.mxu0 %v373
        %397 = vmatpush.msra.mxu0 %v372
        %398 = vmatpush.msra.mxu0 %v371
        %399 = vmatpush.msra.mxu0 %v370
        %400 = vmatpush.msra.mxu0 %v369
        %401 = vmatmul.f32.gmra.mxu0 %v301
        %v402 = vpop.f32.mrf.mxu0
        %v403 = vadd.f32 0.0, %v402
        %404 = vmatmul.f32.gmra.mxu0 %v302
        %v405 = vpop.f32.mrf.mxu0
        %v406 = vadd.f32 0.0, %v405
        %407 = vmatmul.f32.gmra.mxu0 %v304
        %v408 = vpop.f32.mrf.mxu0
        %v409 = vadd.f32 0.0, %v408
        %410 = vmatmul.f32.gmra.mxu0 %v305
        %v411 = vpop.f32.mrf.mxu0
        %v412 = vadd.f32 0.0, %v411
        %413 = vmatmul.f32.gmra.mxu0 %v307
        %v414 = vpop.f32.mrf.mxu0
        %v415 = vadd.f32 0.0, %v414
        %416 = vmatmul.f32.gmra.mxu0 %v308
        %v417 = vpop.f32.mrf.mxu0
        %v418 = vadd.f32 0.0, %v417
        %419 = vmatmul.f32.gmra.mxu0 %v310
        %v420 = vpop.f32.mrf.mxu0
        %v421 = vadd.f32 0.0, %v420
        %422 = vmatmul.f32.gmra.mxu0 %v311
        %v423 = vpop.f32.mrf.mxu0
        %v424 = vadd.f32 0.0, %v423
        %425 = vmatmul.f32.gmra.mxu0 %v313
        %v426 = vpop.f32.mrf.mxu0
        %v427 = vadd.f32 0.0, %v426
        %428 = vmatmul.f32.gmra.mxu0 %v314
        %v429 = vpop.f32.mrf.mxu0
        %v430 = vadd.f32 0.0, %v429
        %431 = vmatmul.f32.gmra.mxu0 %v316
        %v432 = vpop.f32.mrf.mxu0
        %v433 = vadd.f32 0.0, %v432
        %434 = vmatmul.f32.gmra.mxu0 %v317
        %v435 = vpop.f32.mrf.mxu0
        %v436 = vadd.f32 0.0, %v435
        %437 = vmatmul.f32.gmra.mxu0 %v319
        %v438 = vpop.f32.mrf.mxu0
        %v439 = vadd.f32 0.0, %v438
        %440 = vmatmul.f32.gmra.mxu0 %v320
        %v441 = vpop.f32.mrf.mxu0
        %v442 = vadd.f32 0.0, %v441
        %443 = vmatmul.f32.gmra.mxu0 %v322
        %v444 = vpop.f32.mrf.mxu0
        %v445 = vadd.f32 0.0, %v444
        %446 = vmatmul.f32.gmra.mxu0 %v323
        %v447 = vpop.f32.mrf.mxu0
        %v448 = vadd.f32 0.0, %v447
        %449 = vmatmul.f32.gmra.mxu0 %v325
        %v450 = vpop.f32.mrf.mxu0
        %v451 = vadd.f32 0.0, %v450
        %452 = vmatmul.f32.gmra.mxu0 %v326
        %v453 = vpop.f32.mrf.mxu0
        %v454 = vadd.f32 0.0, %v453
        %455 = vmatmul.f32.gmra.mxu0 %v328
        %v456 = vpop.f32.mrf.mxu0
        %v457 = vadd.f32 0.0, %v456
        %458 = vmatmul.f32.gmra.mxu0 %v329
        %v459 = vpop.f32.mrf.mxu0
        %v460 = vadd.f32 0.0, %v459
        %461 = vmatmul.f32.gmra.mxu0 %v331
        %v462 = vpop.f32.mrf.mxu0
        %v463 = vadd.f32 0.0, %v462
        %464 = vmatmul.f32.gmra.mxu0 %v332
        %v465 = vpop.f32.mrf.mxu0
        %v466 = vadd.f32 0.0, %v465
        %467 = vmatmul.f32.gmra.mxu0 %v334
        %v468 = vpop.f32.mrf.mxu0
        %v469 = vadd.f32 0.0, %v468
        %470 = vmatmul.f32.gmra.mxu0 %v335
        %v471 = vpop.f32.mrf.mxu0
        %v472 = vadd.f32 0.0, %v471
        %473 = vmatmul.f32.gmra.mxu0 %v337
        %v474 = vpop.f32.mrf.mxu0
        %v475 = vadd.f32 0.0, %v474
        %476 = vmatmul.f32.gmra.mxu0 %v338
        %v477 = vpop.f32.mrf.mxu0
        %v478 = vadd.f32 0.0, %v477
        %479 = vmatmul.f32.gmra.mxu0 %v340
        %v480 = vpop.f32.mrf.mxu0
        %v481 = vadd.f32 0.0, %v480
        %482 = vmatmul.f32.gmra.mxu0 %v341
        %v483 = vpop.f32.mrf.mxu0
        %v484 = vadd.f32 0.0, %v483
        %485 = vmatmul.f32.gmra.mxu0 %v343
        %v486 = vpop.f32.mrf.mxu0
        %v487 = vadd.f32 0.0, %v486
        %488 = vmatmul.f32.gmra.mxu0 %v344
        %v489 = vpop.f32.mrf.mxu0
        %v490 = vadd.f32 0.0, %v489
        %491 = vmatmul.f32.gmra.mxu0 %v346
        %v492 = vpop.f32.mrf.mxu0
        %v493 = vadd.f32 0.0, %v492
        %494 = vmatmul.f32.gmra.mxu0 %v347
        %v495 = vpop.f32.mrf.mxu0
        %v496 = vadd.f32 0.0, %v495
        %497 = vdwg.mxu0
        %498 = vmatpush.msra.mxu0 %v367
        %499 = vmatpush.msra.mxu0 %v366
        %500 = vmatpush.msra.mxu0 %v365
        %501 = vmatpush.msra.mxu0 %v364
        %502 = vmatpush.msra.mxu0 %v363
        %503 = vmatpush.msra.mxu0 %v362
        %504 = vmatpush.msra.mxu0 %v361
        %505 = vmatpush.msra.mxu0 %v360
        %506 = vmatpush.msra.mxu0 %v359
        %507 = vmatpush.msra.mxu0 %v358
        %508 = vmatpush.msra.mxu0 %v357
        %509 = vmatpush.msra.mxu0 %v356
        %510 = vmatpush.msra.mxu0 %v355
        %511 = vmatpush.msra.mxu0 %v354
        %512 = vmatpush.msra.mxu0 %v353
        %513 = vmatpush.msra.mxu0 %v352
        %514 = vmatmul.f32.gmra.mxu0 %v298
        %v515 = vpop.f32.mrf.mxu0
        %v516 = vadd.f32 %v403, %v515
        %517 = vmatmul.f32.gmra.mxu0 %v299
        %v518 = vpop.f32.mrf.mxu0
        %v519 = vadd.f32 %v406, %v518
        %520 = vmatmul.f32.gmra.mxu0 %v301
        %v521 = vpop.f32.mrf.mxu0
        %v522 = vadd.f32 %v409, %v521
        %523 = vmatmul.f32.gmra.mxu0 %v302
        %v524 = vpop.f32.mrf.mxu0
        %v525 = vadd.f32 %v412, %v524
        %526 = vmatmul.f32.gmra.mxu0 %v304
        %v527 = vpop.f32.mrf.mxu0
        %v528 = vadd.f32 %v415, %v527
        %529 = vmatmul.f32.gmra.mxu0 %v305
        %v530 = vpop.f32.mrf.mxu0
        %v531 = vadd.f32 %v418, %v530
        %532 = vmatmul.f32.gmra.mxu0 %v307
        %v533 = vpop.f32.mrf.mxu0
        %v534 = vadd.f32 %v421, %v533
        %535 = vmatmul.f32.gmra.mxu0 %v308
        %v536 = vpop.f32.mrf.mxu0
        %v537 = vadd.f32 %v424, %v536
        %538 = vmatmul.f32.gmra.mxu0 %v310
        %v539 = vpop.f32.mrf.mxu0
        %v540 = vadd.f32 %v427, %v539
        %541 = vmatmul.f32.gmra.mxu0 %v311
        %v542 = vpop.f32.mrf.mxu0
        %v543 = vadd.f32 %v430, %v542
        %544 = vmatmul.f32.gmra.mxu0 %v313
        %v545 = vpop.f32.mrf.mxu0
        %v546 = vadd.f32 %v433, %v545
        %547 = vmatmul.f32.gmra.mxu0 %v314
        %v548 = vpop.f32.mrf.mxu0
        %v549 = vadd.f32 %v436, %v548
        %550 = vmatmul.f32.gmra.mxu0 %v316
        %v551 = vpop.f32.mrf.mxu0
        %v552 = vadd.f32 %v439, %v551
        %553 = vmatmul.f32.gmra.mxu0 %v317
        %v554 = vpop.f32.mrf.mxu0
        %v555 = vadd.f32 %v442, %v554
        %556 = vmatmul.f32.gmra.mxu0 %v319
        %v557 = vpop.f32.mrf.mxu0
        %v558 = vadd.f32 %v445, %v557
        %559 = vmatmul.f32.gmra.mxu0 %v320
        %v560 = vpop.f32.mrf.mxu0
        %v561 = vadd.f32 %v448, %v560
        %562 = vmatmul.f32.gmra.mxu0 %v322
        %v563 = vpop.f32.mrf.mxu0
        %v564 = vadd.f32 %v451, %v563
        %565 = vmatmul.f32.gmra.mxu0 %v323
        %v566 = vpop.f32.mrf.mxu0
        %v567 = vadd.f32 %v454, %v566
        %568 = vmatmul.f32.gmra.mxu0 %v325
        %v569 = vpop.f32.mrf.mxu0
        %v570 = vadd.f32 %v457, %v569
        %571 = vmatmul.f32.gmra.mxu0 %v326
        %v572 = vpop.f32.mrf.mxu0
        %v573 = vadd.f32 %v460, %v572
        %574 = vmatmul.f32.gmra.mxu0 %v328
        %v575 = vpop.f32.mrf.mxu0
        %v576 = vadd.f32 %v463, %v575
        %577 = vmatmul.f32.gmra.mxu0 %v329
        %v578 = vpop.f32.mrf.mxu0
        %v579 = vadd.f32 %v466, %v578
        %580 = vmatmul.f32.gmra.mxu0 %v331
        %v581 = vpop.f32.mrf.mxu0
        %v582 = vadd.f32 %v469, %v581
        %583 = vmatmul.f32.gmra.mxu0 %v332
        %v584 = vpop.f32.mrf.mxu0
        %v585 = vadd.f32 %v472, %v584
        %586 = vmatmul.f32.gmra.mxu0 %v334
        %v587 = vpop.f32.mrf.mxu0
        %v588 = vadd.f32 %v475, %v587
        %589 = vmatmul.f32.gmra.mxu0 %v335
        %v590 = vpop.f32.mrf.mxu0
        %v591 = vadd.f32 %v478, %v590
        %592 = vmatmul.f32.gmra.mxu0 %v337
        %v593 = vpop.f32.mrf.mxu0
        %v594 = vadd.f32 %v481, %v593
        %595 = vmatmul.f32.gmra.mxu0 %v338
        %v596 = vpop.f32.mrf.mxu0
        %v597 = vadd.f32 %v484, %v596
        %598 = vmatmul.f32.gmra.mxu0 %v340
        %v599 = vpop.f32.mrf.mxu0
        %v600 = vadd.f32 %v487, %v599
        %601 = vmatmul.f32.gmra.mxu0 %v341
        %v602 = vpop.f32.mrf.mxu0
        %v603 = vadd.f32 %v490, %v602
        %604 = vmatmul.f32.gmra.mxu0 %v343
        %v605 = vpop.f32.mrf.mxu0
        %v606 = vadd.f32 %v493, %v605
        %607 = vmatmul.f32.gmra.mxu0 %v344
        %v608 = vpop.f32.mrf.mxu0
        %v609 = vadd.f32 %v496, %v608
        %610 = vdwg.mxu0
        %s611 = scalar_lea.vmem %s1, 768
        %v612 = vld [vmem:[%s611] sm:$0xff]
        %v613 = vld [vmem:[%s611 + $0x8] sm:$0xff]
        %v614 = vld [vmem:[%s611 + $0x10] sm:$0xff]
        %v615 = vld [vmem:[%s611 + $0x18] sm:$0xff]
        %v616 = vld [vmem:[%s611 + $0x20] sm:$0xff]
        %v617 = vld [vmem:[%s611 + $0x28] sm:$0xff]
        %v618 = vld [vmem:[%s611 + $0x30] sm:$0xff]
        %v619 = vld [vmem:[%s611 + $0x38] sm:$0xff]
        %v620 = vld [vmem:[%s611 + $0x40] sm:$0xff]
        %v621 = vld [vmem:[%s611 + $0x48] sm:$0xff]
        %v622 = vld [vmem:[%s611 + $0x50] sm:$0xff]
        %v623 = vld [vmem:[%s611 + $0x58] sm:$0xff]
        %v624 = vld [vmem:[%s611 + $0x60] sm:$0xff]
        %v625 = vld [vmem:[%s611 + $0x68] sm:$0xff]
        %v626 = vld [vmem:[%s611 + $0x70] sm:$0xff]
        %v627 = vld [vmem:[%s611 + $0x78] sm:$0xff]
        %628 = vmatpush.msra.mxu0 %v627
        %629 = vmatpush.msra.mxu0 %v626
        %630 = vmatpush.msra.mxu0 %v625
        %631 = vmatpush.msra.mxu0 %v624
        %632 = vmatpush.msra.mxu0 %v623
        %633 = vmatpush.msra.mxu0 %v622
        %634 = vmatpush.msra.mxu0 %v621
        %635 = vmatpush.msra.mxu0 %v620
        %636 = vmatpush.msra.mxu0 %v619
        %637 = vmatpush.msra.mxu0 %v618
        %638 = vmatpush.msra.mxu0 %v617
        %639 = vmatpush.msra.mxu0 %v616
        %640 = vmatpush.msra.mxu0 %v615
        %641 = vmatpush.msra.mxu0 %v614
        %642 = vmatpush.msra.mxu0 %v613
        %643 = vmatpush.msra.mxu0 %v612
        %644 = vmatmul.f32.gmra.mxu0 %v304
        %v645 = vpop.f32.mrf.mxu0
        %v646 = vadd.f32 0.0, %v645
        %647 = vmatmul.f32.gmra.mxu0 %v305
        %v648 = vpop.f32.mrf.mxu0
        %v649 = vadd.f32 0.0, %v648
        %650 = vmatmul.f32.gmra.mxu0 %v307
        %v651 = vpop.f32.mrf.mxu0
        %v652 = vadd.f32 0.0, %v651
        %653 = vmatmul.f32.gmra.mxu0 %v308
        %v654 = vpop.f32.mrf.mxu0
        %v655 = vadd.f32 0.0, %v654
        %656 = vmatmul.f32.gmra.mxu0 %v310
        %v657 = vpop.f32.mrf.mxu0
        %v658 = vadd.f32 0.0, %v657
        %659 = vmatmul.f32.gmra.mxu0 %v311
        %v660 = vpop.f32.mrf.mxu0
        %v661 = vadd.f32 0.0, %v660
        %662 = vmatmul.f32.gmra.mxu0 %v313
        %v663 = vpop.f32.mrf.mxu0
        %v664 = vadd.f32 0.0, %v663
        %665 = vmatmul.f32.gmra.mxu0 %v314
        %v666 = vpop.f32.mrf.mxu0
        %v667 = vadd.f32 0.0, %v666
        %668 = vmatmul.f32.gmra.mxu0 %v316
        %v669 = vpop.f32.mrf.mxu0
        %v670 = vadd.f32 0.0, %v669
        %671 = vmatmul.f32.gmra.mxu0 %v317
        %v672 = vpop.f32.mrf.mxu0
        %v673 = vadd.f32 0.0, %v672
        %674 = vmatmul.f32.gmra.mxu0 %v319
        %v675 = vpop.f32.mrf.mxu0
        %v676 = vadd.f32 0.0, %v675
        %677 = vmatmul.f32.gmra.mxu0 %v320
        %v678 = vpop.f32.mrf.mxu0
        %v679 = vadd.f32 0.0, %v678
        %680 = vmatmul.f32.gmra.mxu0 %v322
        %v681 = vpop.f32.mrf.mxu0
        %v682 = vadd.f32 0.0, %v681
        %683 = vmatmul.f32.gmra.mxu0 %v323
        %v684 = vpop.f32.mrf.mxu0
        %v685 = vadd.f32 0.0, %v684
        %686 = vmatmul.f32.gmra.mxu0 %v325
        %v687 = vpop.f32.mrf.mxu0
        %v688 = vadd.f32 0.0, %v687
        %689 = vmatmul.f32.gmra.mxu0 %v326
        %v690 = vpop.f32.mrf.mxu0
        %v691 = vadd.f32 0.0, %v690
        %692 = vmatmul.f32.gmra.mxu0 %v328
        %v693 = vpop.f32.mrf.mxu0
        %v694 = vadd.f32 0.0, %v693
        %695 = vmatmul.f32.gmra.mxu0 %v329
        %v696 = vpop.f32.mrf.mxu0
        %v697 = vadd.f32 0.0, %v696
        %698 = vmatmul.f32.gmra.mxu0 %v331
        %v699 = vpop.f32.mrf.mxu0
        %v700 = vadd.f32 0.0, %v699
        %701 = vmatmul.f32.gmra.mxu0 %v332
        %v702 = vpop.f32.mrf.mxu0
        %v703 = vadd.f32 0.0, %v702
        %704 = vmatmul.f32.gmra.mxu0 %v334
        %v705 = vpop.f32.mrf.mxu0
        %v706 = vadd.f32 0.0, %v705
        %707 = vmatmul.f32.gmra.mxu0 %v335
        %v708 = vpop.f32.mrf.mxu0
        %v709 = vadd.f32 0.0, %v708
        %710 = vmatmul.f32.gmra.mxu0 %v337
        %v711 = vpop.f32.mrf.mxu0
        %v712 = vadd.f32 0.0, %v711
        %713 = vmatmul.f32.gmra.mxu0 %v338
        %v714 = vpop.f32.mrf.mxu0
        %v715 = vadd.f32 0.0, %v714
        %716 = vmatmul.f32.gmra.mxu0 %v340
        %v717 = vpop.f32.mrf.mxu0
        %v718 = vadd.f32 0.0, %v717
        %719 = vmatmul.f32.gmra.mxu0 %v341
        %v720 = vpop.f32.mrf.mxu0
        %v721 = vadd.f32 0.0, %v720
        %722 = vmatmul.f32.gmra.mxu0 %v343
        %v723 = vpop.f32.mrf.mxu0
        %v724 = vadd.f32 0.0, %v723
        %725 = vmatmul.f32.gmra.mxu0 %v344
        %v726 = vpop.f32.mrf.mxu0
        %v727 = vadd.f32 0.0, %v726
        %728 = vmatmul.f32.gmra.mxu0 %v346
        %v729 = vpop.f32.mrf.mxu0
        %v730 = vadd.f32 0.0, %v729
        %731 = vmatmul.f32.gmra.mxu0 %v347
        %v732 = vpop.f32.mrf.mxu0
        %v733 = vadd.f32 0.0, %v732
        %734 = vmatmul.f32.gmra.mxu0 %v349
        %v735 = vpop.f32.mrf.mxu0
        %v736 = vadd.f32 0.0, %v735
        %737 = vmatmul.f32.gmra.mxu0 %v350
        %v738 = vpop.f32.mrf.mxu0
        %v739 = vadd.f32 0.0, %v738
        %740 = vdwg.mxu0
        %v741 = vadd.f32 %v516, %v646
        %v742 = vadd.f32 %v519, %v649
        %v743 = vadd.f32 %v522, %v652
        %v744 = vadd.f32 %v525, %v655
        %v745 = vadd.f32 %v528, %v658
        %v746 = vadd.f32 %v531, %v661
        %v747 = vadd.f32 %v534, %v664
        %v748 = vadd.f32 %v537, %v667
        %v749 = vadd.f32 %v540, %v670
        %v750 = vadd.f32 %v543, %v673
        %v751 = vadd.f32 %v546, %v676
        %v752 = vadd.f32 %v549, %v679
        %v753 = vadd.f32 %v552, %v682
        %v754 = vadd.f32 %v555, %v685
        %v755 = vadd.f32 %v558, %v688
        %v756 = vadd.f32 %v561, %v691
        %v757 = vadd.f32 %v564, %v694
        %v758 = vadd.f32 %v567, %v697
        %v759 = vadd.f32 %v570, %v700
        %v760 = vadd.f32 %v573, %v703
        %v761 = vadd.f32 %v576, %v706
        %v762 = vadd.f32 %v579, %v709
        %v763 = vadd.f32 %v582, %v712
        %v764 = vadd.f32 %v585, %v715
        %v765 = vadd.f32 %v588, %v718
        %v766 = vadd.f32 %v591, %v721
        %v767 = vadd.f32 %v594, %v724
        %v768 = vadd.f32 %v597, %v727
        %v769 = vadd.f32 %v600, %v730
        %v770 = vadd.f32 %v603, %v733
        %v771 = vadd.f32 %v606, %v736
        %v772 = vadd.f32 %v609, %v739
        %vm821 = vcmask 1046528
        %v822 = vrot.slane %v298, 1
        %v823 = vrot.slane %v299, 1
        %v824 = vsel %vm821, %v822, %v823
        %v825 = vrot.slane %v300, 1
        %v826 = vsel %vm821, %v823, %v825
        %v827 = vrot.slane %v301, 1
        %v828 = vrot.slane %v302, 1
        %v829 = vsel %vm821, %v827, %v828
        %v830 = vrot.slane %v303, 1
        %v831 = vsel %vm821, %v828, %v830
        %v832 = vrot.slane %v304, 1
        %v833 = vrot.slane %v305, 1
        %v834 = vsel %vm821, %v832, %v833
        %v835 = vrot.slane %v306, 1
        %v836 = vsel %vm821, %v833, %v835
        %v837 = vrot.slane %v307, 1
        %v838 = vrot.slane %v308, 1
        %v839 = vsel %vm821, %v837, %v838
        %v840 = vrot.slane %v309, 1
        %v841 = vsel %vm821, %v838, %v840
        %v842 = vrot.slane %v310, 1
        %v843 = vrot.slane %v311, 1
        %v844 = vsel %vm821, %v842, %v843
        %v845 = vrot.slane %v312, 1
        %v846 = vsel %vm821, %v843, %v845
        %v847 = vrot.slane %v313, 1
        %v848 = vrot.slane %v314, 1
        %v849 = vsel %vm821, %v847, %v848
        %v850 = vrot.slane %v315, 1
        %v851 = vsel %vm821, %v848, %v850
        %v852 = vrot.slane %v316, 1
        %v853 = vrot.slane %v317, 1
        %v854 = vsel %vm821, %v852, %v853
        %v855 = vrot.slane %v318, 1
        %v856 = vsel %vm821, %v853, %v855
        %v857 = vrot.slane %v319, 1
        %v858 = vrot.slane %v320, 1
        %v859 = vsel %vm821, %v857, %v858
        %v860 = vrot.slane %v321, 1
        %v861 = vsel %vm821, %v858, %v860
        %v862 = vrot.slane %v322, 1
        %v863 = vrot.slane %v323, 1
        %v864 = vsel %vm821, %v862, %v863
        %v865 = vrot.slane %v324, 1
        %v866 = vsel %vm821, %v863, %v865
        %v867 = vrot.slane %v325, 1
        %v868 = vrot.slane %v326, 1
        %v869 = vsel %vm821, %v867, %v868
        %v870 = vrot.slane %v327, 1
        %v871 = vsel %vm821, %v868, %v870
        %v872 = vrot.slane %v328, 1
        %v873 = vrot.slane %v329, 1
        %v874 = vsel %vm821, %v872, %v873
        %v875 = vrot.slane %v330, 1
        %v876 = vsel %vm821, %v873, %v875
        %v877 = vrot.slane %v331, 1
        %v878 = vrot.slane %v332, 1
        %v879 = vsel %vm821, %v877, %v878
        %v880 = vrot.slane %v333, 1
        %v881 = vsel %vm821, %v878, %v880
        %v882 = vrot.slane %v334, 1
        %v883 = vrot.slane %v335, 1
        %v884 = vsel %vm821, %v882, %v883
        %v885 = vrot.slane %v336, 1
        %v886 = vsel %vm821, %v883, %v885
        %v887 = vrot.slane %v337, 1
        %v888 = vrot.slane %v338, 1
        %v889 = vsel %vm821, %v887, %v888
        %v890 = vrot.slane %v339, 1
        %v891 = vsel %vm821, %v888, %v890
        %v892 = vrot.slane %v340, 1
        %v893 = vrot.slane %v341, 1
        %v894 = vsel %vm821, %v892, %v893
        %v895 = vrot.slane %v342, 1
        %v896 = vsel %vm821, %v893, %v895
        %v897 = vrot.slane %v343, 1
        %v898 = vrot.slane %v344, 1
        %v899 = vsel %vm821, %v897, %v898
        %v900 = vrot.slane %v345, 1
        %v901 = vsel %vm821, %v898, %v900
        %s934 = scalar_lea.vmem %s1, 128
        %v935 = vld [vmem:[%s934] sm:$0xff]
        %v936 = vld [vmem:[%s934 + $0x8] sm:$0xff]
        %v937 = vld [vmem:[%s934 + $0x10] sm:$0xff]
        %v938 = vld [vmem:[%s934 + $0x18] sm:$0xff]
        %v939 = vld [vmem:[%s934 + $0x20] sm:$0xff]
        %v940 = vld [vmem:[%s934 + $0x28] sm:$0xff]
        %v941 = vld [vmem:[%s934 + $0x30] sm:$0xff]
        %v942 = vld [vmem:[%s934 + $0x38] sm:$0xff]
        %v943 = vld [vmem:[%s934 + $0x40] sm:$0xff]
        %v944 = vld [vmem:[%s934 + $0x48] sm:$0xff]
        %v945 = vld [vmem:[%s934 + $0x50] sm:$0xff]
        %v946 = vld [vmem:[%s934 + $0x58] sm:$0xff]
        %v947 = vld [vmem:[%s934 + $0x60] sm:$0xff]
        %v948 = vld [vmem:[%s934 + $0x68] sm:$0xff]
        %v949 = vld [vmem:[%s934 + $0x70] sm:$0xff]
        %v950 = vld [vmem:[%s934 + $0x78] sm:$0xff]
        %951 = vmatpush.msra.mxu0 %v950
        %952 = vmatpush.msra.mxu0 %v949
        %953 = vmatpush.msra.mxu0 %v948
        %954 = vmatpush.msra.mxu0 %v947
        %955 = vmatpush.msra.mxu0 %v946
        %956 = vmatpush.msra.mxu0 %v945
        %957 = vmatpush.msra.mxu0 %v944
        %958 = vmatpush.msra.mxu0 %v943
        %959 = vmatpush.msra.mxu0 %v942
        %960 = vmatpush.msra.mxu0 %v941
        %961 = vmatpush.msra.mxu0 %v940
        %962 = vmatpush.msra.mxu0 %v939
        %963 = vmatpush.msra.mxu0 %v938
        %964 = vmatpush.msra.mxu0 %v937
        %965 = vmatpush.msra.mxu0 %v936
        %966 = vmatpush.msra.mxu0 %v935
        %967 = vmatmul.f32.gmra.mxu0 %v824
        %v968 = vpop.f32.mrf.mxu0
        %v969 = vadd.f32 0.0, %v968
        %970 = vmatmul.f32.gmra.mxu0 %v826
        %v971 = vpop.f32.mrf.mxu0
        %v972 = vadd.f32 0.0, %v971
        %973 = vmatmul.f32.gmra.mxu0 %v829
        %v974 = vpop.f32.mrf.mxu0
        %v975 = vadd.f32 0.0, %v974
        %976 = vmatmul.f32.gmra.mxu0 %v831
        %v977 = vpop.f32.mrf.mxu0
        %v978 = vadd.f32 0.0, %v977
        %979 = vmatmul.f32.gmra.mxu0 %v834
        %v980 = vpop.f32.mrf.mxu0
        %v981 = vadd.f32 0.0, %v980
        %982 = vmatmul.f32.gmra.mxu0 %v836
        %v983 = vpop.f32.mrf.mxu0
        %v984 = vadd.f32 0.0, %v983
        %985 = vmatmul.f32.gmra.mxu0 %v839
        %v986 = vpop.f32.mrf.mxu0
        %v987 = vadd.f32 0.0, %v986
        %988 = vmatmul.f32.gmra.mxu0 %v841
        %v989 = vpop.f32.mrf.mxu0
        %v990 = vadd.f32 0.0, %v989
        %991 = vmatmul.f32.gmra.mxu0 %v844
        %v992 = vpop.f32.mrf.mxu0
        %v993 = vadd.f32 0.0, %v992
        %994 = vmatmul.f32.gmra.mxu0 %v846
        %v995 = vpop.f32.mrf.mxu0
        %v996 = vadd.f32 0.0, %v995
        %997 = vmatmul.f32.gmra.mxu0 %v849
        %v998 = vpop.f32.mrf.mxu0
        %v999 = vadd.f32 0.0, %v998
        %1000 = vmatmul.f32.gmra.mxu0 %v851
        %v1001 = vpop.f32.mrf.mxu0
        %v1002 = vadd.f32 0.0, %v1001
        %1003 = vmatmul.f32.gmra.mxu0 %v854
        %v1004 = vpop.f32.mrf.mxu0
        %v1005 = vadd.f32 0.0, %v1004
        %1006 = vmatmul.f32.gmra.mxu0 %v856
        %v1007 = vpop.f32.mrf.mxu0
        %v1008 = vadd.f32 0.0, %v1007
        %1009 = vmatmul.f32.gmra.mxu0 %v859
        %v1010 = vpop.f32.mrf.mxu0
        %v1011 = vadd.f32 0.0, %v1010
        %1012 = vmatmul.f32.gmra.mxu0 %v861
        %v1013 = vpop.f32.mrf.mxu0
        %v1014 = vadd.f32 0.0, %v1013
        %1015 = vmatmul.f32.gmra.mxu0 %v864
        %v1016 = vpop.f32.mrf.mxu0
        %v1017 = vadd.f32 0.0, %v1016
        %1018 = vmatmul.f32.gmra.mxu0 %v866
        %v1019 = vpop.f32.mrf.mxu0
        %v1020 = vadd.f32 0.0, %v1019
        %1021 = vmatmul.f32.gmra.mxu0 %v869
        %v1022 = vpop.f32.mrf.mxu0
        %v1023 = vadd.f32 0.0, %v1022
        %1024 = vmatmul.f32.gmra.mxu0 %v871
        %v1025 = vpop.f32.mrf.mxu0
        %v1026 = vadd.f32 0.0, %v1025
        %1027 = vmatmul.f32.gmra.mxu0 %v874
        %v1028 = vpop.f32.mrf.mxu0
        %v1029 = vadd.f32 0.0, %v1028
        %1030 = vmatmul.f32.gmra.mxu0 %v876
        %v1031 = vpop.f32.mrf.mxu0
        %v1032 = vadd.f32 0.0, %v1031
        %1033 = vmatmul.f32.gmra.mxu0 %v879
        %v1034 = vpop.f32.mrf.mxu0
        %v1035 = vadd.f32 0.0, %v1034
        %1036 = vmatmul.f32.gmra.mxu0 %v881
        %v1037 = vpop.f32.mrf.mxu0
        %v1038 = vadd.f32 0.0, %v1037
        %1039 = vmatmul.f32.gmra.mxu0 %v884
        %v1040 = vpop.f32.mrf.mxu0
        %v1041 = vadd.f32 0.0, %v1040
        %1042 = vmatmul.f32.gmra.mxu0 %v886
        %v1043 = vpop.f32.mrf.mxu0
        %v1044 = vadd.f32 0.0, %v1043
        %1045 = vmatmul.f32.gmra.mxu0 %v889
        %v1046 = vpop.f32.mrf.mxu0
        %v1047 = vadd.f32 0.0, %v1046
        %1048 = vmatmul.f32.gmra.mxu0 %v891
        %v1049 = vpop.f32.mrf.mxu0
        %v1050 = vadd.f32 0.0, %v1049
        %1051 = vmatmul.f32.gmra.mxu0 %v894
        %v1052 = vpop.f32.mrf.mxu0
        %v1053 = vadd.f32 0.0, %v1052
        %1054 = vmatmul.f32.gmra.mxu0 %v896
        %v1055 = vpop.f32.mrf.mxu0
        %v1056 = vadd.f32 0.0, %v1055
        %1057 = vmatmul.f32.gmra.mxu0 %v899
        %v1058 = vpop.f32.mrf.mxu0
        %v1059 = vadd.f32 0.0, %v1058
        %1060 = vmatmul.f32.gmra.mxu0 %v901
        %v1061 = vpop.f32.mrf.mxu0
        %v1062 = vadd.f32 0.0, %v1061
        %1063 = vdwg.mxu0
        %v1064 = vadd.f32 %v741, %v969
        %v1065 = vadd.f32 %v742, %v972
        %v1066 = vadd.f32 %v743, %v975
        %v1067 = vadd.f32 %v744, %v978
        %v1068 = vadd.f32 %v745, %v981
        %v1069 = vadd.f32 %v746, %v984
        %v1070 = vadd.f32 %v747, %v987
        %v1071 = vadd.f32 %v748, %v990
        %v1072 = vadd.f32 %v749, %v993
        %v1073 = vadd.f32 %v750, %v996
        %v1074 = vadd.f32 %v751, %v999
        %v1075 = vadd.f32 %v752, %v1002
        %v1076 = vadd.f32 %v753, %v1005
        %v1077 = vadd.f32 %v754, %v1008
        %v1078 = vadd.f32 %v755, %v1011
        %v1079 = vadd.f32 %v756, %v1014
        %v1080 = vadd.f32 %v757, %v1017
        %v1081 = vadd.f32 %v758, %v1020
        %v1082 = vadd.f32 %v759, %v1023
        %v1083 = vadd.f32 %v760, %v1026
        %v1084 = vadd.f32 %v761, %v1029
        %v1085 = vadd.f32 %v762, %v1032
        %v1086 = vadd.f32 %v763, %v1035
        %v1087 = vadd.f32 %v764, %v1038
        %v1088 = vadd.f32 %v765, %v1041
        %v1089 = vadd.f32 %v766, %v1044
        %v1090 = vadd.f32 %v767, %v1047
        %v1091 = vadd.f32 %v768, %v1050
        %v1092 = vadd.f32 %v769, %v1053
        %v1093 = vadd.f32 %v770, %v1056
        %v1094 = vadd.f32 %v771, %v1059
        %v1095 = vadd.f32 %v772, %v1062
        %v1099 = vrot.slane %v346, 1
        %v1100 = vrot.slane %v347, 1
        %v1101 = vsel %vm821, %v1099, %v1100
        %v1102 = vrot.slane %v348, 1
        %v1103 = vsel %vm821, %v1100, %v1102
        %s1106 = scalar_lea.vmem %s1, 512
        %v1107 = vld [vmem:[%s1106] sm:$0xff]
        %v1108 = vld [vmem:[%s1106 + $0x8] sm:$0xff]
        %v1109 = vld [vmem:[%s1106 + $0x10] sm:$0xff]
        %v1110 = vld [vmem:[%s1106 + $0x18] sm:$0xff]
        %v1111 = vld [vmem:[%s1106 + $0x20] sm:$0xff]
        %v1112 = vld [vmem:[%s1106 + $0x28] sm:$0xff]
        %v1113 = vld [vmem:[%s1106 + $0x30] sm:$0xff]
        %v1114 = vld [vmem:[%s1106 + $0x38] sm:$0xff]
        %v1115 = vld [vmem:[%s1106 + $0x40] sm:$0xff]
        %v1116 = vld [vmem:[%s1106 + $0x48] sm:$0xff]
        %v1117 = vld [vmem:[%s1106 + $0x50] sm:$0xff]
        %v1118 = vld [vmem:[%s1106 + $0x58] sm:$0xff]
        %v1119 = vld [vmem:[%s1106 + $0x60] sm:$0xff]
        %v1120 = vld [vmem:[%s1106 + $0x68] sm:$0xff]
        %v1121 = vld [vmem:[%s1106 + $0x70] sm:$0xff]
        %v1122 = vld [vmem:[%s1106 + $0x78] sm:$0xff]
        %1123 = vmatpush.msra.mxu0 %v1122
        %1124 = vmatpush.msra.mxu0 %v1121
        %1125 = vmatpush.msra.mxu0 %v1120
        %1126 = vmatpush.msra.mxu0 %v1119
        %1127 = vmatpush.msra.mxu0 %v1118
        %1128 = vmatpush.msra.mxu0 %v1117
        %1129 = vmatpush.msra.mxu0 %v1116
        %1130 = vmatpush.msra.mxu0 %v1115
        %1131 = vmatpush.msra.mxu0 %v1114
        %1132 = vmatpush.msra.mxu0 %v1113
        %1133 = vmatpush.msra.mxu0 %v1112
        %1134 = vmatpush.msra.mxu0 %v1111
        %1135 = vmatpush.msra.mxu0 %v1110
        %1136 = vmatpush.msra.mxu0 %v1109
        %1137 = vmatpush.msra.mxu0 %v1108
        %1138 = vmatpush.msra.mxu0 %v1107
        %1139 = vmatmul.f32.gmra.mxu0 %v829
        %v1140 = vpop.f32.mrf.mxu0
        %v1141 = vadd.f32 0.0, %v1140
        %1142 = vmatmul.f32.gmra.mxu0 %v831
        %v1143 = vpop.f32.mrf.mxu0
        %v1144 = vadd.f32 0.0, %v1143
        %1145 = vmatmul.f32.gmra.mxu0 %v834
        %v1146 = vpop.f32.mrf.mxu0
        %v1147 = vadd.f32 0.0, %v1146
        %1148 = vmatmul.f32.gmra.mxu0 %v836
        %v1149 = vpop.f32.mrf.mxu0
        %v1150 = vadd.f32 0.0, %v1149
        %1151 = vmatmul.f32.gmra.mxu0 %v839
        %v1152 = vpop.f32.mrf.mxu0
        %v1153 = vadd.f32 0.0, %v1152
        %1154 = vmatmul.f32.gmra.mxu0 %v841
        %v1155 = vpop.f32.mrf.mxu0
        %v1156 = vadd.f32 0.0, %v1155
        %1157 = vmatmul.f32.gmra.mxu0 %v844
        %v1158 = vpop.f32.mrf.mxu0
        %v1159 = vadd.f32 0.0, %v1158
        %1160 = vmatmul.f32.gmra.mxu0 %v846
        %v1161 = vpop.f32.mrf.mxu0
        %v1162 = vadd.f32 0.0, %v1161
        %1163 = vmatmul.f32.gmra.mxu0 %v849
        %v1164 = vpop.f32.mrf.mxu0
        %v1165 = vadd.f32 0.0, %v1164
        %1166 = vmatmul.f32.gmra.mxu0 %v851
        %v1167 = vpop.f32.mrf.mxu0
        %v1168 = vadd.f32 0.0, %v1167
        %1169 = vmatmul.f32.gmra.mxu0 %v854
        %v1170 = vpop.f32.mrf.mxu0
        %v1171 = vadd.f32 0.0, %v1170
        %1172 = vmatmul.f32.gmra.mxu0 %v856
        %v1173 = vpop.f32.mrf.mxu0
        %v1174 = vadd.f32 0.0, %v1173
        %1175 = vmatmul.f32.gmra.mxu0 %v859
        %v1176 = vpop.f32.mrf.mxu0
        %v1177 = vadd.f32 0.0, %v1176
        %1178 = vmatmul.f32.gmra.mxu0 %v861
        %v1179 = vpop.f32.mrf.mxu0
        %v1180 = vadd.f32 0.0, %v1179
        %1181 = vmatmul.f32.gmra.mxu0 %v864
        %v1182 = vpop.f32.mrf.mxu0
        %v1183 = vadd.f32 0.0, %v1182
        %1184 = vmatmul.f32.gmra.mxu0 %v866
        %v1185 = vpop.f32.mrf.mxu0
        %v1186 = vadd.f32 0.0, %v1185
        %1187 = vmatmul.f32.gmra.mxu0 %v869
        %v1188 = vpop.f32.mrf.mxu0
        %v1189 = vadd.f32 0.0, %v1188
        %1190 = vmatmul.f32.gmra.mxu0 %v871
        %v1191 = vpop.f32.mrf.mxu0
        %v1192 = vadd.f32 0.0, %v1191
        %1193 = vmatmul.f32.gmra.mxu0 %v874
        %v1194 = vpop.f32.mrf.mxu0
        %v1195 = vadd.f32 0.0, %v1194
        %1196 = vmatmul.f32.gmra.mxu0 %v876
        %v1197 = vpop.f32.mrf.mxu0
        %v1198 = vadd.f32 0.0, %v1197
        %1199 = vmatmul.f32.gmra.mxu0 %v879
        %v1200 = vpop.f32.mrf.mxu0
        %v1201 = vadd.f32 0.0, %v1200
        %1202 = vmatmul.f32.gmra.mxu0 %v881
        %v1203 = vpop.f32.mrf.mxu0
        %v1204 = vadd.f32 0.0, %v1203
        %1205 = vmatmul.f32.gmra.mxu0 %v884
        %v1206 = vpop.f32.mrf.mxu0
        %v1207 = vadd.f32 0.0, %v1206
        %1208 = vmatmul.f32.gmra.mxu0 %v886
        %v1209 = vpop.f32.mrf.mxu0
        %v1210 = vadd.f32 0.0, %v1209
        %1211 = vmatmul.f32.gmra.mxu0 %v889
        %v1212 = vpop.f32.mrf.mxu0
        %v1213 = vadd.f32 0.0, %v1212
        %1214 = vmatmul.f32.gmra.mxu0 %v891
        %v1215 = vpop.f32.mrf.mxu0
        %v1216 = vadd.f32 0.0, %v1215
        %1217 = vmatmul.f32.gmra.mxu0 %v894
        %v1218 = vpop.f32.mrf.mxu0
        %v1219 = vadd.f32 0.0, %v1218
        %1220 = vmatmul.f32.gmra.mxu0 %v896
        %v1221 = vpop.f32.mrf.mxu0
        %v1222 = vadd.f32 0.0, %v1221
        %1223 = vmatmul.f32.gmra.mxu0 %v899
        %v1224 = vpop.f32.mrf.mxu0
        %v1225 = vadd.f32 0.0, %v1224
        %1226 = vmatmul.f32.gmra.mxu0 %v901
        %v1227 = vpop.f32.mrf.mxu0
        %v1228 = vadd.f32 0.0, %v1227
        %1229 = vmatmul.f32.gmra.mxu0 %v1101
        %v1230 = vpop.f32.mrf.mxu0
        %v1231 = vadd.f32 0.0, %v1230
        %1232 = vmatmul.f32.gmra.mxu0 %v1103
        %v1233 = vpop.f32.mrf.mxu0
        %v1234 = vadd.f32 0.0, %v1233
        %1235 = vdwg.mxu0
        %v1236 = vadd.f32 %v1064, %v1141
        %v1237 = vadd.f32 %v1065, %v1144
        %v1238 = vadd.f32 %v1066, %v1147
        %v1239 = vadd.f32 %v1067, %v1150
        %v1240 = vadd.f32 %v1068, %v1153
        %v1241 = vadd.f32 %v1069, %v1156
        %v1242 = vadd.f32 %v1070, %v1159
        %v1243 = vadd.f32 %v1071, %v1162
        %v1244 = vadd.f32 %v1072, %v1165
        %v1245 = vadd.f32 %v1073, %v1168
        %v1246 = vadd.f32 %v1074, %v1171
        %v1247 = vadd.f32 %v1075, %v1174
        %v1248 = vadd.f32 %v1076, %v1177
        %v1249 = vadd.f32 %v1077, %v1180
        %v1250 = vadd.f32 %v1078, %v1183
        %v1251 = vadd.f32 %v1079, %v1186
        %v1252 = vadd.f32 %v1080, %v1189
        %v1253 = vadd.f32 %v1081, %v1192
        %v1254 = vadd.f32 %v1082, %v1195
        %v1255 = vadd.f32 %v1083, %v1198
        %v1256 = vadd.f32 %v1084, %v1201
        %v1257 = vadd.f32 %v1085, %v1204
        %v1258 = vadd.f32 %v1086, %v1207
        %v1259 = vadd.f32 %v1087, %v1210
        %v1260 = vadd.f32 %v1088, %v1213
        %v1261 = vadd.f32 %v1089, %v1216
        %v1262 = vadd.f32 %v1090, %v1219
        %v1263 = vadd.f32 %v1091, %v1222
        %v1264 = vadd.f32 %v1092, %v1225
        %v1265 = vadd.f32 %v1093, %v1228
        %v1266 = vadd.f32 %v1094, %v1231
        %v1267 = vadd.f32 %v1095, %v1234
        %v1271 = vrot.slane %v349, 1
        %v1272 = vrot.slane %v350, 1
        %v1273 = vsel %vm821, %v1271, %v1272
        %v1274 = vrot.slane %v351, 1
        %v1275 = vsel %vm821, %v1272, %v1274
        %s1278 = scalar_lea.vmem %s1, 896
        %v1279 = vld [vmem:[%s1278] sm:$0xff]
        %v1280 = vld [vmem:[%s1278 + $0x8] sm:$0xff]
        %v1281 = vld [vmem:[%s1278 + $0x10] sm:$0xff]
        %v1282 = vld [vmem:[%s1278 + $0x18] sm:$0xff]
        %v1283 = vld [vmem:[%s1278 + $0x20] sm:$0xff]
        %v1284 = vld [vmem:[%s1278 + $0x28] sm:$0xff]
        %v1285 = vld [vmem:[%s1278 + $0x30] sm:$0xff]
        %v1286 = vld [vmem:[%s1278 + $0x38] sm:$0xff]
        %v1287 = vld [vmem:[%s1278 + $0x40] sm:$0xff]
        %v1288 = vld [vmem:[%s1278 + $0x48] sm:$0xff]
        %v1289 = vld [vmem:[%s1278 + $0x50] sm:$0xff]
        %v1290 = vld [vmem:[%s1278 + $0x58] sm:$0xff]
        %v1291 = vld [vmem:[%s1278 + $0x60] sm:$0xff]
        %v1292 = vld [vmem:[%s1278 + $0x68] sm:$0xff]
        %v1293 = vld [vmem:[%s1278 + $0x70] sm:$0xff]
        %v1294 = vld [vmem:[%s1278 + $0x78] sm:$0xff]
        %1295 = vmatpush.msra.mxu0 %v1294
        %1296 = vmatpush.msra.mxu0 %v1293
        %1297 = vmatpush.msra.mxu0 %v1292
        %1298 = vmatpush.msra.mxu0 %v1291
        %1299 = vmatpush.msra.mxu0 %v1290
        %1300 = vmatpush.msra.mxu0 %v1289
        %1301 = vmatpush.msra.mxu0 %v1288
        %1302 = vmatpush.msra.mxu0 %v1287
        %1303 = vmatpush.msra.mxu0 %v1286
        %1304 = vmatpush.msra.mxu0 %v1285
        %1305 = vmatpush.msra.mxu0 %v1284
        %1306 = vmatpush.msra.mxu0 %v1283
        %1307 = vmatpush.msra.mxu0 %v1282
        %1308 = vmatpush.msra.mxu0 %v1281
        %1309 = vmatpush.msra.mxu0 %v1280
        %1310 = vmatpush.msra.mxu0 %v1279
        %1311 = vmatmul.f32.gmra.mxu0 %v834
        %v1312 = vpop.f32.mrf.mxu0
        %v1313 = vadd.f32 0.0, %v1312
        %1314 = vmatmul.f32.gmra.mxu0 %v836
        %v1315 = vpop.f32.mrf.mxu0
        %v1316 = vadd.f32 0.0, %v1315
        %1317 = vmatmul.f32.gmra.mxu0 %v839
        %v1318 = vpop.f32.mrf.mxu0
        %v1319 = vadd.f32 0.0, %v1318
        %1320 = vmatmul.f32.gmra.mxu0 %v841
        %v1321 = vpop.f32.mrf.mxu0
        %v1322 = vadd.f32 0.0, %v1321
        %1323 = vmatmul.f32.gmra.mxu0 %v844
        %v1324 = vpop.f32.mrf.mxu0
        %v1325 = vadd.f32 0.0, %v1324
        %1326 = vmatmul.f32.gmra.mxu0 %v846
        %v1327 = vpop.f32.mrf.mxu0
        %v1328 = vadd.f32 0.0, %v1327
        %1329 = vmatmul.f32.gmra.mxu0 %v849
        %v1330 = vpop.f32.mrf.mxu0
        %v1331 = vadd.f32 0.0, %v1330
        %1332 = vmatmul.f32.gmra.mxu0 %v851
        %v1333 = vpop.f32.mrf.mxu0
        %v1334 = vadd.f32 0.0, %v1333
        %1335 = vmatmul.f32.gmra.mxu0 %v854
        %v1336 = vpop.f32.mrf.mxu0
        %v1337 = vadd.f32 0.0, %v1336
        %1338 = vmatmul.f32.gmra.mxu0 %v856
        %v1339 = vpop.f32.mrf.mxu0
        %v1340 = vadd.f32 0.0, %v1339
        %1341 = vmatmul.f32.gmra.mxu0 %v859
        %v1342 = vpop.f32.mrf.mxu0
        %v1343 = vadd.f32 0.0, %v1342
        %1344 = vmatmul.f32.gmra.mxu0 %v861
        %v1345 = vpop.f32.mrf.mxu0
        %v1346 = vadd.f32 0.0, %v1345
        %1347 = vmatmul.f32.gmra.mxu0 %v864
        %v1348 = vpop.f32.mrf.mxu0
        %v1349 = vadd.f32 0.0, %v1348
        %1350 = vmatmul.f32.gmra.mxu0 %v866
        %v1351 = vpop.f32.mrf.mxu0
        %v1352 = vadd.f32 0.0, %v1351
        %1353 = vmatmul.f32.gmra.mxu0 %v869
        %v1354 = vpop.f32.mrf.mxu0
        %v1355 = vadd.f32 0.0, %v1354
        %1356 = vmatmul.f32.gmra.mxu0 %v871
        %v1357 = vpop.f32.mrf.mxu0
        %v1358 = vadd.f32 0.0, %v1357
        %1359 = vmatmul.f32.gmra.mxu0 %v874
        %v1360 = vpop.f32.mrf.mxu0
        %v1361 = vadd.f32 0.0, %v1360
        %1362 = vmatmul.f32.gmra.mxu0 %v876
        %v1363 = vpop.f32.mrf.mxu0
        %v1364 = vadd.f32 0.0, %v1363
        %1365 = vmatmul.f32.gmra.mxu0 %v879
        %v1366 = vpop.f32.mrf.mxu0
        %v1367 = vadd.f32 0.0, %v1366
        %1368 = vmatmul.f32.gmra.mxu0 %v881
        %v1369 = vpop.f32.mrf.mxu0
        %v1370 = vadd.f32 0.0, %v1369
        %1371 = vmatmul.f32.gmra.mxu0 %v884
        %v1372 = vpop.f32.mrf.mxu0
        %v1373 = vadd.f32 0.0, %v1372
        %1374 = vmatmul.f32.gmra.mxu0 %v886
        %v1375 = vpop.f32.mrf.mxu0
        %v1376 = vadd.f32 0.0, %v1375
        %1377 = vmatmul.f32.gmra.mxu0 %v889
        %v1378 = vpop.f32.mrf.mxu0
        %v1379 = vadd.f32 0.0, %v1378
        %1380 = vmatmul.f32.gmra.mxu0 %v891
        %v1381 = vpop.f32.mrf.mxu0
        %v1382 = vadd.f32 0.0, %v1381
        %1383 = vmatmul.f32.gmra.mxu0 %v894
        %v1384 = vpop.f32.mrf.mxu0
        %v1385 = vadd.f32 0.0, %v1384
        %1386 = vmatmul.f32.gmra.mxu0 %v896
        %v1387 = vpop.f32.mrf.mxu0
        %v1388 = vadd.f32 0.0, %v1387
        %1389 = vmatmul.f32.gmra.mxu0 %v899
        %v1390 = vpop.f32.mrf.mxu0
        %v1391 = vadd.f32 0.0, %v1390
        %1392 = vmatmul.f32.gmra.mxu0 %v901
        %v1393 = vpop.f32.mrf.mxu0
        %v1394 = vadd.f32 0.0, %v1393
        %1395 = vmatmul.f32.gmra.mxu0 %v1101
        %v1396 = vpop.f32.mrf.mxu0
        %v1397 = vadd.f32 0.0, %v1396
        %1398 = vmatmul.f32.gmra.mxu0 %v1103
        %v1399 = vpop.f32.mrf.mxu0
        %v1400 = vadd.f32 0.0, %v1399
        %1401 = vmatmul.f32.gmra.mxu0 %v1273
        %v1402 = vpop.f32.mrf.mxu0
        %v1403 = vadd.f32 0.0, %v1402
        %1404 = vmatmul.f32.gmra.mxu0 %v1275
        %v1405 = vpop.f32.mrf.mxu0
        %v1406 = vadd.f32 0.0, %v1405
        %1407 = vdwg.mxu0
        %v1408 = vadd.f32 %v1236, %v1313
        %v1409 = vadd.f32 %v1237, %v1316
        %v1410 = vadd.f32 %v1238, %v1319
        %v1411 = vadd.f32 %v1239, %v1322
        %v1412 = vadd.f32 %v1240, %v1325
        %v1413 = vadd.f32 %v1241, %v1328
        %v1414 = vadd.f32 %v1242, %v1331
        %v1415 = vadd.f32 %v1243, %v1334
        %v1416 = vadd.f32 %v1244, %v1337
        %v1417 = vadd.f32 %v1245, %v1340
        %v1418 = vadd.f32 %v1246, %v1343
        %v1419 = vadd.f32 %v1247, %v1346
        %v1420 = vadd.f32 %v1248, %v1349
        %v1421 = vadd.f32 %v1249, %v1352
        %v1422 = vadd.f32 %v1250, %v1355
        %v1423 = vadd.f32 %v1251, %v1358
        %v1424 = vadd.f32 %v1252, %v1361
        %v1425 = vadd.f32 %v1253, %v1364
        %v1426 = vadd.f32 %v1254, %v1367
        %v1427 = vadd.f32 %v1255, %v1370
        %v1428 = vadd.f32 %v1256, %v1373
        %v1429 = vadd.f32 %v1257, %v1376
        %v1430 = vadd.f32 %v1258, %v1379
        %v1431 = vadd.f32 %v1259, %v1382
        %v1432 = vadd.f32 %v1260, %v1385
        %v1433 = vadd.f32 %v1261, %v1388
        %v1434 = vadd.f32 %v1262, %v1391
        %v1435 = vadd.f32 %v1263, %v1394
        %v1436 = vadd.f32 %v1264, %v1397
        %v1437 = vadd.f32 %v1265, %v1400
        %v1438 = vadd.f32 %v1266, %v1403
        %v1439 = vadd.f32 %v1267, %v1406
        %vm1440 = vcmask 1045504
        %v1441 = vrot.slane %v298, 2
        %v1442 = vrot.slane %v299, 2
        %v1443 = vsel %vm1440, %v1441, %v1442
        %v1444 = vrot.slane %v300, 2
        %v1445 = vsel %vm1440, %v1442, %v1444
        %v1446 = vrot.slane %v301, 2
        %v1447 = vrot.slane %v302, 2
        %v1448 = vsel %vm1440, %v1446, %v1447
        %v1449 = vrot.slane %v303, 2
        %v1450 = vsel %vm1440, %v1447, %v1449
        %v1451 = vrot.slane %v304, 2
        %v1452 = vrot.slane %v305, 2
        %v1453 = vsel %vm1440, %v1451, %v1452
        %v1454 = vrot.slane %v306, 2
        %v1455 = vsel %vm1440, %v1452, %v1454
        %v1456 = vrot.slane %v307, 2
        %v1457 = vrot.slane %v308, 2
        %v1458 = vsel %vm1440, %v1456, %v1457
        %v1459 = vrot.slane %v309, 2
        %v1460 = vsel %vm1440, %v1457, %v1459
        %v1461 = vrot.slane %v310, 2
        %v1462 = vrot.slane %v311, 2
        %v1463 = vsel %vm1440, %v1461, %v1462
        %v1464 = vrot.slane %v312, 2
        %v1465 = vsel %vm1440, %v1462, %v1464
        %v1466 = vrot.slane %v313, 2
        %v1467 = vrot.slane %v314, 2
        %v1468 = vsel %vm1440, %v1466, %v1467
        %v1469 = vrot.slane %v315, 2
        %v1470 = vsel %vm1440, %v1467, %v1469
        %v1471 = vrot.slane %v316, 2
        %v1472 = vrot.slane %v317, 2
        %v1473 = vsel %vm1440, %v1471, %v1472
        %v1474 = vrot.slane %v318, 2
        %v1475 = vsel %vm1440, %v1472, %v1474
        %v1476 = vrot.slane %v319, 2
        %v1477 = vrot.slane %v320, 2
        %v1478 = vsel %vm1440, %v1476, %v1477
        %v1479 = vrot.slane %v321, 2
        %v1480 = vsel %vm1440, %v1477, %v1479
        %v1481 = vrot.slane %v322, 2
        %v1482 = vrot.slane %v323, 2
        %v1483 = vsel %vm1440, %v1481, %v1482
        %v1484 = vrot.slane %v324, 2
        %v1485 = vsel %vm1440, %v1482, %v1484
        %v1486 = vrot.slane %v325, 2
        %v1487 = vrot.slane %v326, 2
        %v1488 = vsel %vm1440, %v1486, %v1487
        %v1489 = vrot.slane %v327, 2
        %v1490 = vsel %vm1440, %v1487, %v1489
        %v1491 = vrot.slane %v328, 2
        %v1492 = vrot.slane %v329, 2
        %v1493 = vsel %vm1440, %v1491, %v1492
        %v1494 = vrot.slane %v330, 2
        %v1495 = vsel %vm1440, %v1492, %v1494
        %v1496 = vrot.slane %v331, 2
        %v1497 = vrot.slane %v332, 2
        %v1498 = vsel %vm1440, %v1496, %v1497
        %v1499 = vrot.slane %v333, 2
        %v1500 = vsel %vm1440, %v1497, %v1499
        %v1501 = vrot.slane %v334, 2
        %v1502 = vrot.slane %v335, 2
        %v1503 = vsel %vm1440, %v1501, %v1502
        %v1504 = vrot.slane %v336, 2
        %v1505 = vsel %vm1440, %v1502, %v1504
        %v1506 = vrot.slane %v337, 2
        %v1507 = vrot.slane %v338, 2
        %v1508 = vsel %vm1440, %v1506, %v1507
        %v1509 = vrot.slane %v339, 2
        %v1510 = vsel %vm1440, %v1507, %v1509
        %v1511 = vrot.slane %v340, 2
        %v1512 = vrot.slane %v341, 2
        %v1513 = vsel %vm1440, %v1511, %v1512
        %v1514 = vrot.slane %v342, 2
        %v1515 = vsel %vm1440, %v1512, %v1514
        %v1516 = vrot.slane %v343, 2
        %v1517 = vrot.slane %v344, 2
        %v1518 = vsel %vm1440, %v1516, %v1517
        %v1519 = vrot.slane %v345, 2
        %v1520 = vsel %vm1440, %v1517, %v1519
        %s1553 = scalar_lea.vmem %s1, 256
        %v1554 = vld [vmem:[%s1553] sm:$0xff]
        %v1555 = vld [vmem:[%s1553 + $0x8] sm:$0xff]
        %v1556 = vld [vmem:[%s1553 + $0x10] sm:$0xff]
        %v1557 = vld [vmem:[%s1553 + $0x18] sm:$0xff]
        %v1558 = vld [vmem:[%s1553 + $0x20] sm:$0xff]
        %v1559 = vld [vmem:[%s1553 + $0x28] sm:$0xff]
        %v1560 = vld [vmem:[%s1553 + $0x30] sm:$0xff]
        %v1561 = vld [vmem:[%s1553 + $0x38] sm:$0xff]
        %v1562 = vld [vmem:[%s1553 + $0x40] sm:$0xff]
        %v1563 = vld [vmem:[%s1553 + $0x48] sm:$0xff]
        %v1564 = vld [vmem:[%s1553 + $0x50] sm:$0xff]
        %v1565 = vld [vmem:[%s1553 + $0x58] sm:$0xff]
        %v1566 = vld [vmem:[%s1553 + $0x60] sm:$0xff]
        %v1567 = vld [vmem:[%s1553 + $0x68] sm:$0xff]
        %v1568 = vld [vmem:[%s1553 + $0x70] sm:$0xff]
        %v1569 = vld [vmem:[%s1553 + $0x78] sm:$0xff]
        %1570 = vmatpush.msra.mxu0 %v1569
        %1571 = vmatpush.msra.mxu0 %v1568
        %1572 = vmatpush.msra.mxu0 %v1567
        %1573 = vmatpush.msra.mxu0 %v1566
        %1574 = vmatpush.msra.mxu0 %v1565
        %1575 = vmatpush.msra.mxu0 %v1564
        %1576 = vmatpush.msra.mxu0 %v1563
        %1577 = vmatpush.msra.mxu0 %v1562
        %1578 = vmatpush.msra.mxu0 %v1561
        %1579 = vmatpush.msra.mxu0 %v1560
        %1580 = vmatpush.msra.mxu0 %v1559
        %1581 = vmatpush.msra.mxu0 %v1558
        %1582 = vmatpush.msra.mxu0 %v1557
        %1583 = vmatpush.msra.mxu0 %v1556
        %1584 = vmatpush.msra.mxu0 %v1555
        %1585 = vmatpush.msra.mxu0 %v1554
        %1586 = vmatmul.f32.gmra.mxu0 %v1443
        %v1587 = vpop.f32.mrf.mxu0
        %v1588 = vadd.f32 0.0, %v1587
        %1589 = vmatmul.f32.gmra.mxu0 %v1445
        %v1590 = vpop.f32.mrf.mxu0
        %v1591 = vadd.f32 0.0, %v1590
        %1592 = vmatmul.f32.gmra.mxu0 %v1448
        %v1593 = vpop.f32.mrf.mxu0
        %v1594 = vadd.f32 0.0, %v1593
        %1595 = vmatmul.f32.gmra.mxu0 %v1450
        %v1596 = vpop.f32.mrf.mxu0
        %v1597 = vadd.f32 0.0, %v1596
        %1598 = vmatmul.f32.gmra.mxu0 %v1453
        %v1599 = vpop.f32.mrf.mxu0
        %v1600 = vadd.f32 0.0, %v1599
        %1601 = vmatmul.f32.gmra.mxu0 %v1455
        %v1602 = vpop.f32.mrf.mxu0
        %v1603 = vadd.f32 0.0, %v1602
        %1604 = vmatmul.f32.gmra.mxu0 %v1458
        %v1605 = vpop.f32.mrf.mxu0
        %v1606 = vadd.f32 0.0, %v1605
        %1607 = vmatmul.f32.gmra.mxu0 %v1460
        %v1608 = vpop.f32.mrf.mxu0
        %v1609 = vadd.f32 0.0, %v1608
        %1610 = vmatmul.f32.gmra.mxu0 %v1463
        %v1611 = vpop.f32.mrf.mxu0
        %v1612 = vadd.f32 0.0, %v1611
        %1613 = vmatmul.f32.gmra.mxu0 %v1465
        %v1614 = vpop.f32.mrf.mxu0
        %v1615 = vadd.f32 0.0, %v1614
        %1616 = vmatmul.f32.gmra.mxu0 %v1468
        %v1617 = vpop.f32.mrf.mxu0
        %v1618 = vadd.f32 0.0, %v1617
        %1619 = vmatmul.f32.gmra.mxu0 %v1470
        %v1620 = vpop.f32.mrf.mxu0
        %v1621 = vadd.f32 0.0, %v1620
        %1622 = vmatmul.f32.gmra.mxu0 %v1473
        %v1623 = vpop.f32.mrf.mxu0
        %v1624 = vadd.f32 0.0, %v1623
        %1625 = vmatmul.f32.gmra.mxu0 %v1475
        %v1626 = vpop.f32.mrf.mxu0
        %v1627 = vadd.f32 0.0, %v1626
        %1628 = vmatmul.f32.gmra.mxu0 %v1478
        %v1629 = vpop.f32.mrf.mxu0
        %v1630 = vadd.f32 0.0, %v1629
        %1631 = vmatmul.f32.gmra.mxu0 %v1480
        %v1632 = vpop.f32.mrf.mxu0
        %v1633 = vadd.f32 0.0, %v1632
        %1634 = vmatmul.f32.gmra.mxu0 %v1483
        %v1635 = vpop.f32.mrf.mxu0
        %v1636 = vadd.f32 0.0, %v1635
        %1637 = vmatmul.f32.gmra.mxu0 %v1485
        %v1638 = vpop.f32.mrf.mxu0
        %v1639 = vadd.f32 0.0, %v1638
        %1640 = vmatmul.f32.gmra.mxu0 %v1488
        %v1641 = vpop.f32.mrf.mxu0
        %v1642 = vadd.f32 0.0, %v1641
        %1643 = vmatmul.f32.gmra.mxu0 %v1490
        %v1644 = vpop.f32.mrf.mxu0
        %v1645 = vadd.f32 0.0, %v1644
        %1646 = vmatmul.f32.gmra.mxu0 %v1493
        %v1647 = vpop.f32.mrf.mxu0
        %v1648 = vadd.f32 0.0, %v1647
        %1649 = vmatmul.f32.gmra.mxu0 %v1495
        %v1650 = vpop.f32.mrf.mxu0
        %v1651 = vadd.f32 0.0, %v1650
        %1652 = vmatmul.f32.gmra.mxu0 %v1498
        %v1653 = vpop.f32.mrf.mxu0
        %v1654 = vadd.f32 0.0, %v1653
        %1655 = vmatmul.f32.gmra.mxu0 %v1500
        %v1656 = vpop.f32.mrf.mxu0
        %v1657 = vadd.f32 0.0, %v1656
        %1658 = vmatmul.f32.gmra.mxu0 %v1503
        %v1659 = vpop.f32.mrf.mxu0
        %v1660 = vadd.f32 0.0, %v1659
        %1661 = vmatmul.f32.gmra.mxu0 %v1505
        %v1662 = vpop.f32.mrf.mxu0
        %v1663 = vadd.f32 0.0, %v1662
        %1664 = vmatmul.f32.gmra.mxu0 %v1508
        %v1665 = vpop.f32.mrf.mxu0
        %v1666 = vadd.f32 0.0, %v1665
        %1667 = vmatmul.f32.gmra.mxu0 %v1510
        %v1668 = vpop.f32.mrf.mxu0
        %v1669 = vadd.f32 0.0, %v1668
        %1670 = vmatmul.f32.gmra.mxu0 %v1513
        %v1671 = vpop.f32.mrf.mxu0
        %v1672 = vadd.f32 0.0, %v1671
        %1673 = vmatmul.f32.gmra.mxu0 %v1515
        %v1674 = vpop.f32.mrf.mxu0
        %v1675 = vadd.f32 0.0, %v1674
        %1676 = vmatmul.f32.gmra.mxu0 %v1518
        %v1677 = vpop.f32.mrf.mxu0
        %v1678 = vadd.f32 0.0, %v1677
        %1679 = vmatmul.f32.gmra.mxu0 %v1520
        %v1680 = vpop.f32.mrf.mxu0
        %v1681 = vadd.f32 0.0, %v1680
        %1682 = vdwg.mxu0
        %v1683 = vadd.f32 %v1408, %v1588
        %v1684 = vadd.f32 %v1409, %v1591
        %v1685 = vadd.f32 %v1410, %v1594
        %v1686 = vadd.f32 %v1411, %v1597
        %v1687 = vadd.f32 %v1412, %v1600
        %v1688 = vadd.f32 %v1413, %v1603
        %v1689 = vadd.f32 %v1414, %v1606
        %v1690 = vadd.f32 %v1415, %v1609
        %v1691 = vadd.f32 %v1416, %v1612
        %v1692 = vadd.f32 %v1417, %v1615
        %v1693 = vadd.f32 %v1418, %v1618
        %v1694 = vadd.f32 %v1419, %v1621
        %v1695 = vadd.f32 %v1420, %v1624
        %v1696 = vadd.f32 %v1421, %v1627
        %v1697 = vadd.f32 %v1422, %v1630
        %v1698 = vadd.f32 %v1423, %v1633
        %v1699 = vadd.f32 %v1424, %v1636
        %v1700 = vadd.f32 %v1425, %v1639
        %v1701 = vadd.f32 %v1426, %v1642
        %v1702 = vadd.f32 %v1427, %v1645
        %v1703 = vadd.f32 %v1428, %v1648
        %v1704 = vadd.f32 %v1429, %v1651
        %v1705 = vadd.f32 %v1430, %v1654
        %v1706 = vadd.f32 %v1431, %v1657
        %v1707 = vadd.f32 %v1432, %v1660
        %v1708 = vadd.f32 %v1433, %v1663
        %v1709 = vadd.f32 %v1434, %v1666
        %v1710 = vadd.f32 %v1435, %v1669
        %v1711 = vadd.f32 %v1436, %v1672
        %v1712 = vadd.f32 %v1437, %v1675
        %v1713 = vadd.f32 %v1438, %v1678
        %v1714 = vadd.f32 %v1439, %v1681
        %v1715 = vrot.slane %v346, 2
        %v1716 = vrot.slane %v347, 2
        %v1717 = vsel %vm1440, %v1715, %v1716
        %v1718 = vrot.slane %v348, 2
        %v1719 = vsel %vm1440, %v1716, %v1718
        %s1722 = scalar_lea.vmem %s1, 640
        %v1723 = vld [vmem:[%s1722] sm:$0xff]
        %v1724 = vld [vmem:[%s1722 + $0x8] sm:$0xff]
        %v1725 = vld [vmem:[%s1722 + $0x10] sm:$0xff]
        %v1726 = vld [vmem:[%s1722 + $0x18] sm:$0xff]
        %v1727 = vld [vmem:[%s1722 + $0x20] sm:$0xff]
        %v1728 = vld [vmem:[%s1722 + $0x28] sm:$0xff]
        %v1729 = vld [vmem:[%s1722 + $0x30] sm:$0xff]
        %v1730 = vld [vmem:[%s1722 + $0x38] sm:$0xff]
        %v1731 = vld [vmem:[%s1722 + $0x40] sm:$0xff]
        %v1732 = vld [vmem:[%s1722 + $0x48] sm:$0xff]
        %v1733 = vld [vmem:[%s1722 + $0x50] sm:$0xff]
        %v1734 = vld [vmem:[%s1722 + $0x58] sm:$0xff]
        %v1735 = vld [vmem:[%s1722 + $0x60] sm:$0xff]
        %v1736 = vld [vmem:[%s1722 + $0x68] sm:$0xff]
        %v1737 = vld [vmem:[%s1722 + $0x70] sm:$0xff]
        %v1738 = vld [vmem:[%s1722 + $0x78] sm:$0xff]
        %1739 = vmatpush.msra.mxu0 %v1738
        %1740 = vmatpush.msra.mxu0 %v1737
        %1741 = vmatpush.msra.mxu0 %v1736
        %1742 = vmatpush.msra.mxu0 %v1735
        %1743 = vmatpush.msra.mxu0 %v1734
        %1744 = vmatpush.msra.mxu0 %v1733
        %1745 = vmatpush.msra.mxu0 %v1732
        %1746 = vmatpush.msra.mxu0 %v1731
        %1747 = vmatpush.msra.mxu0 %v1730
        %1748 = vmatpush.msra.mxu0 %v1729
        %1749 = vmatpush.msra.mxu0 %v1728
        %1750 = vmatpush.msra.mxu0 %v1727
        %1751 = vmatpush.msra.mxu0 %v1726
        %1752 = vmatpush.msra.mxu0 %v1725
        %1753 = vmatpush.msra.mxu0 %v1724
        %1754 = vmatpush.msra.mxu0 %v1723
        %1755 = vmatmul.f32.gmra.mxu0 %v1448
        %v1756 = vpop.f32.mrf.mxu0
        %v1757 = vadd.f32 0.0, %v1756
        %1758 = vmatmul.f32.gmra.mxu0 %v1450
        %v1759 = vpop.f32.mrf.mxu0
        %v1760 = vadd.f32 0.0, %v1759
        %1761 = vmatmul.f32.gmra.mxu0 %v1453
        %v1762 = vpop.f32.mrf.mxu0
        %v1763 = vadd.f32 0.0, %v1762
        %1764 = vmatmul.f32.gmra.mxu0 %v1455
        %v1765 = vpop.f32.mrf.mxu0
        %v1766 = vadd.f32 0.0, %v1765
        %1767 = vmatmul.f32.gmra.mxu0 %v1458
        %v1768 = vpop.f32.mrf.mxu0
        %v1769 = vadd.f32 0.0, %v1768
        %1770 = vmatmul.f32.gmra.mxu0 %v1460
        %v1771 = vpop.f32.mrf.mxu0
        %v1772 = vadd.f32 0.0, %v1771
        %1773 = vmatmul.f32.gmra.mxu0 %v1463
        %v1774 = vpop.f32.mrf.mxu0
        %v1775 = vadd.f32 0.0, %v1774
        %1776 = vmatmul.f32.gmra.mxu0 %v1465
        %v1777 = vpop.f32.mrf.mxu0
        %v1778 = vadd.f32 0.0, %v1777
        %1779 = vmatmul.f32.gmra.mxu0 %v1468
        %v1780 = vpop.f32.mrf.mxu0
        %v1781 = vadd.f32 0.0, %v1780
        %1782 = vmatmul.f32.gmra.mxu0 %v1470
        %v1783 = vpop.f32.mrf.mxu0
        %v1784 = vadd.f32 0.0, %v1783
        %1785 = vmatmul.f32.gmra.mxu0 %v1473
        %v1786 = vpop.f32.mrf.mxu0
        %v1787 = vadd.f32 0.0, %v1786
        %1788 = vmatmul.f32.gmra.mxu0 %v1475
        %v1789 = vpop.f32.mrf.mxu0
        %v1790 = vadd.f32 0.0, %v1789
        %1791 = vmatmul.f32.gmra.mxu0 %v1478
        %v1792 = vpop.f32.mrf.mxu0
        %v1793 = vadd.f32 0.0, %v1792
        %1794 = vmatmul.f32.gmra.mxu0 %v1480
        %v1795 = vpop.f32.mrf.mxu0
        %v1796 = vadd.f32 0.0, %v1795
        %1797 = vmatmul.f32.gmra.mxu0 %v1483
        %v1798 = vpop.f32.mrf.mxu0
        %v1799 = vadd.f32 0.0, %v1798
        %1800 = vmatmul.f32.gmra.mxu0 %v1485
        %v1801 = vpop.f32.mrf.mxu0
        %v1802 = vadd.f32 0.0, %v1801
        %1803 = vmatmul.f32.gmra.mxu0 %v1488
        %v1804 = vpop.f32.mrf.mxu0
        %v1805 = vadd.f32 0.0, %v1804
        %1806 = vmatmul.f32.gmra.mxu0 %v1490
        %v1807 = vpop.f32.mrf.mxu0
        %v1808 = vadd.f32 0.0, %v1807
        %1809 = vmatmul.f32.gmra.mxu0 %v1493
        %v1810 = vpop.f32.mrf.mxu0
        %v1811 = vadd.f32 0.0, %v1810
        %1812 = vmatmul.f32.gmra.mxu0 %v1495
        %v1813 = vpop.f32.mrf.mxu0
        %v1814 = vadd.f32 0.0, %v1813
        %1815 = vmatmul.f32.gmra.mxu0 %v1498
        %v1816 = vpop.f32.mrf.mxu0
        %v1817 = vadd.f32 0.0, %v1816
        %1818 = vmatmul.f32.gmra.mxu0 %v1500
        %v1819 = vpop.f32.mrf.mxu0
        %v1820 = vadd.f32 0.0, %v1819
        %1821 = vmatmul.f32.gmra.mxu0 %v1503
        %v1822 = vpop.f32.mrf.mxu0
        %v1823 = vadd.f32 0.0, %v1822
        %1824 = vmatmul.f32.gmra.mxu0 %v1505
        %v1825 = vpop.f32.mrf.mxu0
        %v1826 = vadd.f32 0.0, %v1825
        %1827 = vmatmul.f32.gmra.mxu0 %v1508
        %v1828 = vpop.f32.mrf.mxu0
        %v1829 = vadd.f32 0.0, %v1828
        %1830 = vmatmul.f32.gmra.mxu0 %v1510
        %v1831 = vpop.f32.mrf.mxu0
        %v1832 = vadd.f32 0.0, %v1831
        %1833 = vmatmul.f32.gmra.mxu0 %v1513
        %v1834 = vpop.f32.mrf.mxu0
        %v1835 = vadd.f32 0.0, %v1834
        %1836 = vmatmul.f32.gmra.mxu0 %v1515
        %v1837 = vpop.f32.mrf.mxu0
        %v1838 = vadd.f32 0.0, %v1837
        %1839 = vmatmul.f32.gmra.mxu0 %v1518
        %v1840 = vpop.f32.mrf.mxu0
        %v1841 = vadd.f32 0.0, %v1840
        %1842 = vmatmul.f32.gmra.mxu0 %v1520
        %v1843 = vpop.f32.mrf.mxu0
        %v1844 = vadd.f32 0.0, %v1843
        %1845 = vmatmul.f32.gmra.mxu0 %v1717
        %v1846 = vpop.f32.mrf.mxu0
        %v1847 = vadd.f32 0.0, %v1846
        %1848 = vmatmul.f32.gmra.mxu0 %v1719
        %v1849 = vpop.f32.mrf.mxu0
        %v1850 = vadd.f32 0.0, %v1849
        %1851 = vdwg.mxu0
        %v1852 = vadd.f32 %v1683, %v1757
        %v1853 = vadd.f32 %v1684, %v1760
        %v1854 = vadd.f32 %v1685, %v1763
        %v1855 = vadd.f32 %v1686, %v1766
        %v1856 = vadd.f32 %v1687, %v1769
        %v1857 = vadd.f32 %v1688, %v1772
        %v1858 = vadd.f32 %v1689, %v1775
        %v1859 = vadd.f32 %v1690, %v1778
        %v1860 = vadd.f32 %v1691, %v1781
        %v1861 = vadd.f32 %v1692, %v1784
        %v1862 = vadd.f32 %v1693, %v1787
        %v1863 = vadd.f32 %v1694, %v1790
        %v1864 = vadd.f32 %v1695, %v1793
        %v1865 = vadd.f32 %v1696, %v1796
        %v1866 = vadd.f32 %v1697, %v1799
        %v1867 = vadd.f32 %v1698, %v1802
        %v1868 = vadd.f32 %v1699, %v1805
        %v1869 = vadd.f32 %v1700, %v1808
        %v1870 = vadd.f32 %v1701, %v1811
        %v1871 = vadd.f32 %v1702, %v1814
        %v1872 = vadd.f32 %v1703, %v1817
        %v1873 = vadd.f32 %v1704, %v1820
        %v1874 = vadd.f32 %v1705, %v1823
        %v1875 = vadd.f32 %v1706, %v1826
        %v1876 = vadd.f32 %v1707, %v1829
        %v1877 = vadd.f32 %v1708, %v1832
        %v1878 = vadd.f32 %v1709, %v1835
        %v1879 = vadd.f32 %v1710, %v1838
        %v1880 = vadd.f32 %v1711, %v1841
        %v1881 = vadd.f32 %v1712, %v1844
        %v1882 = vadd.f32 %v1713, %v1847
        %v1883 = vadd.f32 %v1714, %v1850
        %v1884 = vrot.slane %v349, 2
        %v1885 = vrot.slane %v350, 2
        %v1886 = vsel %vm1440, %v1884, %v1885
        %v1887 = vrot.slane %v351, 2
        %v1888 = vsel %vm1440, %v1885, %v1887
        %s1891 = scalar_lea.vmem %s1, 1024
        %v1892 = vld [vmem:[%s1891] sm:$0xff]
        %v1893 = vld [vmem:[%s1891 + $0x8] sm:$0xff]
        %v1894 = vld [vmem:[%s1891 + $0x10] sm:$0xff]
        %v1895 = vld [vmem:[%s1891 + $0x18] sm:$0xff]
        %v1896 = vld [vmem:[%s1891 + $0x20] sm:$0xff]
        %v1897 = vld [vmem:[%s1891 + $0x28] sm:$0xff]
        %v1898 = vld [vmem:[%s1891 + $0x30] sm:$0xff]
        %v1899 = vld [vmem:[%s1891 + $0x38] sm:$0xff]
        %v1900 = vld [vmem:[%s1891 + $0x40] sm:$0xff]
        %v1901 = vld [vmem:[%s1891 + $0x48] sm:$0xff]
        %v1902 = vld [vmem:[%s1891 + $0x50] sm:$0xff]
        %v1903 = vld [vmem:[%s1891 + $0x58] sm:$0xff]
        %v1904 = vld [vmem:[%s1891 + $0x60] sm:$0xff]
        %v1905 = vld [vmem:[%s1891 + $0x68] sm:$0xff]
        %v1906 = vld [vmem:[%s1891 + $0x70] sm:$0xff]
        %v1907 = vld [vmem:[%s1891 + $0x78] sm:$0xff]
        %1908 = vmatpush.msra.mxu0 %v1907
        %1909 = vmatpush.msra.mxu0 %v1906
        %1910 = vmatpush.msra.mxu0 %v1905
        %1911 = vmatpush.msra.mxu0 %v1904
        %1912 = vmatpush.msra.mxu0 %v1903
        %1913 = vmatpush.msra.mxu0 %v1902
        %1914 = vmatpush.msra.mxu0 %v1901
        %1915 = vmatpush.msra.mxu0 %v1900
        %1916 = vmatpush.msra.mxu0 %v1899
        %1917 = vmatpush.msra.mxu0 %v1898
        %1918 = vmatpush.msra.mxu0 %v1897
        %1919 = vmatpush.msra.mxu0 %v1896
        %1920 = vmatpush.msra.mxu0 %v1895
        %1921 = vmatpush.msra.mxu0 %v1894
        %1922 = vmatpush.msra.mxu0 %v1893
        %1923 = vmatpush.msra.mxu0 %v1892
        %1924 = vmatmul.f32.gmra.mxu0 %v1453
        %v1925 = vpop.f32.mrf.mxu0
        %v1926 = vadd.f32 0.0, %v1925
        %1927 = vmatmul.f32.gmra.mxu0 %v1455
        %v1928 = vpop.f32.mrf.mxu0
        %v1929 = vadd.f32 0.0, %v1928
        %1930 = vmatmul.f32.gmra.mxu0 %v1458
        %v1931 = vpop.f32.mrf.mxu0
        %v1932 = vadd.f32 0.0, %v1931
        %1933 = vmatmul.f32.gmra.mxu0 %v1460
        %v1934 = vpop.f32.mrf.mxu0
        %v1935 = vadd.f32 0.0, %v1934
        %1936 = vmatmul.f32.gmra.mxu0 %v1463
        %v1937 = vpop.f32.mrf.mxu0
        %v1938 = vadd.f32 0.0, %v1937
        %1939 = vmatmul.f32.gmra.mxu0 %v1465
        %v1940 = vpop.f32.mrf.mxu0
        %v1941 = vadd.f32 0.0, %v1940
        %1942 = vmatmul.f32.gmra.mxu0 %v1468
        %v1943 = vpop.f32.mrf.mxu0
        %v1944 = vadd.f32 0.0, %v1943
        %1945 = vmatmul.f32.gmra.mxu0 %v1470
        %v1946 = vpop.f32.mrf.mxu0
        %v1947 = vadd.f32 0.0, %v1946
        %1948 = vmatmul.f32.gmra.mxu0 %v1473
        %v1949 = vpop.f32.mrf.mxu0
        %v1950 = vadd.f32 0.0, %v1949
        %1951 = vmatmul.f32.gmra.mxu0 %v1475
        %v1952 = vpop.f32.mrf.mxu0
        %v1953 = vadd.f32 0.0, %v1952
        %1954 = vmatmul.f32.gmra.mxu0 %v1478
        %v1955 = vpop.f32.mrf.mxu0
        %v1956 = vadd.f32 0.0, %v1955
        %1957 = vmatmul.f32.gmra.mxu0 %v1480
        %v1958 = vpop.f32.mrf.mxu0
        %v1959 = vadd.f32 0.0, %v1958
        %1960 = vmatmul.f32.gmra.mxu0 %v1483
        %v1961 = vpop.f32.mrf.mxu0
        %v1962 = vadd.f32 0.0, %v1961
        %1963 = vmatmul.f32.gmra.mxu0 %v1485
        %v1964 = vpop.f32.mrf.mxu0
        %v1965 = vadd.f32 0.0, %v1964
        %1966 = vmatmul.f32.gmra.mxu0 %v1488
        %v1967 = vpop.f32.mrf.mxu0
        %v1968 = vadd.f32 0.0, %v1967
        %1969 = vmatmul.f32.gmra.mxu0 %v1490
        %v1970 = vpop.f32.mrf.mxu0
        %v1971 = vadd.f32 0.0, %v1970
        %1972 = vmatmul.f32.gmra.mxu0 %v1493
        %v1973 = vpop.f32.mrf.mxu0
        %v1974 = vadd.f32 0.0, %v1973
        %1975 = vmatmul.f32.gmra.mxu0 %v1495
        %v1976 = vpop.f32.mrf.mxu0
        %v1977 = vadd.f32 0.0, %v1976
        %1978 = vmatmul.f32.gmra.mxu0 %v1498
        %v1979 = vpop.f32.mrf.mxu0
        %v1980 = vadd.f32 0.0, %v1979
        %1981 = vmatmul.f32.gmra.mxu0 %v1500
        %v1982 = vpop.f32.mrf.mxu0
        %v1983 = vadd.f32 0.0, %v1982
        %1984 = vmatmul.f32.gmra.mxu0 %v1503
        %v1985 = vpop.f32.mrf.mxu0
        %v1986 = vadd.f32 0.0, %v1985
        %1987 = vmatmul.f32.gmra.mxu0 %v1505
        %v1988 = vpop.f32.mrf.mxu0
        %v1989 = vadd.f32 0.0, %v1988
        %1990 = vmatmul.f32.gmra.mxu0 %v1508
        %v1991 = vpop.f32.mrf.mxu0
        %v1992 = vadd.f32 0.0, %v1991
        %1993 = vmatmul.f32.gmra.mxu0 %v1510
        %v1994 = vpop.f32.mrf.mxu0
        %v1995 = vadd.f32 0.0, %v1994
        %1996 = vmatmul.f32.gmra.mxu0 %v1513
        %v1997 = vpop.f32.mrf.mxu0
        %v1998 = vadd.f32 0.0, %v1997
        %1999 = vmatmul.f32.gmra.mxu0 %v1515
        %v2000 = vpop.f32.mrf.mxu0
        %v2001 = vadd.f32 0.0, %v2000
        %2002 = vmatmul.f32.gmra.mxu0 %v1518
        %v2003 = vpop.f32.mrf.mxu0
        %v2004 = vadd.f32 0.0, %v2003
        %2005 = vmatmul.f32.gmra.mxu0 %v1520
        %v2006 = vpop.f32.mrf.mxu0
        %v2007 = vadd.f32 0.0, %v2006
        %2008 = vmatmul.f32.gmra.mxu0 %v1717
        %v2009 = vpop.f32.mrf.mxu0
        %v2010 = vadd.f32 0.0, %v2009
        %2011 = vmatmul.f32.gmra.mxu0 %v1719
        %v2012 = vpop.f32.mrf.mxu0
        %v2013 = vadd.f32 0.0, %v2012
        %2014 = vmatmul.f32.gmra.mxu0 %v1886
        %v2015 = vpop.f32.mrf.mxu0
        %v2016 = vadd.f32 0.0, %v2015
        %2017 = vmatmul.f32.gmra.mxu0 %v1888
        %v2018 = vpop.f32.mrf.mxu0
        %v2019 = vadd.f32 0.0, %v2018
        %2020 = vdwg.mxu0
        %v2021 = vadd.f32 %v1852, %v1926
        %v2022 = vadd.f32 %v1853, %v1929
        %v2023 = vadd.f32 %v1854, %v1932
        %v2024 = vadd.f32 %v1855, %v1935
        %v2025 = vadd.f32 %v1856, %v1938
        %v2026 = vadd.f32 %v1857, %v1941
        %v2027 = vadd.f32 %v1858, %v1944
        %v2028 = vadd.f32 %v1859, %v1947
        %v2029 = vadd.f32 %v1860, %v1950
        %v2030 = vadd.f32 %v1861, %v1953
        %v2031 = vadd.f32 %v1862, %v1956
        %v2032 = vadd.f32 %v1863, %v1959
        %v2033 = vadd.f32 %v1864, %v1962
        %v2034 = vadd.f32 %v1865, %v1965
        %v2035 = vadd.f32 %v1866, %v1968
        %v2036 = vadd.f32 %v1867, %v1971
        %v2037 = vadd.f32 %v1868, %v1974
        %v2038 = vadd.f32 %v1869, %v1977
        %v2039 = vadd.f32 %v1870, %v1980
        %v2040 = vadd.f32 %v1871, %v1983
        %v2041 = vadd.f32 %v1872, %v1986
        %v2042 = vadd.f32 %v1873, %v1989
        %v2043 = vadd.f32 %v1874, %v1992
        %v2044 = vadd.f32 %v1875, %v1995
        %v2045 = vadd.f32 %v1876, %v1998
        %v2046 = vadd.f32 %v1877, %v2001
        %v2047 = vadd.f32 %v1878, %v2004
        %v2048 = vadd.f32 %v1879, %v2007
        %v2049 = vadd.f32 %v1880, %v2010
        %v2050 = vadd.f32 %v1881, %v2013
        %v2051 = vadd.f32 %v1882, %v2016
        %v2052 = vadd.f32 %v1883, %v2019
        %v2053 = vld [vmem:[%s2] sm:$0x1]
        %v2055 = vperm.slane %v2053, 0
        %v2057 = vadd.f32 %v2021, %v2055
        %v2058 = vadd.f32 %v2022, %v2055
        %v2059 = vadd.f32 %v2023, %v2055
        %v2060 = vadd.f32 %v2024, %v2055
        %v2061 = vadd.f32 %v2025, %v2055
        %v2062 = vadd.f32 %v2026, %v2055
        %v2063 = vadd.f32 %v2027, %v2055
        %v2064 = vadd.f32 %v2028, %v2055
        %v2065 = vadd.f32 %v2029, %v2055
        %v2066 = vadd.f32 %v2030, %v2055
        %v2067 = vadd.f32 %v2031, %v2055
        %v2068 = vadd.f32 %v2032, %v2055
        %v2069 = vadd.f32 %v2033, %v2055
        %v2070 = vadd.f32 %v2034, %v2055
        %v2071 = vadd.f32 %v2035, %v2055
        %v2072 = vadd.f32 %v2036, %v2055
        %v2073 = vadd.f32 %v2037, %v2055
        %v2074 = vadd.f32 %v2038, %v2055
        %v2075 = vadd.f32 %v2039, %v2055
        %v2076 = vadd.f32 %v2040, %v2055
        %v2077 = vadd.f32 %v2041, %v2055
        %v2078 = vadd.f32 %v2042, %v2055
        %v2079 = vadd.f32 %v2043, %v2055
        %v2080 = vadd.f32 %v2044, %v2055
        %v2081 = vadd.f32 %v2045, %v2055
        %v2082 = vadd.f32 %v2046, %v2055
        %v2083 = vadd.f32 %v2047, %v2055
        %v2084 = vadd.f32 %v2048, %v2055
        %v2085 = vadd.f32 %v2049, %v2055
        %v2086 = vadd.f32 %v2050, %v2055
        %v2087 = vadd.f32 %v2051, %v2055
        %v2088 = vadd.f32 %v2052, %v2055
        %v2089 = vmax.f32 %v2057, 0.0
        %v2090 = vmax.f32 %v2058, 0.0
        %v2091 = vmax.f32 %v2059, 0.0
        %v2092 = vmax.f32 %v2060, 0.0
        %v2093 = vmax.f32 %v2061, 0.0
        %v2094 = vmax.f32 %v2062, 0.0
        %v2095 = vmax.f32 %v2063, 0.0
        %v2096 = vmax.f32 %v2064, 0.0
        %v2097 = vmax.f32 %v2065, 0.0
        %v2098 = vmax.f32 %v2066, 0.0
        %v2099 = vmax.f32 %v2067, 0.0
        %v2100 = vmax.f32 %v2068, 0.0
        %v2101 = vmax.f32 %v2069, 0.0
        %v2102 = vmax.f32 %v2070, 0.0
        %v2103 = vmax.f32 %v2071, 0.0
        %v2104 = vmax.f32 %v2072, 0.0
        %v2105 = vmax.f32 %v2073, 0.0
        %v2106 = vmax.f32 %v2074, 0.0
        %v2107 = vmax.f32 %v2075, 0.0
        %v2108 = vmax.f32 %v2076, 0.0
        %v2109 = vmax.f32 %v2077, 0.0
        %v2110 = vmax.f32 %v2078, 0.0
        %v2111 = vmax.f32 %v2079, 0.0
        %v2112 = vmax.f32 %v2080, 0.0
        %v2113 = vmax.f32 %v2081, 0.0
        %v2114 = vmax.f32 %v2082, 0.0
        %v2115 = vmax.f32 %v2083, 0.0
        %v2116 = vmax.f32 %v2084, 0.0
        %v2117 = vmax.f32 %v2085, 0.0
        %v2118 = vmax.f32 %v2086, 0.0
        %v2119 = vmax.f32 %v2087, 0.0
        %v2120 = vmax.f32 %v2088, 0.0
        %s2121 = scalar_lea.vmem [#allocation2], 24
        %2122 = vst [vmem:[%s2121 + $0x1] sm:$0xff] %v2089
        %2123 = vst [vmem:[%s2121 + $0x9] sm:$0xff] %v2090
        %2124 = vst [vmem:[%s2121 + $0x19] sm:$0xff] %v2091
        %2125 = vst [vmem:[%s2121 + $0x21] sm:$0xff] %v2092
        %2126 = vst [vmem:[%s2121 + $0x31] sm:$0xff] %v2093
        %2127 = vst [vmem:[%s2121 + $0x39] sm:$0xff] %v2094
        %2128 = vst [vmem:[%s2121 + $0x49] sm:$0xff] %v2095
        %2129 = vst [vmem:[%s2121 + $0x51] sm:$0xff] %v2096
        %2130 = vst [vmem:[%s2121 + $0x61] sm:$0xff] %v2097
        %2131 = vst [vmem:[%s2121 + $0x69] sm:$0xff] %v2098
        %2132 = vst [vmem:[%s2121 + $0x79] sm:$0xff] %v2099
        %2133 = vst [vmem:[%s2121 + $0x81] sm:$0xff] %v2100
        %2134 = vst [vmem:[%s2121 + $0x91] sm:$0xff] %v2101
        %2135 = vst [vmem:[%s2121 + $0x99] sm:$0xff] %v2102
        %2136 = vst [vmem:[%s2121 + $0xa9] sm:$0xff] %v2103
        %2137 = vst [vmem:[%s2121 + $0xb1] sm:$0xff] %v2104
        %2138 = vst [vmem:[%s2121 + $0xc1] sm:$0xff] %v2105
        %2139 = vst [vmem:[%s2121 + $0xc9] sm:$0xff] %v2106
        %2140 = vst [vmem:[%s2121 + $0xd9] sm:$0xff] %v2107
        %2141 = vst [vmem:[%s2121 + $0xe1] sm:$0xff] %v2108
        %2142 = vst [vmem:[%s2121 + $0xf1] sm:$0xff] %v2109
        %2143 = vst [vmem:[%s2121 + $0xf9] sm:$0xff] %v2110
        %2144 = vst [vmem:[%s2121 + $0x109] sm:$0xff] %v2111
        %2145 = vst [vmem:[%s2121 + $0x111] sm:$0xff] %v2112
        %2146 = vst [vmem:[%s2121 + $0x121] sm:$0xff] %v2113
        %2147 = vst [vmem:[%s2121 + $0x129] sm:$0xff] %v2114
        %2148 = vst [vmem:[%s2121 + $0x139] sm:$0xff] %v2115
        %2149 = vst [vmem:[%s2121 + $0x141] sm:$0xff] %v2116
        %2150 = vst [vmem:[%s2121 + $0x151] sm:$0xff] %v2117
        %2151 = vst [vmem:[%s2121 + $0x159] sm:$0xff] %v2118
        %2152 = vst [vmem:[%s2121 + $0x169] sm:$0xff] %v2119
        %2153 = vst [vmem:[%s2121 + $0x171] sm:$0xff] %v2120
        %v2154 = vld [vmem:[#allocation2] sm:$0xff]
        %v2155 = vld [vmem:[#allocation2 + $0x8] sm:$0xff]
        %v2156 = vld [vmem:[#allocation2 + $0x18] sm:$0xff]
        %v2157 = vld [vmem:[#allocation2 + $0x20] sm:$0xff]
        %v2158 = vld [vmem:[#allocation2 + $0x30] sm:$0xff]
        %v2159 = vld [vmem:[#allocation2 + $0x38] sm:$0xff]
        %v2160 = vld [vmem:[#allocation2 + $0x48] sm:$0xff]
        %v2161 = vld [vmem:[#allocation2 + $0x50] sm:$0xff]
        %v2162 = vld [vmem:[#allocation2 + $0x60] sm:$0xff]
        %v2163 = vld [vmem:[#allocation2 + $0x68] sm:$0xff]
        %v2164 = vld [vmem:[#allocation2 + $0x78] sm:$0xff]
        %v2165 = vld [vmem:[#allocation2 + $0x80] sm:$0xff]
        %v2166 = vld [vmem:[#allocation2 + $0x90] sm:$0xff]
        %v2167 = vld [vmem:[#allocation2 + $0x98] sm:$0xff]
        %v2168 = vld [vmem:[#allocation2 + $0xa8] sm:$0xff]
        %v2169 = vld [vmem:[#allocation2 + $0xb0] sm:$0xff]
        %v2170 = vld [vmem:[#allocation2 + $0xc0] sm:$0xff]
        %v2171 = vld [vmem:[#allocation2 + $0xc8] sm:$0xff]
        %v2172 = vld [vmem:[#allocation2 + $0xd8] sm:$0xff]
        %v2173 = vld [vmem:[#allocation2 + $0xe0] sm:$0xff]
        %v2174 = vld [vmem:[#allocation2 + $0xf0] sm:$0xff]
        %v2175 = vld [vmem:[#allocation2 + $0xf8] sm:$0xff]
        %v2176 = vld [vmem:[#allocation2 + $0x108] sm:$0xff]
        %v2177 = vld [vmem:[#allocation2 + $0x110] sm:$0xff]
        %v2178 = vld [vmem:[#allocation2 + $0x120] sm:$0xff]
        %v2179 = vld [vmem:[#allocation2 + $0x128] sm:$0xff]
        %v2180 = vld [vmem:[#allocation2 + $0x138] sm:$0xff]
        %v2181 = vld [vmem:[#allocation2 + $0x140] sm:$0xff]
        %v2182 = vld [vmem:[#allocation2 + $0x150] sm:$0xff]
        %v2183 = vld [vmem:[#allocation2 + $0x158] sm:$0xff]
        %v2184 = vld [vmem:[#allocation2 + $0x168] sm:$0xff]
        %v2185 = vld [vmem:[#allocation2 + $0x170] sm:$0xff]
        %v2186 = vld [vmem:[#allocation2 + $0x180] sm:$0xff]
        %v2187 = vld [vmem:[#allocation2 + $0x188] sm:$0xff]
        %v2188 = vld [vmem:[#allocation2 + $0x198] sm:$0xff]
        %v2189 = vld [vmem:[#allocation2 + $0x1a0] sm:$0xff]
        %v2190 = vld [vmem:[#allocation3] sm:$0xff]
        %v2191 = vld [vmem:[#allocation3 + $0x8] sm:$0xff]
        %v2192 = vld [vmem:[#allocation3 + $0x10] sm:$0xff]
        %v2193 = vld [vmem:[#allocation3 + $0x18] sm:$0xff]
        %v2194 = vld [vmem:[#allocation3 + $0x20] sm:$0xff]
        %v2195 = vld [vmem:[#allocation3 + $0x28] sm:$0xff]
        %v2196 = vld [vmem:[#allocation3 + $0x30] sm:$0xff]
        %v2197 = vld [vmem:[#allocation3 + $0x38] sm:$0xff]
        %v2198 = vld [vmem:[#allocation3 + $0x40] sm:$0xff]
        %v2199 = vld [vmem:[#allocation3 + $0x48] sm:$0xff]
        %v2200 = vld [vmem:[#allocation3 + $0x50] sm:$0xff]
        %v2201 = vld [vmem:[#allocation3 + $0x58] sm:$0xff]
        %v2202 = vld [vmem:[#allocation3 + $0x60] sm:$0xff]
        %v2203 = vld [vmem:[#allocation3 + $0x68] sm:$0xff]
        %v2204 = vld [vmem:[#allocation3 + $0x70] sm:$0xff]
        %v2205 = vld [vmem:[#allocation3 + $0x78] sm:$0xff]
        %s2206 = scalar_lea.vmem [#allocation3], 384
        %v2207 = vld [vmem:[%s2206] sm:$0xff]
        %v2208 = vld [vmem:[%s2206 + $0x8] sm:$0xff]
        %v2209 = vld [vmem:[%s2206 + $0x10] sm:$0xff]
        %v2210 = vld [vmem:[%s2206 + $0x18] sm:$0xff]
        %v2211 = vld [vmem:[%s2206 + $0x20] sm:$0xff]
        %v2212 = vld [vmem:[%s2206 + $0x28] sm:$0xff]
        %v2213 = vld [vmem:[%s2206 + $0x30] sm:$0xff]
        %v2214 = vld [vmem:[%s2206 + $0x38] sm:$0xff]
        %v2215 = vld [vmem:[%s2206 + $0x40] sm:$0xff]
        %v2216 = vld [vmem:[%s2206 + $0x48] sm:$0xff]
        %v2217 = vld [vmem:[%s2206 + $0x50] sm:$0xff]
        %v2218 = vld [vmem:[%s2206 + $0x58] sm:$0xff]
        %v2219 = vld [vmem:[%s2206 + $0x60] sm:$0xff]
        %v2220 = vld [vmem:[%s2206 + $0x68] sm:$0xff]
        %v2221 = vld [vmem:[%s2206 + $0x70] sm:$0xff]
        %v2222 = vld [vmem:[%s2206 + $0x78] sm:$0xff]
        %2223 = vmatpush.msra.mxu0 %v2222
        %2224 = vmatpush.msra.mxu0 %v2221
        %2225 = vmatpush.msra.mxu0 %v2220
        %2226 = vmatpush.msra.mxu0 %v2219
        %2227 = vmatpush.msra.mxu0 %v2218
        %2228 = vmatpush.msra.mxu0 %v2217
        %2229 = vmatpush.msra.mxu0 %v2216
        %2230 = vmatpush.msra.mxu0 %v2215
        %2231 = vmatpush.msra.mxu0 %v2214
        %2232 = vmatpush.msra.mxu0 %v2213
        %2233 = vmatpush.msra.mxu0 %v2212
        %2234 = vmatpush.msra.mxu0 %v2211
        %2235 = vmatpush.msra.mxu0 %v2210
        %2236 = vmatpush.msra.mxu0 %v2209
        %2237 = vmatpush.msra.mxu0 %v2208
        %2238 = vmatpush.msra.mxu0 %v2207
        %2239 = vmatmul.f32.gmra.mxu0 %v2156
        %v2240 = vpop.f32.mrf.mxu0
        %v2241 = vadd.f32 0.0, %v2240
        %2242 = vmatmul.f32.gmra.mxu0 %v2157
        %v2243 = vpop.f32.mrf.mxu0
        %v2244 = vadd.f32 0.0, %v2243
        %2245 = vmatmul.f32.gmra.mxu0 %v2158
        %v2246 = vpop.f32.mrf.mxu0
        %v2247 = vadd.f32 0.0, %v2246
        %2248 = vmatmul.f32.gmra.mxu0 %v2159
        %v2249 = vpop.f32.mrf.mxu0
        %v2250 = vadd.f32 0.0, %v2249
        %2251 = vmatmul.f32.gmra.mxu0 %v2160
        %v2252 = vpop.f32.mrf.mxu0
        %v2253 = vadd.f32 0.0, %v2252
        %2254 = vmatmul.f32.gmra.mxu0 %v2161
        %v2255 = vpop.f32.mrf.mxu0
        %v2256 = vadd.f32 0.0, %v2255
        %2257 = vmatmul.f32.gmra.mxu0 %v2162
        %v2258 = vpop.f32.mrf.mxu0
        %v2259 = vadd.f32 0.0, %v2258
        %2260 = vmatmul.f32.gmra.mxu0 %v2163
        %v2261 = vpop.f32.mrf.mxu0
        %v2262 = vadd.f32 0.0, %v2261
        %2263 = vmatmul.f32.gmra.mxu0 %v2164
        %v2264 = vpop.f32.mrf.mxu0
        %v2265 = vadd.f32 0.0, %v2264
        %2266 = vmatmul.f32.gmra.mxu0 %v2165
        %v2267 = vpop.f32.mrf.mxu0
        %v2268 = vadd.f32 0.0, %v2267
        %2269 = vmatmul.f32.gmra.mxu0 %v2166
        %v2270 = vpop.f32.mrf.mxu0
        %v2271 = vadd.f32 0.0, %v2270
        %2272 = vmatmul.f32.gmra.mxu0 %v2167
        %v2273 = vpop.f32.mrf.mxu0
        %v2274 = vadd.f32 0.0, %v2273
        %2275 = vmatmul.f32.gmra.mxu0 %v2168
        %v2276 = vpop.f32.mrf.mxu0
        %v2277 = vadd.f32 0.0, %v2276
        %2278 = vmatmul.f32.gmra.mxu0 %v2169
        %v2279 = vpop.f32.mrf.mxu0
        %v2280 = vadd.f32 0.0, %v2279
        %2281 = vmatmul.f32.gmra.mxu0 %v2170
        %v2282 = vpop.f32.mrf.mxu0
        %v2283 = vadd.f32 0.0, %v2282
        %2284 = vmatmul.f32.gmra.mxu0 %v2171
        %v2285 = vpop.f32.mrf.mxu0
        %v2286 = vadd.f32 0.0, %v2285
        %2287 = vmatmul.f32.gmra.mxu0 %v2172
        %v2288 = vpop.f32.mrf.mxu0
        %v2289 = vadd.f32 0.0, %v2288
        %2290 = vmatmul.f32.gmra.mxu0 %v2173
        %v2291 = vpop.f32.mrf.mxu0
        %v2292 = vadd.f32 0.0, %v2291
        %2293 = vmatmul.f32.gmra.mxu0 %v2174
        %v2294 = vpop.f32.mrf.mxu0
        %v2295 = vadd.f32 0.0, %v2294
        %2296 = vmatmul.f32.gmra.mxu0 %v2175
        %v2297 = vpop.f32.mrf.mxu0
        %v2298 = vadd.f32 0.0, %v2297
        %2299 = vmatmul.f32.gmra.mxu0 %v2176
        %v2300 = vpop.f32.mrf.mxu0
        %v2301 = vadd.f32 0.0, %v2300
        %2302 = vmatmul.f32.gmra.mxu0 %v2177
        %v2303 = vpop.f32.mrf.mxu0
        %v2304 = vadd.f32 0.0, %v2303
        %2305 = vmatmul.f32.gmra.mxu0 %v2178
        %v2306 = vpop.f32.mrf.mxu0
        %v2307 = vadd.f32 0.0, %v2306
        %2308 = vmatmul.f32.gmra.mxu0 %v2179
        %v2309 = vpop.f32.mrf.mxu0
        %v2310 = vadd.f32 0.0, %v2309
        %2311 = vmatmul.f32.gmra.mxu0 %v2180
        %v2312 = vpop.f32.mrf.mxu0
        %v2313 = vadd.f32 0.0, %v2312
        %2314 = vmatmul.f32.gmra.mxu0 %v2181
        %v2315 = vpop.f32.mrf.mxu0
        %v2316 = vadd.f32 0.0, %v2315
        %2317 = vmatmul.f32.gmra.mxu0 %v2182
        %v2318 = vpop.f32.mrf.mxu0
        %v2319 = vadd.f32 0.0, %v2318
        %2320 = vmatmul.f32.gmra.mxu0 %v2183
        %v2321 = vpop.f32.mrf.mxu0
        %v2322 = vadd.f32 0.0, %v2321
        %2323 = vmatmul.f32.gmra.mxu0 %v2184
        %v2324 = vpop.f32.mrf.mxu0
        %v2325 = vadd.f32 0.0, %v2324
        %2326 = vmatmul.f32.gmra.mxu0 %v2185
        %v2327 = vpop.f32.mrf.mxu0
        %v2328 = vadd.f32 0.0, %v2327
        %2329 = vmatmul.f32.gmra.mxu0 %v2186
        %v2330 = vpop.f32.mrf.mxu0
        %v2331 = vadd.f32 0.0, %v2330
        %2332 = vmatmul.f32.gmra.mxu0 %v2187
        %v2333 = vpop.f32.mrf.mxu0
        %v2334 = vadd.f32 0.0, %v2333
        %2335 = vdwg.mxu0
        %2336 = vmatpush.msra.mxu0 %v2205
        %2337 = vmatpush.msra.mxu0 %v2204
        %2338 = vmatpush.msra.mxu0 %v2203
        %2339 = vmatpush.msra.mxu0 %v2202
        %2340 = vmatpush.msra.mxu0 %v2201
        %2341 = vmatpush.msra.mxu0 %v2200
        %2342 = vmatpush.msra.mxu0 %v2199
        %2343 = vmatpush.msra.mxu0 %v2198
        %2344 = vmatpush.msra.mxu0 %v2197
        %2345 = vmatpush.msra.mxu0 %v2196
        %2346 = vmatpush.msra.mxu0 %v2195
        %2347 = vmatpush.msra.mxu0 %v2194
        %2348 = vmatpush.msra.mxu0 %v2193
        %2349 = vmatpush.msra.mxu0 %v2192
        %2350 = vmatpush.msra.mxu0 %v2191
        %2351 = vmatpush.msra.mxu0 %v2190
        %2352 = vmatmul.f32.gmra.mxu0 %v2154
        %v2353 = vpop.f32.mrf.mxu0
        %v2354 = vadd.f32 %v2241, %v2353
        %2355 = vmatmul.f32.gmra.mxu0 %v2155
        %v2356 = vpop.f32.mrf.mxu0
        %v2357 = vadd.f32 %v2244, %v2356
        %2358 = vmatmul.f32.gmra.mxu0 %v2156
        %v2359 = vpop.f32.mrf.mxu0
        %v2360 = vadd.f32 %v2247, %v2359
        %2361 = vmatmul.f32.gmra.mxu0 %v2157
        %v2362 = vpop.f32.mrf.mxu0
        %v2363 = vadd.f32 %v2250, %v2362
        %2364 = vmatmul.f32.gmra.mxu0 %v2158
        %v2365 = vpop.f32.mrf.mxu0
        %v2366 = vadd.f32 %v2253, %v2365
        %2367 = vmatmul.f32.gmra.mxu0 %v2159
        %v2368 = vpop.f32.mrf.mxu0
        %v2369 = vadd.f32 %v2256, %v2368
        %2370 = vmatmul.f32.gmra.mxu0 %v2160
        %v2371 = vpop.f32.mrf.mxu0
        %v2372 = vadd.f32 %v2259, %v2371
        %2373 = vmatmul.f32.gmra.mxu0 %v2161
        %v2374 = vpop.f32.mrf.mxu0
        %v2375 = vadd.f32 %v2262, %v2374
        %2376 = vmatmul.f32.gmra.mxu0 %v2162
        %v2377 = vpop.f32.mrf.mxu0
        %v2378 = vadd.f32 %v2265, %v2377
        %2379 = vmatmul.f32.gmra.mxu0 %v2163
        %v2380 = vpop.f32.mrf.mxu0
        %v2381 = vadd.f32 %v2268, %v2380
        %2382 = vmatmul.f32.gmra.mxu0 %v2164
        %v2383 = vpop.f32.mrf.mxu0
        %v2384 = vadd.f32 %v2271, %v2383
        %2385 = vmatmul.f32.gmra.mxu0 %v2165
        %v2386 = vpop.f32.mrf.mxu0
        %v2387 = vadd.f32 %v2274, %v2386
        %2388 = vmatmul.f32.gmra.mxu0 %v2166
        %v2389 = vpop.f32.mrf.mxu0
        %v2390 = vadd.f32 %v2277, %v2389
        %2391 = vmatmul.f32.gmra.mxu0 %v2167
        %v2392 = vpop.f32.mrf.mxu0
        %v2393 = vadd.f32 %v2280, %v2392
        %2394 = vmatmul.f32.gmra.mxu0 %v2168
        %v2395 = vpop.f32.mrf.mxu0
        %v2396 = vadd.f32 %v2283, %v2395
        %2397 = vmatmul.f32.gmra.mxu0 %v2169
        %v2398 = vpop.f32.mrf.mxu0
        %v2399 = vadd.f32 %v2286, %v2398
        %2400 = vmatmul.f32.gmra.mxu0 %v2170
        %v2401 = vpop.f32.mrf.mxu0
        %v2402 = vadd.f32 %v2289, %v2401
        %2403 = vmatmul.f32.gmra.mxu0 %v2171
        %v2404 = vpop.f32.mrf.mxu0
        %v2405 = vadd.f32 %v2292, %v2404
        %2406 = vmatmul.f32.gmra.mxu0 %v2172
        %v2407 = vpop.f32.mrf.mxu0
        %v2408 = vadd.f32 %v2295, %v2407
        %2409 = vmatmul.f32.gmra.mxu0 %v2173
        %v2410 = vpop.f32.mrf.mxu0
        %v2411 = vadd.f32 %v2298, %v2410
        %2412 = vmatmul.f32.gmra.mxu0 %v2174
        %v2413 = vpop.f32.mrf.mxu0
        %v2414 = vadd.f32 %v2301, %v2413
        %2415 = vmatmul.f32.gmra.mxu0 %v2175
        %v2416 = vpop.f32.mrf.mxu0
        %v2417 = vadd.f32 %v2304, %v2416
        %2418 = vmatmul.f32.gmra.mxu0 %v2176
        %v2419 = vpop.f32.mrf.mxu0
        %v2420 = vadd.f32 %v2307, %v2419
        %2421 = vmatmul.f32.gmra.mxu0 %v2177
        %v2422 = vpop.f32.mrf.mxu0
        %v2423 = vadd.f32 %v2310, %v2422
        %2424 = vmatmul.f32.gmra.mxu0 %v2178
        %v2425 = vpop.f32.mrf.mxu0
        %v2426 = vadd.f32 %v2313, %v2425
        %2427 = vmatmul.f32.gmra.mxu0 %v2179
        %v2428 = vpop.f32.mrf.mxu0
        %v2429 = vadd.f32 %v2316, %v2428
        %2430 = vmatmul.f32.gmra.mxu0 %v2180
        %v2431 = vpop.f32.mrf.mxu0
        %v2432 = vadd.f32 %v2319, %v2431
        %2433 = vmatmul.f32.gmra.mxu0 %v2181
        %v2434 = vpop.f32.mrf.mxu0
        %v2435 = vadd.f32 %v2322, %v2434
        %2436 = vmatmul.f32.gmra.mxu0 %v2182
        %v2437 = vpop.f32.mrf.mxu0
        %v2438 = vadd.f32 %v2325, %v2437
        %2439 = vmatmul.f32.gmra.mxu0 %v2183
        %v2440 = vpop.f32.mrf.mxu0
        %v2441 = vadd.f32 %v2328, %v2440
        %2442 = vmatmul.f32.gmra.mxu0 %v2184
        %v2443 = vpop.f32.mrf.mxu0
        %v2444 = vadd.f32 %v2331, %v2443
        %2445 = vmatmul.f32.gmra.mxu0 %v2185
        %v2446 = vpop.f32.mrf.mxu0
        %v2447 = vadd.f32 %v2334, %v2446
        %2448 = vdwg.mxu0
        %s2449 = scalar_lea.vmem [#allocation3], 768
        %v2450 = vld [vmem:[%s2449] sm:$0xff]
        %v2451 = vld [vmem:[%s2449 + $0x8] sm:$0xff]
        %v2452 = vld [vmem:[%s2449 + $0x10] sm:$0xff]
        %v2453 = vld [vmem:[%s2449 + $0x18] sm:$0xff]
        %v2454 = vld [vmem:[%s2449 + $0x20] sm:$0xff]
        %v2455 = vld [vmem:[%s2449 + $0x28] sm:$0xff]
        %v2456 = vld [vmem:[%s2449 + $0x30] sm:$0xff]
        %v2457 = vld [vmem:[%s2449 + $0x38] sm:$0xff]
        %v2458 = vld [vmem:[%s2449 + $0x40] sm:$0xff]
        %v2459 = vld [vmem:[%s2449 + $0x48] sm:$0xff]
        %v2460 = vld [vmem:[%s2449 + $0x50] sm:$0xff]
        %v2461 = vld [vmem:[%s2449 + $0x58] sm:$0xff]
        %v2462 = vld [vmem:[%s2449 + $0x60] sm:$0xff]
        %v2463 = vld [vmem:[%s2449 + $0x68] sm:$0xff]
        %v2464 = vld [vmem:[%s2449 + $0x70] sm:$0xff]
        %v2465 = vld [vmem:[%s2449 + $0x78] sm:$0xff]
        %2466 = vmatpush.msra.mxu0 %v2465
        %2467 = vmatpush.msra.mxu0 %v2464
        %2468 = vmatpush.msra.mxu0 %v2463
        %2469 = vmatpush.msra.mxu0 %v2462
        %2470 = vmatpush.msra.mxu0 %v2461
        %2471 = vmatpush.msra.mxu0 %v2460
        %2472 = vmatpush.msra.mxu0 %v2459
        %2473 = vmatpush.msra.mxu0 %v2458
        %2474 = vmatpush.msra.mxu0 %v2457
        %2475 = vmatpush.msra.mxu0 %v2456
        %2476 = vmatpush.msra.mxu0 %v2455
        %2477 = vmatpush.msra.mxu0 %v2454
        %2478 = vmatpush.msra.mxu0 %v2453
        %2479 = vmatpush.msra.mxu0 %v2452
        %2480 = vmatpush.msra.mxu0 %v2451
        %2481 = vmatpush.msra.mxu0 %v2450
        %2482 = vmatmul.f32.gmra.mxu0 %v2158
        %v2483 = vpop.f32.mrf.mxu0
        %v2484 = vadd.f32 0.0, %v2483
        %2485 = vmatmul.f32.gmra.mxu0 %v2159
        %v2486 = vpop.f32.mrf.mxu0
        %v2487 = vadd.f32 0.0, %v2486
        %2488 = vmatmul.f32.gmra.mxu0 %v2160
        %v2489 = vpop.f32.mrf.mxu0
        %v2490 = vadd.f32 0.0, %v2489
        %2491 = vmatmul.f32.gmra.mxu0 %v2161
        %v2492 = vpop.f32.mrf.mxu0
        %v2493 = vadd.f32 0.0, %v2492
        %2494 = vmatmul.f32.gmra.mxu0 %v2162
        %v2495 = vpop.f32.mrf.mxu0
        %v2496 = vadd.f32 0.0, %v2495
        %2497 = vmatmul.f32.gmra.mxu0 %v2163
        %v2498 = vpop.f32.mrf.mxu0
        %v2499 = vadd.f32 0.0, %v2498
        %2500 = vmatmul.f32.gmra.mxu0 %v2164
        %v2501 = vpop.f32.mrf.mxu0
        %v2502 = vadd.f32 0.0, %v2501
        %2503 = vmatmul.f32.gmra.mxu0 %v2165
        %v2504 = vpop.f32.mrf.mxu0
        %v2505 = vadd.f32 0.0, %v2504
        %2506 = vmatmul.f32.gmra.mxu0 %v2166
        %v2507 = vpop.f32.mrf.mxu0
        %v2508 = vadd.f32 0.0, %v2507
        %2509 = vmatmul.f32.gmra.mxu0 %v2167
        %v2510 = vpop.f32.mrf.mxu0
        %v2511 = vadd.f32 0.0, %v2510
        %2512 = vmatmul.f32.gmra.mxu0 %v2168
        %v2513 = vpop.f32.mrf.mxu0
        %v2514 = vadd.f32 0.0, %v2513
        %2515 = vmatmul.f32.gmra.mxu0 %v2169
        %v2516 = vpop.f32.mrf.mxu0
        %v2517 = vadd.f32 0.0, %v2516
        %2518 = vmatmul.f32.gmra.mxu0 %v2170
        %v2519 = vpop.f32.mrf.mxu0
        %v2520 = vadd.f32 0.0, %v2519
        %2521 = vmatmul.f32.gmra.mxu0 %v2171
        %v2522 = vpop.f32.mrf.mxu0
        %v2523 = vadd.f32 0.0, %v2522
        %2524 = vmatmul.f32.gmra.mxu0 %v2172
        %v2525 = vpop.f32.mrf.mxu0
        %v2526 = vadd.f32 0.0, %v2525
        %2527 = vmatmul.f32.gmra.mxu0 %v2173
        %v2528 = vpop.f32.mrf.mxu0
        %v2529 = vadd.f32 0.0, %v2528
        %2530 = vmatmul.f32.gmra.mxu0 %v2174
        %v2531 = vpop.f32.mrf.mxu0
        %v2532 = vadd.f32 0.0, %v2531
        %2533 = vmatmul.f32.gmra.mxu0 %v2175
        %v2534 = vpop.f32.mrf.mxu0
        %v2535 = vadd.f32 0.0, %v2534
        %2536 = vmatmul.f32.gmra.mxu0 %v2176
        %v2537 = vpop.f32.mrf.mxu0
        %v2538 = vadd.f32 0.0, %v2537
        %2539 = vmatmul.f32.gmra.mxu0 %v2177
        %v2540 = vpop.f32.mrf.mxu0
        %v2541 = vadd.f32 0.0, %v2540
        %2542 = vmatmul.f32.gmra.mxu0 %v2178
        %v2543 = vpop.f32.mrf.mxu0
        %v2544 = vadd.f32 0.0, %v2543
        %2545 = vmatmul.f32.gmra.mxu0 %v2179
        %v2546 = vpop.f32.mrf.mxu0
        %v2547 = vadd.f32 0.0, %v2546
        %2548 = vmatmul.f32.gmra.mxu0 %v2180
        %v2549 = vpop.f32.mrf.mxu0
        %v2550 = vadd.f32 0.0, %v2549
        %2551 = vmatmul.f32.gmra.mxu0 %v2181
        %v2552 = vpop.f32.mrf.mxu0
        %v2553 = vadd.f32 0.0, %v2552
        %2554 = vmatmul.f32.gmra.mxu0 %v2182
        %v2555 = vpop.f32.mrf.mxu0
        %v2556 = vadd.f32 0.0, %v2555
        %2557 = vmatmul.f32.gmra.mxu0 %v2183
        %v2558 = vpop.f32.mrf.mxu0
        %v2559 = vadd.f32 0.0, %v2558
        %2560 = vmatmul.f32.gmra.mxu0 %v2184
        %v2561 = vpop.f32.mrf.mxu0
        %v2562 = vadd.f32 0.0, %v2561
        %2563 = vmatmul.f32.gmra.mxu0 %v2185
        %v2564 = vpop.f32.mrf.mxu0
        %v2565 = vadd.f32 0.0, %v2564
        %2566 = vmatmul.f32.gmra.mxu0 %v2186
        %v2567 = vpop.f32.mrf.mxu0
        %v2568 = vadd.f32 0.0, %v2567
        %2569 = vmatmul.f32.gmra.mxu0 %v2187
        %v2570 = vpop.f32.mrf.mxu0
        %v2571 = vadd.f32 0.0, %v2570
        %2572 = vmatmul.f32.gmra.mxu0 %v2188
        %v2573 = vpop.f32.mrf.mxu0
        %v2574 = vadd.f32 0.0, %v2573
        %2575 = vmatmul.f32.gmra.mxu0 %v2189
        %v2576 = vpop.f32.mrf.mxu0
        %v2577 = vadd.f32 0.0, %v2576
        %2578 = vdwg.mxu0
        %v2579 = vadd.f32 %v2354, %v2484
        %v2580 = vadd.f32 %v2357, %v2487
        %v2581 = vadd.f32 %v2360, %v2490
        %v2582 = vadd.f32 %v2363, %v2493
        %v2583 = vadd.f32 %v2366, %v2496
        %v2584 = vadd.f32 %v2369, %v2499
        %v2585 = vadd.f32 %v2372, %v2502
        %v2586 = vadd.f32 %v2375, %v2505
        %v2587 = vadd.f32 %v2378, %v2508
        %v2588 = vadd.f32 %v2381, %v2511
        %v2589 = vadd.f32 %v2384, %v2514
        %v2590 = vadd.f32 %v2387, %v2517
        %v2591 = vadd.f32 %v2390, %v2520
        %v2592 = vadd.f32 %v2393, %v2523
        %v2593 = vadd.f32 %v2396, %v2526
        %v2594 = vadd.f32 %v2399, %v2529
        %v2595 = vadd.f32 %v2402, %v2532
        %v2596 = vadd.f32 %v2405, %v2535
        %v2597 = vadd.f32 %v2408, %v2538
        %v2598 = vadd.f32 %v2411, %v2541
        %v2599 = vadd.f32 %v2414, %v2544
        %v2600 = vadd.f32 %v2417, %v2547
        %v2601 = vadd.f32 %v2420, %v2550
        %v2602 = vadd.f32 %v2423, %v2553
        %v2603 = vadd.f32 %v2426, %v2556
        %v2604 = vadd.f32 %v2429, %v2559
        %v2605 = vadd.f32 %v2432, %v2562
        %v2606 = vadd.f32 %v2435, %v2565
        %v2607 = vadd.f32 %v2438, %v2568
        %v2608 = vadd.f32 %v2441, %v2571
        %v2609 = vadd.f32 %v2444, %v2574
        %v2610 = vadd.f32 %v2447, %v2577
        %v2611 = vld [vmem:[#allocation2 + $0x1] sm:$0xff]
        %v2612 = vld [vmem:[#allocation2 + $0x9] sm:$0xff]
        %v2613 = vld [vmem:[#allocation2 + $0x19] sm:$0xff]
        %v2614 = vld [vmem:[#allocation2 + $0x21] sm:$0xff]
        %v2615 = vld [vmem:[#allocation2 + $0x31] sm:$0xff]
        %v2616 = vld [vmem:[#allocation2 + $0x39] sm:$0xff]
        %v2617 = vld [vmem:[#allocation2 + $0x49] sm:$0xff]
        %v2618 = vld [vmem:[#allocation2 + $0x51] sm:$0xff]
        %v2619 = vld [vmem:[#allocation2 + $0x61] sm:$0xff]
        %v2620 = vld [vmem:[#allocation2 + $0x69] sm:$0xff]
        %v2621 = vld [vmem:[#allocation2 + $0x79] sm:$0xff]
        %v2622 = vld [vmem:[#allocation2 + $0x81] sm:$0xff]
        %v2623 = vld [vmem:[#allocation2 + $0x91] sm:$0xff]
        %v2624 = vld [vmem:[#allocation2 + $0x99] sm:$0xff]
        %v2625 = vld [vmem:[#allocation2 + $0xa9] sm:$0xff]
        %v2626 = vld [vmem:[#allocation2 + $0xb1] sm:$0xff]
        %v2627 = vld [vmem:[#allocation2 + $0xc1] sm:$0xff]
        %v2628 = vld [vmem:[#allocation2 + $0xc9] sm:$0xff]
        %v2629 = vld [vmem:[#allocation2 + $0xd9] sm:$0xff]
        %v2630 = vld [vmem:[#allocation2 + $0xe1] sm:$0xff]
        %v2631 = vld [vmem:[#allocation2 + $0xf1] sm:$0xff]
        %v2632 = vld [vmem:[#allocation2 + $0xf9] sm:$0xff]
        %v2633 = vld [vmem:[#allocation2 + $0x109] sm:$0xff]
        %v2634 = vld [vmem:[#allocation2 + $0x111] sm:$0xff]
        %v2635 = vld [vmem:[#allocation2 + $0x121] sm:$0xff]
        %v2636 = vld [vmem:[#allocation2 + $0x129] sm:$0xff]
        %v2637 = vld [vmem:[#allocation2 + $0x139] sm:$0xff]
        %v2638 = vld [vmem:[#allocation2 + $0x141] sm:$0xff]
        %v2639 = vld [vmem:[#allocation2 + $0x151] sm:$0xff]
        %v2640 = vld [vmem:[#allocation2 + $0x159] sm:$0xff]
        %v2641 = vld [vmem:[#allocation2 + $0x169] sm:$0xff]
        %v2642 = vld [vmem:[#allocation2 + $0x171] sm:$0xff]
        %v2643 = vld [vmem:[#allocation2 + $0x181] sm:$0xff]
        %v2644 = vld [vmem:[#allocation2 + $0x189] sm:$0xff]
        %v2645 = vld [vmem:[#allocation2 + $0x199] sm:$0xff]
        %v2646 = vld [vmem:[#allocation2 + $0x1a1] sm:$0xff]
        %s2647 = scalar_lea.vmem [#allocation3], 128
        %v2648 = vld [vmem:[%s2647] sm:$0xff]
        %v2649 = vld [vmem:[%s2647 + $0x8] sm:$0xff]
        %v2650 = vld [vmem:[%s2647 + $0x10] sm:$0xff]
        %v2651 = vld [vmem:[%s2647 + $0x18] sm:$0xff]
        %v2652 = vld [vmem:[%s2647 + $0x20] sm:$0xff]
        %v2653 = vld [vmem:[%s2647 + $0x28] sm:$0xff]
        %v2654 = vld [vmem:[%s2647 + $0x30] sm:$0xff]
        %v2655 = vld [vmem:[%s2647 + $0x38] sm:$0xff]
        %v2656 = vld [vmem:[%s2647 + $0x40] sm:$0xff]
        %v2657 = vld [vmem:[%s2647 + $0x48] sm:$0xff]
        %v2658 = vld [vmem:[%s2647 + $0x50] sm:$0xff]
        %v2659 = vld [vmem:[%s2647 + $0x58] sm:$0xff]
        %v2660 = vld [vmem:[%s2647 + $0x60] sm:$0xff]
        %v2661 = vld [vmem:[%s2647 + $0x68] sm:$0xff]
        %v2662 = vld [vmem:[%s2647 + $0x70] sm:$0xff]
        %v2663 = vld [vmem:[%s2647 + $0x78] sm:$0xff]
        %2664 = vmatpush.msra.mxu0 %v2663
        %2665 = vmatpush.msra.mxu0 %v2662
        %2666 = vmatpush.msra.mxu0 %v2661
        %2667 = vmatpush.msra.mxu0 %v2660
        %2668 = vmatpush.msra.mxu0 %v2659
        %2669 = vmatpush.msra.mxu0 %v2658
        %2670 = vmatpush.msra.mxu0 %v2657
        %2671 = vmatpush.msra.mxu0 %v2656
        %2672 = vmatpush.msra.mxu0 %v2655
        %2673 = vmatpush.msra.mxu0 %v2654
        %2674 = vmatpush.msra.mxu0 %v2653
        %2675 = vmatpush.msra.mxu0 %v2652
        %2676 = vmatpush.msra.mxu0 %v2651
        %2677 = vmatpush.msra.mxu0 %v2650
        %2678 = vmatpush.msra.mxu0 %v2649
        %2679 = vmatpush.msra.mxu0 %v2648
        %2680 = vmatmul.f32.gmra.mxu0 %v2611
        %v2681 = vpop.f32.mrf.mxu0
        %v2682 = vadd.f32 0.0, %v2681
        %2683 = vmatmul.f32.gmra.mxu0 %v2612
        %v2684 = vpop.f32.mrf.mxu0
        %v2685 = vadd.f32 0.0, %v2684
        %2686 = vmatmul.f32.gmra.mxu0 %v2613
        %v2687 = vpop.f32.mrf.mxu0
        %v2688 = vadd.f32 0.0, %v2687
        %2689 = vmatmul.f32.gmra.mxu0 %v2614
        %v2690 = vpop.f32.mrf.mxu0
        %v2691 = vadd.f32 0.0, %v2690
        %2692 = vmatmul.f32.gmra.mxu0 %v2615
        %v2693 = vpop.f32.mrf.mxu0
        %v2694 = vadd.f32 0.0, %v2693
        %2695 = vmatmul.f32.gmra.mxu0 %v2616
        %v2696 = vpop.f32.mrf.mxu0
        %v2697 = vadd.f32 0.0, %v2696
        %2698 = vmatmul.f32.gmra.mxu0 %v2617
        %v2699 = vpop.f32.mrf.mxu0
        %v2700 = vadd.f32 0.0, %v2699
        %2701 = vmatmul.f32.gmra.mxu0 %v2618
        %v2702 = vpop.f32.mrf.mxu0
        %v2703 = vadd.f32 0.0, %v2702
        %2704 = vmatmul.f32.gmra.mxu0 %v2619
        %v2705 = vpop.f32.mrf.mxu0
        %v2706 = vadd.f32 0.0, %v2705
        %2707 = vmatmul.f32.gmra.mxu0 %v2620
        %v2708 = vpop.f32.mrf.mxu0
        %v2709 = vadd.f32 0.0, %v2708
        %2710 = vmatmul.f32.gmra.mxu0 %v2621
        %v2711 = vpop.f32.mrf.mxu0
        %v2712 = vadd.f32 0.0, %v2711
        %2713 = vmatmul.f32.gmra.mxu0 %v2622
        %v2714 = vpop.f32.mrf.mxu0
        %v2715 = vadd.f32 0.0, %v2714
        %2716 = vmatmul.f32.gmra.mxu0 %v2623
        %v2717 = vpop.f32.mrf.mxu0
        %v2718 = vadd.f32 0.0, %v2717
        %2719 = vmatmul.f32.gmra.mxu0 %v2624
        %v2720 = vpop.f32.mrf.mxu0
        %v2721 = vadd.f32 0.0, %v2720
        %2722 = vmatmul.f32.gmra.mxu0 %v2625
        %v2723 = vpop.f32.mrf.mxu0
        %v2724 = vadd.f32 0.0, %v2723
        %2725 = vmatmul.f32.gmra.mxu0 %v2626
        %v2726 = vpop.f32.mrf.mxu0
        %v2727 = vadd.f32 0.0, %v2726
        %2728 = vmatmul.f32.gmra.mxu0 %v2627
        %v2729 = vpop.f32.mrf.mxu0
        %v2730 = vadd.f32 0.0, %v2729
        %2731 = vmatmul.f32.gmra.mxu0 %v2628
        %v2732 = vpop.f32.mrf.mxu0
        %v2733 = vadd.f32 0.0, %v2732
        %2734 = vmatmul.f32.gmra.mxu0 %v2629
        %v2735 = vpop.f32.mrf.mxu0
        %v2736 = vadd.f32 0.0, %v2735
        %2737 = vmatmul.f32.gmra.mxu0 %v2630
        %v2738 = vpop.f32.mrf.mxu0
        %v2739 = vadd.f32 0.0, %v2738
        %2740 = vmatmul.f32.gmra.mxu0 %v2631
        %v2741 = vpop.f32.mrf.mxu0
        %v2742 = vadd.f32 0.0, %v2741
        %2743 = vmatmul.f32.gmra.mxu0 %v2632
        %v2744 = vpop.f32.mrf.mxu0
        %v2745 = vadd.f32 0.0, %v2744
        %2746 = vmatmul.f32.gmra.mxu0 %v2633
        %v2747 = vpop.f32.mrf.mxu0
        %v2748 = vadd.f32 0.0, %v2747
        %2749 = vmatmul.f32.gmra.mxu0 %v2634
        %v2750 = vpop.f32.mrf.mxu0
        %v2751 = vadd.f32 0.0, %v2750
        %2752 = vmatmul.f32.gmra.mxu0 %v2635
        %v2753 = vpop.f32.mrf.mxu0
        %v2754 = vadd.f32 0.0, %v2753
        %2755 = vmatmul.f32.gmra.mxu0 %v2636
        %v2756 = vpop.f32.mrf.mxu0
        %v2757 = vadd.f32 0.0, %v2756
        %2758 = vmatmul.f32.gmra.mxu0 %v2637
        %v2759 = vpop.f32.mrf.mxu0
        %v2760 = vadd.f32 0.0, %v2759
        %2761 = vmatmul.f32.gmra.mxu0 %v2638
        %v2762 = vpop.f32.mrf.mxu0
        %v2763 = vadd.f32 0.0, %v2762
        %2764 = vmatmul.f32.gmra.mxu0 %v2639
        %v2765 = vpop.f32.mrf.mxu0
        %v2766 = vadd.f32 0.0, %v2765
        %2767 = vmatmul.f32.gmra.mxu0 %v2640
        %v2768 = vpop.f32.mrf.mxu0
        %v2769 = vadd.f32 0.0, %v2768
        %2770 = vmatmul.f32.gmra.mxu0 %v2641
        %v2771 = vpop.f32.mrf.mxu0
        %v2772 = vadd.f32 0.0, %v2771
        %2773 = vmatmul.f32.gmra.mxu0 %v2642
        %v2774 = vpop.f32.mrf.mxu0
        %v2775 = vadd.f32 0.0, %v2774
        %2776 = vdwg.mxu0
        %v2777 = vadd.f32 %v2579, %v2682
        %v2778 = vadd.f32 %v2580, %v2685
        %v2779 = vadd.f32 %v2581, %v2688
        %v2780 = vadd.f32 %v2582, %v2691
        %v2781 = vadd.f32 %v2583, %v2694
        %v2782 = vadd.f32 %v2584, %v2697
        %v2783 = vadd.f32 %v2585, %v2700
        %v2784 = vadd.f32 %v2586, %v2703
        %v2785 = vadd.f32 %v2587, %v2706
        %v2786 = vadd.f32 %v2588, %v2709
        %v2787 = vadd.f32 %v2589, %v2712
        %v2788 = vadd.f32 %v2590, %v2715
        %v2789 = vadd.f32 %v2591, %v2718
        %v2790 = vadd.f32 %v2592, %v2721
        %v2791 = vadd.f32 %v2593, %v2724
        %v2792 = vadd.f32 %v2594, %v2727
        %v2793 = vadd.f32 %v2595, %v2730
        %v2794 = vadd.f32 %v2596, %v2733
        %v2795 = vadd.f32 %v2597, %v2736
        %v2796 = vadd.f32 %v2598, %v2739
        %v2797 = vadd.f32 %v2599, %v2742
        %v2798 = vadd.f32 %v2600, %v2745
        %v2799 = vadd.f32 %v2601, %v2748
        %v2800 = vadd.f32 %v2602, %v2751
        %v2801 = vadd.f32 %v2603, %v2754
        %v2802 = vadd.f32 %v2604, %v2757
        %v2803 = vadd.f32 %v2605, %v2760
        %v2804 = vadd.f32 %v2606, %v2763
        %v2805 = vadd.f32 %v2607, %v2766
        %v2806 = vadd.f32 %v2608, %v2769
        %v2807 = vadd.f32 %v2609, %v2772
        %v2808 = vadd.f32 %v2610, %v2775
        %s2809 = scalar_lea.vmem [#allocation3], 512
        %v2810 = vld [vmem:[%s2809] sm:$0xff]
        %v2811 = vld [vmem:[%s2809 + $0x8] sm:$0xff]
        %v2812 = vld [vmem:[%s2809 + $0x10] sm:$0xff]
        %v2813 = vld [vmem:[%s2809 + $0x18] sm:$0xff]
        %v2814 = vld [vmem:[%s2809 + $0x20] sm:$0xff]
        %v2815 = vld [vmem:[%s2809 + $0x28] sm:$0xff]
        %v2816 = vld [vmem:[%s2809 + $0x30] sm:$0xff]
        %v2817 = vld [vmem:[%s2809 + $0x38] sm:$0xff]
        %v2818 = vld [vmem:[%s2809 + $0x40] sm:$0xff]
        %v2819 = vld [vmem:[%s2809 + $0x48] sm:$0xff]
        %v2820 = vld [vmem:[%s2809 + $0x50] sm:$0xff]
        %v2821 = vld [vmem:[%s2809 + $0x58] sm:$0xff]
        %v2822 = vld [vmem:[%s2809 + $0x60] sm:$0xff]
        %v2823 = vld [vmem:[%s2809 + $0x68] sm:$0xff]
        %v2824 = vld [vmem:[%s2809 + $0x70] sm:$0xff]
        %v2825 = vld [vmem:[%s2809 + $0x78] sm:$0xff]
        %2826 = vmatpush.msra.mxu0 %v2825
        %2827 = vmatpush.msra.mxu0 %v2824
        %2828 = vmatpush.msra.mxu0 %v2823
        %2829 = vmatpush.msra.mxu0 %v2822
        %2830 = vmatpush.msra.mxu0 %v2821
        %2831 = vmatpush.msra.mxu0 %v2820
        %2832 = vmatpush.msra.mxu0 %v2819
        %2833 = vmatpush.msra.mxu0 %v2818
        %2834 = vmatpush.msra.mxu0 %v2817
        %2835 = vmatpush.msra.mxu0 %v2816
        %2836 = vmatpush.msra.mxu0 %v2815
        %2837 = vmatpush.msra.mxu0 %v2814
        %2838 = vmatpush.msra.mxu0 %v2813
        %2839 = vmatpush.msra.mxu0 %v2812
        %2840 = vmatpush.msra.mxu0 %v2811
        %2841 = vmatpush.msra.mxu0 %v2810
        %2842 = vmatmul.f32.gmra.mxu0 %v2613
        %v2843 = vpop.f32.mrf.mxu0
        %v2844 = vadd.f32 0.0, %v2843
        %2845 = vmatmul.f32.gmra.mxu0 %v2614
        %v2846 = vpop.f32.mrf.mxu0
        %v2847 = vadd.f32 0.0, %v2846
        %2848 = vmatmul.f32.gmra.mxu0 %v2615
        %v2849 = vpop.f32.mrf.mxu0
        %v2850 = vadd.f32 0.0, %v2849
        %2851 = vmatmul.f32.gmra.mxu0 %v2616
        %v2852 = vpop.f32.mrf.mxu0
        %v2853 = vadd.f32 0.0, %v2852
        %2854 = vmatmul.f32.gmra.mxu0 %v2617
        %v2855 = vpop.f32.mrf.mxu0
        %v2856 = vadd.f32 0.0, %v2855
        %2857 = vmatmul.f32.gmra.mxu0 %v2618
        %v2858 = vpop.f32.mrf.mxu0
        %v2859 = vadd.f32 0.0, %v2858
        %2860 = vmatmul.f32.gmra.mxu0 %v2619
        %v2861 = vpop.f32.mrf.mxu0
        %v2862 = vadd.f32 0.0, %v2861
        %2863 = vmatmul.f32.gmra.mxu0 %v2620
        %v2864 = vpop.f32.mrf.mxu0
        %v2865 = vadd.f32 0.0, %v2864
        %2866 = vmatmul.f32.gmra.mxu0 %v2621
        %v2867 = vpop.f32.mrf.mxu0
        %v2868 = vadd.f32 0.0, %v2867
        %2869 = vmatmul.f32.gmra.mxu0 %v2622
        %v2870 = vpop.f32.mrf.mxu0
        %v2871 = vadd.f32 0.0, %v2870
        %2872 = vmatmul.f32.gmra.mxu0 %v2623
        %v2873 = vpop.f32.mrf.mxu0
        %v2874 = vadd.f32 0.0, %v2873
        %2875 = vmatmul.f32.gmra.mxu0 %v2624
        %v2876 = vpop.f32.mrf.mxu0
        %v2877 = vadd.f32 0.0, %v2876
        %2878 = vmatmul.f32.gmra.mxu0 %v2625
        %v2879 = vpop.f32.mrf.mxu0
        %v2880 = vadd.f32 0.0, %v2879
        %2881 = vmatmul.f32.gmra.mxu0 %v2626
        %v2882 = vpop.f32.mrf.mxu0
        %v2883 = vadd.f32 0.0, %v2882
        %2884 = vmatmul.f32.gmra.mxu0 %v2627
        %v2885 = vpop.f32.mrf.mxu0
        %v2886 = vadd.f32 0.0, %v2885
        %2887 = vmatmul.f32.gmra.mxu0 %v2628
        %v2888 = vpop.f32.mrf.mxu0
        %v2889 = vadd.f32 0.0, %v2888
        %2890 = vmatmul.f32.gmra.mxu0 %v2629
        %v2891 = vpop.f32.mrf.mxu0
        %v2892 = vadd.f32 0.0, %v2891
        %2893 = vmatmul.f32.gmra.mxu0 %v2630
        %v2894 = vpop.f32.mrf.mxu0
        %v2895 = vadd.f32 0.0, %v2894
        %2896 = vmatmul.f32.gmra.mxu0 %v2631
        %v2897 = vpop.f32.mrf.mxu0
        %v2898 = vadd.f32 0.0, %v2897
        %2899 = vmatmul.f32.gmra.mxu0 %v2632
        %v2900 = vpop.f32.mrf.mxu0
        %v2901 = vadd.f32 0.0, %v2900
        %2902 = vmatmul.f32.gmra.mxu0 %v2633
        %v2903 = vpop.f32.mrf.mxu0
        %v2904 = vadd.f32 0.0, %v2903
        %2905 = vmatmul.f32.gmra.mxu0 %v2634
        %v2906 = vpop.f32.mrf.mxu0
        %v2907 = vadd.f32 0.0, %v2906
        %2908 = vmatmul.f32.gmra.mxu0 %v2635
        %v2909 = vpop.f32.mrf.mxu0
        %v2910 = vadd.f32 0.0, %v2909
        %2911 = vmatmul.f32.gmra.mxu0 %v2636
        %v2912 = vpop.f32.mrf.mxu0
        %v2913 = vadd.f32 0.0, %v2912
        %2914 = vmatmul.f32.gmra.mxu0 %v2637
        %v2915 = vpop.f32.mrf.mxu0
        %v2916 = vadd.f32 0.0, %v2915
        %2917 = vmatmul.f32.gmra.mxu0 %v2638
        %v2918 = vpop.f32.mrf.mxu0
        %v2919 = vadd.f32 0.0, %v2918
        %2920 = vmatmul.f32.gmra.mxu0 %v2639
        %v2921 = vpop.f32.mrf.mxu0
        %v2922 = vadd.f32 0.0, %v2921
        %2923 = vmatmul.f32.gmra.mxu0 %v2640
        %v2924 = vpop.f32.mrf.mxu0
        %v2925 = vadd.f32 0.0, %v2924
        %2926 = vmatmul.f32.gmra.mxu0 %v2641
        %v2927 = vpop.f32.mrf.mxu0
        %v2928 = vadd.f32 0.0, %v2927
        %2929 = vmatmul.f32.gmra.mxu0 %v2642
        %v2930 = vpop.f32.mrf.mxu0
        %v2931 = vadd.f32 0.0, %v2930
        %2932 = vmatmul.f32.gmra.mxu0 %v2643
        %v2933 = vpop.f32.mrf.mxu0
        %v2934 = vadd.f32 0.0, %v2933
        %2935 = vmatmul.f32.gmra.mxu0 %v2644
        %v2936 = vpop.f32.mrf.mxu0
        %v2937 = vadd.f32 0.0, %v2936
        %2938 = vdwg.mxu0
        %v2939 = vadd.f32 %v2777, %v2844
        %v2940 = vadd.f32 %v2778, %v2847
        %v2941 = vadd.f32 %v2779, %v2850
        %v2942 = vadd.f32 %v2780, %v2853
        %v2943 = vadd.f32 %v2781, %v2856
        %v2944 = vadd.f32 %v2782, %v2859
        %v2945 = vadd.f32 %v2783, %v2862
        %v2946 = vadd.f32 %v2784, %v2865
        %v2947 = vadd.f32 %v2785, %v2868
        %v2948 = vadd.f32 %v2786, %v2871
        %v2949 = vadd.f32 %v2787, %v2874
        %v2950 = vadd.f32 %v2788, %v2877
        %v2951 = vadd.f32 %v2789, %v2880
        %v2952 = vadd.f32 %v2790, %v2883
        %v2953 = vadd.f32 %v2791, %v2886
        %v2954 = vadd.f32 %v2792, %v2889
        %v2955 = vadd.f32 %v2793, %v2892
        %v2956 = vadd.f32 %v2794, %v2895
        %v2957 = vadd.f32 %v2795, %v2898
        %v2958 = vadd.f32 %v2796, %v2901
        %v2959 = vadd.f32 %v2797, %v2904
        %v2960 = vadd.f32 %v2798, %v2907
        %v2961 = vadd.f32 %v2799, %v2910
        %v2962 = vadd.f32 %v2800, %v2913
        %v2963 = vadd.f32 %v2801, %v2916
        %v2964 = vadd.f32 %v2802, %v2919
        %v2965 = vadd.f32 %v2803, %v2922
        %v2966 = vadd.f32 %v2804, %v2925
        %v2967 = vadd.f32 %v2805, %v2928
        %v2968 = vadd.f32 %v2806, %v2931
        %v2969 = vadd.f32 %v2807, %v2934
        %v2970 = vadd.f32 %v2808, %v2937
        %s2971 = scalar_lea.vmem [#allocation3], 896
        %v2972 = vld [vmem:[%s2971] sm:$0xff]
        %v2973 = vld [vmem:[%s2971 + $0x8] sm:$0xff]
        %v2974 = vld [vmem:[%s2971 + $0x10] sm:$0xff]
        %v2975 = vld [vmem:[%s2971 + $0x18] sm:$0xff]
        %v2976 = vld [vmem:[%s2971 + $0x20] sm:$0xff]
        %v2977 = vld [vmem:[%s2971 + $0x28] sm:$0xff]
        %v2978 = vld [vmem:[%s2971 + $0x30] sm:$0xff]
        %v2979 = vld [vmem:[%s2971 + $0x38] sm:$0xff]
        %v2980 = vld [vmem:[%s2971 + $0x40] sm:$0xff]
        %v2981 = vld [vmem:[%s2971 + $0x48] sm:$0xff]
        %v2982 = vld [vmem:[%s2971 + $0x50] sm:$0xff]
        %v2983 = vld [vmem:[%s2971 + $0x58] sm:$0xff]
        %v2984 = vld [vmem:[%s2971 + $0x60] sm:$0xff]
        %v2985 = vld [vmem:[%s2971 + $0x68] sm:$0xff]
        %v2986 = vld [vmem:[%s2971 + $0x70] sm:$0xff]
        %v2987 = vld [vmem:[%s2971 + $0x78] sm:$0xff]
        %2988 = vmatpush.msra.mxu0 %v2987
        %2989 = vmatpush.msra.mxu0 %v2986
        %2990 = vmatpush.msra.mxu0 %v2985
        %2991 = vmatpush.msra.mxu0 %v2984
        %2992 = vmatpush.msra.mxu0 %v2983
        %2993 = vmatpush.msra.mxu0 %v2982
        %2994 = vmatpush.msra.mxu0 %v2981
        %2995 = vmatpush.msra.mxu0 %v2980
        %2996 = vmatpush.msra.mxu0 %v2979
        %2997 = vmatpush.msra.mxu0 %v2978
        %2998 = vmatpush.msra.mxu0 %v2977
        %2999 = vmatpush.msra.mxu0 %v2976
        %3000 = vmatpush.msra.mxu0 %v2975
        %3001 = vmatpush.msra.mxu0 %v2974
        %3002 = vmatpush.msra.mxu0 %v2973
        %3003 = vmatpush.msra.mxu0 %v2972
        %3004 = vmatmul.f32.gmra.mxu0 %v2615
        %v3005 = vpop.f32.mrf.mxu0
        %v3006 = vadd.f32 0.0, %v3005
        %3007 = vmatmul.f32.gmra.mxu0 %v2616
        %v3008 = vpop.f32.mrf.mxu0
        %v3009 = vadd.f32 0.0, %v3008
        %3010 = vmatmul.f32.gmra.mxu0 %v2617
        %v3011 = vpop.f32.mrf.mxu0
        %v3012 = vadd.f32 0.0, %v3011
        %3013 = vmatmul.f32.gmra.mxu0 %v2618
        %v3014 = vpop.f32.mrf.mxu0
        %v3015 = vadd.f32 0.0, %v3014
        %3016 = vmatmul.f32.gmra.mxu0 %v2619
        %v3017 = vpop.f32.mrf.mxu0
        %v3018 = vadd.f32 0.0, %v3017
        %3019 = vmatmul.f32.gmra.mxu0 %v2620
        %v3020 = vpop.f32.mrf.mxu0
        %v3021 = vadd.f32 0.0, %v3020
        %3022 = vmatmul.f32.gmra.mxu0 %v2621
        %v3023 = vpop.f32.mrf.mxu0
        %v3024 = vadd.f32 0.0, %v3023
        %3025 = vmatmul.f32.gmra.mxu0 %v2622
        %v3026 = vpop.f32.mrf.mxu0
        %v3027 = vadd.f32 0.0, %v3026
        %3028 = vmatmul.f32.gmra.mxu0 %v2623
        %v3029 = vpop.f32.mrf.mxu0
        %v3030 = vadd.f32 0.0, %v3029
        %3031 = vmatmul.f32.gmra.mxu0 %v2624
        %v3032 = vpop.f32.mrf.mxu0
        %v3033 = vadd.f32 0.0, %v3032
        %3034 = vmatmul.f32.gmra.mxu0 %v2625
        %v3035 = vpop.f32.mrf.mxu0
        %v3036 = vadd.f32 0.0, %v3035
        %3037 = vmatmul.f32.gmra.mxu0 %v2626
        %v3038 = vpop.f32.mrf.mxu0
        %v3039 = vadd.f32 0.0, %v3038
        %3040 = vmatmul.f32.gmra.mxu0 %v2627
        %v3041 = vpop.f32.mrf.mxu0
        %v3042 = vadd.f32 0.0, %v3041
        %3043 = vmatmul.f32.gmra.mxu0 %v2628
        %v3044 = vpop.f32.mrf.mxu0
        %v3045 = vadd.f32 0.0, %v3044
        %3046 = vmatmul.f32.gmra.mxu0 %v2629
        %v3047 = vpop.f32.mrf.mxu0
        %v3048 = vadd.f32 0.0, %v3047
        %3049 = vmatmul.f32.gmra.mxu0 %v2630
        %v3050 = vpop.f32.mrf.mxu0
        %v3051 = vadd.f32 0.0, %v3050
        %3052 = vmatmul.f32.gmra.mxu0 %v2631
        %v3053 = vpop.f32.mrf.mxu0
        %v3054 = vadd.f32 0.0, %v3053
        %3055 = vmatmul.f32.gmra.mxu0 %v2632
        %v3056 = vpop.f32.mrf.mxu0
        %v3057 = vadd.f32 0.0, %v3056
        %3058 = vmatmul.f32.gmra.mxu0 %v2633
        %v3059 = vpop.f32.mrf.mxu0
        %v3060 = vadd.f32 0.0, %v3059
        %3061 = vmatmul.f32.gmra.mxu0 %v2634
        %v3062 = vpop.f32.mrf.mxu0
        %v3063 = vadd.f32 0.0, %v3062
        %3064 = vmatmul.f32.gmra.mxu0 %v2635
        %v3065 = vpop.f32.mrf.mxu0
        %v3066 = vadd.f32 0.0, %v3065
        %3067 = vmatmul.f32.gmra.mxu0 %v2636
        %v3068 = vpop.f32.mrf.mxu0
        %v3069 = vadd.f32 0.0, %v3068
        %3070 = vmatmul.f32.gmra.mxu0 %v2637
        %v3071 = vpop.f32.mrf.mxu0
        %v3072 = vadd.f32 0.0, %v3071
        %3073 = vmatmul.f32.gmra.mxu0 %v2638
        %v3074 = vpop.f32.mrf.mxu0
        %v3075 = vadd.f32 0.0, %v3074
        %3076 = vmatmul.f32.gmra.mxu0 %v2639
        %v3077 = vpop.f32.mrf.mxu0
        %v3078 = vadd.f32 0.0, %v3077
        %3079 = vmatmul.f32.gmra.mxu0 %v2640
        %v3080 = vpop.f32.mrf.mxu0
        %v3081 = vadd.f32 0.0, %v3080
        %3082 = vmatmul.f32.gmra.mxu0 %v2641
        %v3083 = vpop.f32.mrf.mxu0
        %v3084 = vadd.f32 0.0, %v3083
        %3085 = vmatmul.f32.gmra.mxu0 %v2642
        %v3086 = vpop.f32.mrf.mxu0
        %v3087 = vadd.f32 0.0, %v3086
        %3088 = vmatmul.f32.gmra.mxu0 %v2643
        %v3089 = vpop.f32.mrf.mxu0
        %v3090 = vadd.f32 0.0, %v3089
        %3091 = vmatmul.f32.gmra.mxu0 %v2644
        %v3092 = vpop.f32.mrf.mxu0
        %v3093 = vadd.f32 0.0, %v3092
        %3094 = vmatmul.f32.gmra.mxu0 %v2645
        %v3095 = vpop.f32.mrf.mxu0
        %v3096 = vadd.f32 0.0, %v3095
        %3097 = vmatmul.f32.gmra.mxu0 %v2646
        %v3098 = vpop.f32.mrf.mxu0
        %v3099 = vadd.f32 0.0, %v3098
        %3100 = vdwg.mxu0
        %v3101 = vadd.f32 %v2939, %v3006
        %v3102 = vadd.f32 %v2940, %v3009
        %v3103 = vadd.f32 %v2941, %v3012
        %v3104 = vadd.f32 %v2942, %v3015
        %v3105 = vadd.f32 %v2943, %v3018
        %v3106 = vadd.f32 %v2944, %v3021
        %v3107 = vadd.f32 %v2945, %v3024
        %v3108 = vadd.f32 %v2946, %v3027
        %v3109 = vadd.f32 %v2947, %v3030
        %v3110 = vadd.f32 %v2948, %v3033
        %v3111 = vadd.f32 %v2949, %v3036
        %v3112 = vadd.f32 %v2950, %v3039
        %v3113 = vadd.f32 %v2951, %v3042
        %v3114 = vadd.f32 %v2952, %v3045
        %v3115 = vadd.f32 %v2953, %v3048
        %v3116 = vadd.f32 %v2954, %v3051
        %v3117 = vadd.f32 %v2955, %v3054
        %v3118 = vadd.f32 %v2956, %v3057
        %v3119 = vadd.f32 %v2957, %v3060
        %v3120 = vadd.f32 %v2958, %v3063
        %v3121 = vadd.f32 %v2959, %v3066
        %v3122 = vadd.f32 %v2960, %v3069
        %v3123 = vadd.f32 %v2961, %v3072
        %v3124 = vadd.f32 %v2962, %v3075
        %v3125 = vadd.f32 %v2963, %v3078
        %v3126 = vadd.f32 %v2964, %v3081
        %v3127 = vadd.f32 %v2965, %v3084
        %v3128 = vadd.f32 %v2966, %v3087
        %v3129 = vadd.f32 %v2967, %v3090
        %v3130 = vadd.f32 %v2968, %v3093
        %v3131 = vadd.f32 %v2969, %v3096
        %v3132 = vadd.f32 %v2970, %v3099
        %v3133 = vld [vmem:[#allocation2 + $0x2] sm:$0xff]
        %v3134 = vld [vmem:[#allocation2 + $0xa] sm:$0xff]
        %v3135 = vld [vmem:[#allocation2 + $0x1a] sm:$0xff]
        %v3136 = vld [vmem:[#allocation2 + $0x22] sm:$0xff]
        %v3137 = vld [vmem:[#allocation2 + $0x32] sm:$0xff]
        %v3138 = vld [vmem:[#allocation2 + $0x3a] sm:$0xff]
        %v3139 = vld [vmem:[#allocation2 + $0x4a] sm:$0xff]
        %v3140 = vld [vmem:[#allocation2 + $0x52] sm:$0xff]
        %v3141 = vld [vmem:[#allocation2 + $0x62] sm:$0xff]
        %v3142 = vld [vmem:[#allocation2 + $0x6a] sm:$0xff]
        %v3143 = vld [vmem:[#allocation2 + $0x7a] sm:$0xff]
        %v3144 = vld [vmem:[#allocation2 + $0x82] sm:$0xff]
        %v3145 = vld [vmem:[#allocation2 + $0x92] sm:$0xff]
        %v3146 = vld [vmem:[#allocation2 + $0x9a] sm:$0xff]
        %v3147 = vld [vmem:[#allocation2 + $0xaa] sm:$0xff]
        %v3148 = vld [vmem:[#allocation2 + $0xb2] sm:$0xff]
        %v3149 = vld [vmem:[#allocation2 + $0xc2] sm:$0xff]
        %v3150 = vld [vmem:[#allocation2 + $0xca] sm:$0xff]
        %v3151 = vld [vmem:[#allocation2 + $0xda] sm:$0xff]
        %v3152 = vld [vmem:[#allocation2 + $0xe2] sm:$0xff]
        %v3153 = vld [vmem:[#allocation2 + $0xf2] sm:$0xff]
        %v3154 = vld [vmem:[#allocation2 + $0xfa] sm:$0xff]
        %v3155 = vld [vmem:[#allocation2 + $0x10a] sm:$0xff]
        %v3156 = vld [vmem:[#allocation2 + $0x112] sm:$0xff]
        %v3157 = vld [vmem:[#allocation2 + $0x122] sm:$0xff]
        %v3158 = vld [vmem:[#allocation2 + $0x12a] sm:$0xff]
        %v3159 = vld [vmem:[#allocation2 + $0x13a] sm:$0xff]
        %v3160 = vld [vmem:[#allocation2 + $0x142] sm:$0xff]
        %v3161 = vld [vmem:[#allocation2 + $0x152] sm:$0xff]
        %v3162 = vld [vmem:[#allocation2 + $0x15a] sm:$0xff]
        %v3163 = vld [vmem:[#allocation2 + $0x16a] sm:$0xff]
        %v3164 = vld [vmem:[#allocation2 + $0x172] sm:$0xff]
        %v3165 = vld [vmem:[#allocation2 + $0x182] sm:$0xff]
        %v3166 = vld [vmem:[#allocation2 + $0x18a] sm:$0xff]
        %v3167 = vld [vmem:[#allocation2 + $0x19a] sm:$0xff]
        %v3168 = vld [vmem:[#allocation2 + $0x1a2] sm:$0xff]
        %s3169 = scalar_lea.vmem [#allocation3], 256
        %v3170 = vld [vmem:[%s3169] sm:$0xff]
        %v3171 = vld [vmem:[%s3169 + $0x8] sm:$0xff]
        %v3172 = vld [vmem:[%s3169 + $0x10] sm:$0xff]
        %v3173 = vld [vmem:[%s3169 + $0x18] sm:$0xff]
        %v3174 = vld [vmem:[%s3169 + $0x20] sm:$0xff]
        %v3175 = vld [vmem:[%s3169 + $0x28] sm:$0xff]
        %v3176 = vld [vmem:[%s3169 + $0x30] sm:$0xff]
        %v3177 = vld [vmem:[%s3169 + $0x38] sm:$0xff]
        %v3178 = vld [vmem:[%s3169 + $0x40] sm:$0xff]
        %v3179 = vld [vmem:[%s3169 + $0x48] sm:$0xff]
        %v3180 = vld [vmem:[%s3169 + $0x50] sm:$0xff]
        %v3181 = vld [vmem:[%s3169 + $0x58] sm:$0xff]
        %v3182 = vld [vmem:[%s3169 + $0x60] sm:$0xff]
        %v3183 = vld [vmem:[%s3169 + $0x68] sm:$0xff]
        %v3184 = vld [vmem:[%s3169 + $0x70] sm:$0xff]
        %v3185 = vld [vmem:[%s3169 + $0x78] sm:$0xff]
        %3186 = vmatpush.msra.mxu0 %v3185
        %3187 = vmatpush.msra.mxu0 %v3184
        %3188 = vmatpush.msra.mxu0 %v3183
        %3189 = vmatpush.msra.mxu0 %v3182
        %3190 = vmatpush.msra.mxu0 %v3181
        %3191 = vmatpush.msra.mxu0 %v3180
        %3192 = vmatpush.msra.mxu0 %v3179
        %3193 = vmatpush.msra.mxu0 %v3178
        %3194 = vmatpush.msra.mxu0 %v3177
        %3195 = vmatpush.msra.mxu0 %v3176
        %3196 = vmatpush.msra.mxu0 %v3175
        %3197 = vmatpush.msra.mxu0 %v3174
        %3198 = vmatpush.msra.mxu0 %v3173
        %3199 = vmatpush.msra.mxu0 %v3172
        %3200 = vmatpush.msra.mxu0 %v3171
        %3201 = vmatpush.msra.mxu0 %v3170
        %3202 = vmatmul.f32.gmra.mxu0 %v3133
        %v3203 = vpop.f32.mrf.mxu0
        %v3204 = vadd.f32 0.0, %v3203
        %3205 = vmatmul.f32.gmra.mxu0 %v3134
        %v3206 = vpop.f32.mrf.mxu0
        %v3207 = vadd.f32 0.0, %v3206
        %3208 = vmatmul.f32.gmra.mxu0 %v3135
        %v3209 = vpop.f32.mrf.mxu0
        %v3210 = vadd.f32 0.0, %v3209
        %3211 = vmatmul.f32.gmra.mxu0 %v3136
        %v3212 = vpop.f32.mrf.mxu0
        %v3213 = vadd.f32 0.0, %v3212
        %3214 = vmatmul.f32.gmra.mxu0 %v3137
        %v3215 = vpop.f32.mrf.mxu0
        %v3216 = vadd.f32 0.0, %v3215
        %3217 = vmatmul.f32.gmra.mxu0 %v3138
        %v3218 = vpop.f32.mrf.mxu0
        %v3219 = vadd.f32 0.0, %v3218
        %3220 = vmatmul.f32.gmra.mxu0 %v3139
        %v3221 = vpop.f32.mrf.mxu0
        %v3222 = vadd.f32 0.0, %v3221
        %3223 = vmatmul.f32.gmra.mxu0 %v3140
        %v3224 = vpop.f32.mrf.mxu0
        %v3225 = vadd.f32 0.0, %v3224
        %3226 = vmatmul.f32.gmra.mxu0 %v3141
        %v3227 = vpop.f32.mrf.mxu0
        %v3228 = vadd.f32 0.0, %v3227
        %3229 = vmatmul.f32.gmra.mxu0 %v3142
        %v3230 = vpop.f32.mrf.mxu0
        %v3231 = vadd.f32 0.0, %v3230
        %3232 = vmatmul.f32.gmra.mxu0 %v3143
        %v3233 = vpop.f32.mrf.mxu0
        %v3234 = vadd.f32 0.0, %v3233
        %3235 = vmatmul.f32.gmra.mxu0 %v3144
        %v3236 = vpop.f32.mrf.mxu0
        %v3237 = vadd.f32 0.0, %v3236
        %3238 = vmatmul.f32.gmra.mxu0 %v3145
        %v3239 = vpop.f32.mrf.mxu0
        %v3240 = vadd.f32 0.0, %v3239
        %3241 = vmatmul.f32.gmra.mxu0 %v3146
        %v3242 = vpop.f32.mrf.mxu0
        %v3243 = vadd.f32 0.0, %v3242
        %3244 = vmatmul.f32.gmra.mxu0 %v3147
        %v3245 = vpop.f32.mrf.mxu0
        %v3246 = vadd.f32 0.0, %v3245
        %3247 = vmatmul.f32.gmra.mxu0 %v3148
        %v3248 = vpop.f32.mrf.mxu0
        %v3249 = vadd.f32 0.0, %v3248
        %3250 = vmatmul.f32.gmra.mxu0 %v3149
        %v3251 = vpop.f32.mrf.mxu0
        %v3252 = vadd.f32 0.0, %v3251
        %3253 = vmatmul.f32.gmra.mxu0 %v3150
        %v3254 = vpop.f32.mrf.mxu0
        %v3255 = vadd.f32 0.0, %v3254
        %3256 = vmatmul.f32.gmra.mxu0 %v3151
        %v3257 = vpop.f32.mrf.mxu0
        %v3258 = vadd.f32 0.0, %v3257
        %3259 = vmatmul.f32.gmra.mxu0 %v3152
        %v3260 = vpop.f32.mrf.mxu0
        %v3261 = vadd.f32 0.0, %v3260
        %3262 = vmatmul.f32.gmra.mxu0 %v3153
        %v3263 = vpop.f32.mrf.mxu0
        %v3264 = vadd.f32 0.0, %v3263
        %3265 = vmatmul.f32.gmra.mxu0 %v3154
        %v3266 = vpop.f32.mrf.mxu0
        %v3267 = vadd.f32 0.0, %v3266
        %3268 = vmatmul.f32.gmra.mxu0 %v3155
        %v3269 = vpop.f32.mrf.mxu0
        %v3270 = vadd.f32 0.0, %v3269
        %3271 = vmatmul.f32.gmra.mxu0 %v3156
        %v3272 = vpop.f32.mrf.mxu0
        %v3273 = vadd.f32 0.0, %v3272
        %3274 = vmatmul.f32.gmra.mxu0 %v3157
        %v3275 = vpop.f32.mrf.mxu0
        %v3276 = vadd.f32 0.0, %v3275
        %3277 = vmatmul.f32.gmra.mxu0 %v3158
        %v3278 = vpop.f32.mrf.mxu0
        %v3279 = vadd.f32 0.0, %v3278
        %3280 = vmatmul.f32.gmra.mxu0 %v3159
        %v3281 = vpop.f32.mrf.mxu0
        %v3282 = vadd.f32 0.0, %v3281
        %3283 = vmatmul.f32.gmra.mxu0 %v3160
        %v3284 = vpop.f32.mrf.mxu0
        %v3285 = vadd.f32 0.0, %v3284
        %3286 = vmatmul.f32.gmra.mxu0 %v3161
        %v3287 = vpop.f32.mrf.mxu0
        %v3288 = vadd.f32 0.0, %v3287
        %3289 = vmatmul.f32.gmra.mxu0 %v3162
        %v3290 = vpop.f32.mrf.mxu0
        %v3291 = vadd.f32 0.0, %v3290
        %3292 = vmatmul.f32.gmra.mxu0 %v3163
        %v3293 = vpop.f32.mrf.mxu0
        %v3294 = vadd.f32 0.0, %v3293
        %3295 = vmatmul.f32.gmra.mxu0 %v3164
        %v3296 = vpop.f32.mrf.mxu0
        %v3297 = vadd.f32 0.0, %v3296
        %3298 = vdwg.mxu0
        %v3299 = vadd.f32 %v3101, %v3204
        %v3300 = vadd.f32 %v3102, %v3207
        %v3301 = vadd.f32 %v3103, %v3210
        %v3302 = vadd.f32 %v3104, %v3213
        %v3303 = vadd.f32 %v3105, %v3216
        %v3304 = vadd.f32 %v3106, %v3219
        %v3305 = vadd.f32 %v3107, %v3222
        %v3306 = vadd.f32 %v3108, %v3225
        %v3307 = vadd.f32 %v3109, %v3228
        %v3308 = vadd.f32 %v3110, %v3231
        %v3309 = vadd.f32 %v3111, %v3234
        %v3310 = vadd.f32 %v3112, %v3237
        %v3311 = vadd.f32 %v3113, %v3240
        %v3312 = vadd.f32 %v3114, %v3243
        %v3313 = vadd.f32 %v3115, %v3246
        %v3314 = vadd.f32 %v3116, %v3249
        %v3315 = vadd.f32 %v3117, %v3252
        %v3316 = vadd.f32 %v3118, %v3255
        %v3317 = vadd.f32 %v3119, %v3258
        %v3318 = vadd.f32 %v3120, %v3261
        %v3319 = vadd.f32 %v3121, %v3264
        %v3320 = vadd.f32 %v3122, %v3267
        %v3321 = vadd.f32 %v3123, %v3270
        %v3322 = vadd.f32 %v3124, %v3273
        %v3323 = vadd.f32 %v3125, %v3276
        %v3324 = vadd.f32 %v3126, %v3279
        %v3325 = vadd.f32 %v3127, %v3282
        %v3326 = vadd.f32 %v3128, %v3285
        %v3327 = vadd.f32 %v3129, %v3288
        %v3328 = vadd.f32 %v3130, %v3291
        %v3329 = vadd.f32 %v3131, %v3294
        %v3330 = vadd.f32 %v3132, %v3297
        %s3331 = scalar_lea.vmem [#allocation3], 640
        %v3332 = vld [vmem:[%s3331] sm:$0xff]
        %v3333 = vld [vmem:[%s3331 + $0x8] sm:$0xff]
        %v3334 = vld [vmem:[%s3331 + $0x10] sm:$0xff]
        %v3335 = vld [vmem:[%s3331 + $0x18] sm:$0xff]
        %v3336 = vld [vmem:[%s3331 + $0x20] sm:$0xff]
        %v3337 = vld [vmem:[%s3331 + $0x28] sm:$0xff]
        %v3338 = vld [vmem:[%s3331 + $0x30] sm:$0xff]
        %v3339 = vld [vmem:[%s3331 + $0x38] sm:$0xff]
        %v3340 = vld [vmem:[%s3331 + $0x40] sm:$0xff]
        %v3341 = vld [vmem:[%s3331 + $0x48] sm:$0xff]
        %v3342 = vld [vmem:[%s3331 + $0x50] sm:$0xff]
        %v3343 = vld [vmem:[%s3331 + $0x58] sm:$0xff]
        %v3344 = vld [vmem:[%s3331 + $0x60] sm:$0xff]
        %v3345 = vld [vmem:[%s3331 + $0x68] sm:$0xff]
        %v3346 = vld [vmem:[%s3331 + $0x70] sm:$0xff]
        %v3347 = vld [vmem:[%s3331 + $0x78] sm:$0xff]
        %3348 = vmatpush.msra.mxu0 %v3347
        %3349 = vmatpush.msra.mxu0 %v3346
        %3350 = vmatpush.msra.mxu0 %v3345
        %3351 = vmatpush.msra.mxu0 %v3344
        %3352 = vmatpush.msra.mxu0 %v3343
        %3353 = vmatpush.msra.mxu0 %v3342
        %3354 = vmatpush.msra.mxu0 %v3341
        %3355 = vmatpush.msra.mxu0 %v3340
        %3356 = vmatpush.msra.mxu0 %v3339
        %3357 = vmatpush.msra.mxu0 %v3338
        %3358 = vmatpush.msra.mxu0 %v3337
        %3359 = vmatpush.msra.mxu0 %v3336
        %3360 = vmatpush.msra.mxu0 %v3335
        %3361 = vmatpush.msra.mxu0 %v3334
        %3362 = vmatpush.msra.mxu0 %v3333
        %3363 = vmatpush.msra.mxu0 %v3332
        %3364 = vmatmul.f32.gmra.mxu0 %v3135
        %v3365 = vpop.f32.mrf.mxu0
        %v3366 = vadd.f32 0.0, %v3365
        %3367 = vmatmul.f32.gmra.mxu0 %v3136
        %v3368 = vpop.f32.mrf.mxu0
        %v3369 = vadd.f32 0.0, %v3368
        %3370 = vmatmul.f32.gmra.mxu0 %v3137
        %v3371 = vpop.f32.mrf.mxu0
        %v3372 = vadd.f32 0.0, %v3371
        %3373 = vmatmul.f32.gmra.mxu0 %v3138
        %v3374 = vpop.f32.mrf.mxu0
        %v3375 = vadd.f32 0.0, %v3374
        %3376 = vmatmul.f32.gmra.mxu0 %v3139
        %v3377 = vpop.f32.mrf.mxu0
        %v3378 = vadd.f32 0.0, %v3377
        %3379 = vmatmul.f32.gmra.mxu0 %v3140
        %v3380 = vpop.f32.mrf.mxu0
        %v3381 = vadd.f32 0.0, %v3380
        %3382 = vmatmul.f32.gmra.mxu0 %v3141
        %v3383 = vpop.f32.mrf.mxu0
        %v3384 = vadd.f32 0.0, %v3383
        %3385 = vmatmul.f32.gmra.mxu0 %v3142
        %v3386 = vpop.f32.mrf.mxu0
        %v3387 = vadd.f32 0.0, %v3386
        %3388 = vmatmul.f32.gmra.mxu0 %v3143
        %v3389 = vpop.f32.mrf.mxu0
        %v3390 = vadd.f32 0.0, %v3389
        %3391 = vmatmul.f32.gmra.mxu0 %v3144
        %v3392 = vpop.f32.mrf.mxu0
        %v3393 = vadd.f32 0.0, %v3392
        %3394 = vmatmul.f32.gmra.mxu0 %v3145
        %v3395 = vpop.f32.mrf.mxu0
        %v3396 = vadd.f32 0.0, %v3395
        %3397 = vmatmul.f32.gmra.mxu0 %v3146
        %v3398 = vpop.f32.mrf.mxu0
        %v3399 = vadd.f32 0.0, %v3398
        %3400 = vmatmul.f32.gmra.mxu0 %v3147
        %v3401 = vpop.f32.mrf.mxu0
        %v3402 = vadd.f32 0.0, %v3401
        %3403 = vmatmul.f32.gmra.mxu0 %v3148
        %v3404 = vpop.f32.mrf.mxu0
        %v3405 = vadd.f32 0.0, %v3404
        %3406 = vmatmul.f32.gmra.mxu0 %v3149
        %v3407 = vpop.f32.mrf.mxu0
        %v3408 = vadd.f32 0.0, %v3407
        %3409 = vmatmul.f32.gmra.mxu0 %v3150
        %v3410 = vpop.f32.mrf.mxu0
        %v3411 = vadd.f32 0.0, %v3410
        %3412 = vmatmul.f32.gmra.mxu0 %v3151
        %v3413 = vpop.f32.mrf.mxu0
        %v3414 = vadd.f32 0.0, %v3413
        %3415 = vmatmul.f32.gmra.mxu0 %v3152
        %v3416 = vpop.f32.mrf.mxu0
        %v3417 = vadd.f32 0.0, %v3416
        %3418 = vmatmul.f32.gmra.mxu0 %v3153
        %v3419 = vpop.f32.mrf.mxu0
        %v3420 = vadd.f32 0.0, %v3419
        %3421 = vmatmul.f32.gmra.mxu0 %v3154
        %v3422 = vpop.f32.mrf.mxu0
        %v3423 = vadd.f32 0.0, %v3422
        %3424 = vmatmul.f32.gmra.mxu0 %v3155
        %v3425 = vpop.f32.mrf.mxu0
        %v3426 = vadd.f32 0.0, %v3425
        %3427 = vmatmul.f32.gmra.mxu0 %v3156
        %v3428 = vpop.f32.mrf.mxu0
        %v3429 = vadd.f32 0.0, %v3428
        %3430 = vmatmul.f32.gmra.mxu0 %v3157
        %v3431 = vpop.f32.mrf.mxu0
        %v3432 = vadd.f32 0.0, %v3431
        %3433 = vmatmul.f32.gmra.mxu0 %v3158
        %v3434 = vpop.f32.mrf.mxu0
        %v3435 = vadd.f32 0.0, %v3434
        %3436 = vmatmul.f32.gmra.mxu0 %v3159
        %v3437 = vpop.f32.mrf.mxu0
        %v3438 = vadd.f32 0.0, %v3437
        %3439 = vmatmul.f32.gmra.mxu0 %v3160
        %v3440 = vpop.f32.mrf.mxu0
        %v3441 = vadd.f32 0.0, %v3440
        %3442 = vmatmul.f32.gmra.mxu0 %v3161
        %v3443 = vpop.f32.mrf.mxu0
        %v3444 = vadd.f32 0.0, %v3443
        %3445 = vmatmul.f32.gmra.mxu0 %v3162
        %v3446 = vpop.f32.mrf.mxu0
        %v3447 = vadd.f32 0.0, %v3446
        %3448 = vmatmul.f32.gmra.mxu0 %v3163
        %v3449 = vpop.f32.mrf.mxu0
        %v3450 = vadd.f32 0.0, %v3449
        %3451 = vmatmul.f32.gmra.mxu0 %v3164
        %v3452 = vpop.f32.mrf.mxu0
        %v3453 = vadd.f32 0.0, %v3452
        %3454 = vmatmul.f32.gmra.mxu0 %v3165
        %v3455 = vpop.f32.mrf.mxu0
        %v3456 = vadd.f32 0.0, %v3455
        %3457 = vmatmul.f32.gmra.mxu0 %v3166
        %v3458 = vpop.f32.mrf.mxu0
        %v3459 = vadd.f32 0.0, %v3458
        %3460 = vdwg.mxu0
        %v3461 = vadd.f32 %v3299, %v3366
        %v3462 = vadd.f32 %v3300, %v3369
        %v3463 = vadd.f32 %v3301, %v3372
        %v3464 = vadd.f32 %v3302, %v3375
        %v3465 = vadd.f32 %v3303, %v3378
        %v3466 = vadd.f32 %v3304, %v3381
        %v3467 = vadd.f32 %v3305, %v3384
        %v3468 = vadd.f32 %v3306, %v3387
        %v3469 = vadd.f32 %v3307, %v3390
        %v3470 = vadd.f32 %v3308, %v3393
        %v3471 = vadd.f32 %v3309, %v3396
        %v3472 = vadd.f32 %v3310, %v3399
        %v3473 = vadd.f32 %v3311, %v3402
        %v3474 = vadd.f32 %v3312, %v3405
        %v3475 = vadd.f32 %v3313, %v3408
        %v3476 = vadd.f32 %v3314, %v3411
        %v3477 = vadd.f32 %v3315, %v3414
        %v3478 = vadd.f32 %v3316, %v3417
        %v3479 = vadd.f32 %v3317, %v3420
        %v3480 = vadd.f32 %v3318, %v3423
        %v3481 = vadd.f32 %v3319, %v3426
        %v3482 = vadd.f32 %v3320, %v3429
        %v3483 = vadd.f32 %v3321, %v3432
        %v3484 = vadd.f32 %v3322, %v3435
        %v3485 = vadd.f32 %v3323, %v3438
        %v3486 = vadd.f32 %v3324, %v3441
        %v3487 = vadd.f32 %v3325, %v3444
        %v3488 = vadd.f32 %v3326, %v3447
        %v3489 = vadd.f32 %v3327, %v3450
        %v3490 = vadd.f32 %v3328, %v3453
        %v3491 = vadd.f32 %v3329, %v3456
        %v3492 = vadd.f32 %v3330, %v3459
        %s3493 = scalar_lea.vmem [#allocation3], 1024
        %v3494 = vld [vmem:[%s3493] sm:$0xff]
        %v3495 = vld [vmem:[%s3493 + $0x8] sm:$0xff]
        %v3496 = vld [vmem:[%s3493 + $0x10] sm:$0xff]
        %v3497 = vld [vmem:[%s3493 + $0x18] sm:$0xff]
        %v3498 = vld [vmem:[%s3493 + $0x20] sm:$0xff]
        %v3499 = vld [vmem:[%s3493 + $0x28] sm:$0xff]
        %v3500 = vld [vmem:[%s3493 + $0x30] sm:$0xff]
        %v3501 = vld [vmem:[%s3493 + $0x38] sm:$0xff]
        %v3502 = vld [vmem:[%s3493 + $0x40] sm:$0xff]
        %v3503 = vld [vmem:[%s3493 + $0x48] sm:$0xff]
        %v3504 = vld [vmem:[%s3493 + $0x50] sm:$0xff]
        %v3505 = vld [vmem:[%s3493 + $0x58] sm:$0xff]
        %v3506 = vld [vmem:[%s3493 + $0x60] sm:$0xff]
        %v3507 = vld [vmem:[%s3493 + $0x68] sm:$0xff]
        %v3508 = vld [vmem:[%s3493 + $0x70] sm:$0xff]
        %v3509 = vld [vmem:[%s3493 + $0x78] sm:$0xff]
        %3510 = vmatpush.msra.mxu0 %v3509
        %3511 = vmatpush.msra.mxu0 %v3508
        %3512 = vmatpush.msra.mxu0 %v3507
        %3513 = vmatpush.msra.mxu0 %v3506
        %3514 = vmatpush.msra.mxu0 %v3505
        %3515 = vmatpush.msra.mxu0 %v3504
        %3516 = vmatpush.msra.mxu0 %v3503
        %3517 = vmatpush.msra.mxu0 %v3502
        %3518 = vmatpush.msra.mxu0 %v3501
        %3519 = vmatpush.msra.mxu0 %v3500
        %3520 = vmatpush.msra.mxu0 %v3499
        %3521 = vmatpush.msra.mxu0 %v3498
        %3522 = vmatpush.msra.mxu0 %v3497
        %3523 = vmatpush.msra.mxu0 %v3496
        %3524 = vmatpush.msra.mxu0 %v3495
        %3525 = vmatpush.msra.mxu0 %v3494
        %3526 = vmatmul.f32.gmra.mxu0 %v3137
        %v3527 = vpop.f32.mrf.mxu0
        %v3528 = vadd.f32 0.0, %v3527
        %3529 = vmatmul.f32.gmra.mxu0 %v3138
        %v3530 = vpop.f32.mrf.mxu0
        %v3531 = vadd.f32 0.0, %v3530
        %3532 = vmatmul.f32.gmra.mxu0 %v3139
        %v3533 = vpop.f32.mrf.mxu0
        %v3534 = vadd.f32 0.0, %v3533
        %3535 = vmatmul.f32.gmra.mxu0 %v3140
        %v3536 = vpop.f32.mrf.mxu0
        %v3537 = vadd.f32 0.0, %v3536
        %3538 = vmatmul.f32.gmra.mxu0 %v3141
        %v3539 = vpop.f32.mrf.mxu0
        %v3540 = vadd.f32 0.0, %v3539
        %3541 = vmatmul.f32.gmra.mxu0 %v3142
        %v3542 = vpop.f32.mrf.mxu0
        %v3543 = vadd.f32 0.0, %v3542
        %3544 = vmatmul.f32.gmra.mxu0 %v3143
        %v3545 = vpop.f32.mrf.mxu0
        %v3546 = vadd.f32 0.0, %v3545
        %3547 = vmatmul.f32.gmra.mxu0 %v3144
        %v3548 = vpop.f32.mrf.mxu0
        %v3549 = vadd.f32 0.0, %v3548
        %3550 = vmatmul.f32.gmra.mxu0 %v3145
        %v3551 = vpop.f32.mrf.mxu0
        %v3552 = vadd.f32 0.0, %v3551
        %3553 = vmatmul.f32.gmra.mxu0 %v3146
        %v3554 = vpop.f32.mrf.mxu0
        %v3555 = vadd.f32 0.0, %v3554
        %3556 = vmatmul.f32.gmra.mxu0 %v3147
        %v3557 = vpop.f32.mrf.mxu0
        %v3558 = vadd.f32 0.0, %v3557
        %3559 = vmatmul.f32.gmra.mxu0 %v3148
        %v3560 = vpop.f32.mrf.mxu0
        %v3561 = vadd.f32 0.0, %v3560
        %3562 = vmatmul.f32.gmra.mxu0 %v3149
        %v3563 = vpop.f32.mrf.mxu0
        %v3564 = vadd.f32 0.0, %v3563
        %3565 = vmatmul.f32.gmra.mxu0 %v3150
        %v3566 = vpop.f32.mrf.mxu0
        %v3567 = vadd.f32 0.0, %v3566
        %3568 = vmatmul.f32.gmra.mxu0 %v3151
        %v3569 = vpop.f32.mrf.mxu0
        %v3570 = vadd.f32 0.0, %v3569
        %3571 = vmatmul.f32.gmra.mxu0 %v3152
        %v3572 = vpop.f32.mrf.mxu0
        %v3573 = vadd.f32 0.0, %v3572
        %3574 = vmatmul.f32.gmra.mxu0 %v3153
        %v3575 = vpop.f32.mrf.mxu0
        %v3576 = vadd.f32 0.0, %v3575
        %3577 = vmatmul.f32.gmra.mxu0 %v3154
        %v3578 = vpop.f32.mrf.mxu0
        %v3579 = vadd.f32 0.0, %v3578
        %3580 = vmatmul.f32.gmra.mxu0 %v3155
        %v3581 = vpop.f32.mrf.mxu0
        %v3582 = vadd.f32 0.0, %v3581
        %3583 = vmatmul.f32.gmra.mxu0 %v3156
        %v3584 = vpop.f32.mrf.mxu0
        %v3585 = vadd.f32 0.0, %v3584
        %3586 = vmatmul.f32.gmra.mxu0 %v3157
        %v3587 = vpop.f32.mrf.mxu0
        %v3588 = vadd.f32 0.0, %v3587
        %3589 = vmatmul.f32.gmra.mxu0 %v3158
        %v3590 = vpop.f32.mrf.mxu0
        %v3591 = vadd.f32 0.0, %v3590
        %3592 = vmatmul.f32.gmra.mxu0 %v3159
        %v3593 = vpop.f32.mrf.mxu0
        %v3594 = vadd.f32 0.0, %v3593
        %3595 = vmatmul.f32.gmra.mxu0 %v3160
        %v3596 = vpop.f32.mrf.mxu0
        %v3597 = vadd.f32 0.0, %v3596
        %3598 = vmatmul.f32.gmra.mxu0 %v3161
        %v3599 = vpop.f32.mrf.mxu0
        %v3600 = vadd.f32 0.0, %v3599
        %3601 = vmatmul.f32.gmra.mxu0 %v3162
        %v3602 = vpop.f32.mrf.mxu0
        %v3603 = vadd.f32 0.0, %v3602
        %3604 = vmatmul.f32.gmra.mxu0 %v3163
        %v3605 = vpop.f32.mrf.mxu0
        %v3606 = vadd.f32 0.0, %v3605
        %3607 = vmatmul.f32.gmra.mxu0 %v3164
        %v3608 = vpop.f32.mrf.mxu0
        %v3609 = vadd.f32 0.0, %v3608
        %3610 = vmatmul.f32.gmra.mxu0 %v3165
        %v3611 = vpop.f32.mrf.mxu0
        %v3612 = vadd.f32 0.0, %v3611
        %3613 = vmatmul.f32.gmra.mxu0 %v3166
        %v3614 = vpop.f32.mrf.mxu0
        %v3615 = vadd.f32 0.0, %v3614
        %3616 = vmatmul.f32.gmra.mxu0 %v3167
        %v3617 = vpop.f32.mrf.mxu0
        %v3618 = vadd.f32 0.0, %v3617
        %3619 = vmatmul.f32.gmra.mxu0 %v3168
        %v3620 = vpop.f32.mrf.mxu0
        %v3621 = vadd.f32 0.0, %v3620
        %3622 = vdwg.mxu0
        %v3623 = vadd.f32 %v3461, %v3528
        %v3624 = vadd.f32 %v3462, %v3531
        %v3625 = vadd.f32 %v3463, %v3534
        %v3626 = vadd.f32 %v3464, %v3537
        %v3627 = vadd.f32 %v3465, %v3540
        %v3628 = vadd.f32 %v3466, %v3543
        %v3629 = vadd.f32 %v3467, %v3546
        %v3630 = vadd.f32 %v3468, %v3549
        %v3631 = vadd.f32 %v3469, %v3552
        %v3632 = vadd.f32 %v3470, %v3555
        %v3633 = vadd.f32 %v3471, %v3558
        %v3634 = vadd.f32 %v3472, %v3561
        %v3635 = vadd.f32 %v3473, %v3564
        %v3636 = vadd.f32 %v3474, %v3567
        %v3637 = vadd.f32 %v3475, %v3570
        %v3638 = vadd.f32 %v3476, %v3573
        %v3639 = vadd.f32 %v3477, %v3576
        %v3640 = vadd.f32 %v3478, %v3579
        %v3641 = vadd.f32 %v3479, %v3582
        %v3642 = vadd.f32 %v3480, %v3585
        %v3643 = vadd.f32 %v3481, %v3588
        %v3644 = vadd.f32 %v3482, %v3591
        %v3645 = vadd.f32 %v3483, %v3594
        %v3646 = vadd.f32 %v3484, %v3597
        %v3647 = vadd.f32 %v3485, %v3600
        %v3648 = vadd.f32 %v3486, %v3603
        %v3649 = vadd.f32 %v3487, %v3606
        %v3650 = vadd.f32 %v3488, %v3609
        %v3651 = vadd.f32 %v3489, %v3612
        %v3652 = vadd.f32 %v3490, %v3615
        %v3653 = vadd.f32 %v3491, %v3618
        %v3654 = vadd.f32 %v3492, %v3621
        %v3655 = vld [vmem:[%s4] sm:$0x1]
        %v3657 = vperm.slane %v3655, 0
        %v3659 = vadd.f32 %v3623, %v3657
        %v3660 = vadd.f32 %v3624, %v3657
        %v3661 = vadd.f32 %v3625, %v3657
        %v3662 = vadd.f32 %v3626, %v3657
        %v3663 = vadd.f32 %v3627, %v3657
        %v3664 = vadd.f32 %v3628, %v3657
        %v3665 = vadd.f32 %v3629, %v3657
        %v3666 = vadd.f32 %v3630, %v3657
        %v3667 = vadd.f32 %v3631, %v3657
        %v3668 = vadd.f32 %v3632, %v3657
        %v3669 = vadd.f32 %v3633, %v3657
        %v3670 = vadd.f32 %v3634, %v3657
        %v3671 = vadd.f32 %v3635, %v3657
        %v3672 = vadd.f32 %v3636, %v3657
        %v3673 = vadd.f32 %v3637, %v3657
        %v3674 = vadd.f32 %v3638, %v3657
        %v3675 = vadd.f32 %v3639, %v3657
        %v3676 = vadd.f32 %v3640, %v3657
        %v3677 = vadd.f32 %v3641, %v3657
        %v3678 = vadd.f32 %v3642, %v3657
        %v3679 = vadd.f32 %v3643, %v3657
        %v3680 = vadd.f32 %v3644, %v3657
        %v3681 = vadd.f32 %v3645, %v3657
        %v3682 = vadd.f32 %v3646, %v3657
        %v3683 = vadd.f32 %v3647, %v3657
        %v3684 = vadd.f32 %v3648, %v3657
        %v3685 = vadd.f32 %v3649, %v3657
        %v3686 = vadd.f32 %v3650, %v3657
        %v3687 = vadd.f32 %v3651, %v3657
        %v3688 = vadd.f32 %v3652, %v3657
        %v3689 = vadd.f32 %v3653, %v3657
        %v3690 = vadd.f32 %v3654, %v3657
        %v3691 = vmax.f32 %v3659, 0.0
        %v3692 = vmax.f32 %v3660, 0.0
        %v3693 = vmax.f32 %v3661, 0.0
        %v3694 = vmax.f32 %v3662, 0.0
        %v3695 = vmax.f32 %v3663, 0.0
        %v3696 = vmax.f32 %v3664, 0.0
        %v3697 = vmax.f32 %v3665, 0.0
        %v3698 = vmax.f32 %v3666, 0.0
        %v3699 = vmax.f32 %v3667, 0.0
        %v3700 = vmax.f32 %v3668, 0.0
        %v3701 = vmax.f32 %v3669, 0.0
        %v3702 = vmax.f32 %v3670, 0.0
        %v3703 = vmax.f32 %v3671, 0.0
        %v3704 = vmax.f32 %v3672, 0.0
        %v3705 = vmax.f32 %v3673, 0.0
        %v3706 = vmax.f32 %v3674, 0.0
        %v3707 = vmax.f32 %v3675, 0.0
        %v3708 = vmax.f32 %v3676, 0.0
        %v3709 = vmax.f32 %v3677, 0.0
        %v3710 = vmax.f32 %v3678, 0.0
        %v3711 = vmax.f32 %v3679, 0.0
        %v3712 = vmax.f32 %v3680, 0.0
        %v3713 = vmax.f32 %v3681, 0.0
        %v3714 = vmax.f32 %v3682, 0.0
        %v3715 = vmax.f32 %v3683, 0.0
        %v3716 = vmax.f32 %v3684, 0.0
        %v3717 = vmax.f32 %v3685, 0.0
        %v3718 = vmax.f32 %v3686, 0.0
        %v3719 = vmax.f32 %v3687, 0.0
        %v3720 = vmax.f32 %v3688, 0.0
        %v3721 = vmax.f32 %v3689, 0.0
        %v3722 = vmax.f32 %v3690, 0.0
        %3723 = vst [vmem:[%s234] sm:$0xff] %v3691
        %3724 = vst [vmem:[%s234 + $0x8] sm:$0xff] %v3692
        %3725 = vst [vmem:[%s234 + $0x10] sm:$0xff] %v3693
        %3726 = vst [vmem:[%s234 + $0x18] sm:$0xff] %v3694
        %3727 = vst [vmem:[%s234 + $0x20] sm:$0xff] %v3695
        %3728 = vst [vmem:[%s234 + $0x28] sm:$0xff] %v3696
        %3729 = vst [vmem:[%s234 + $0x30] sm:$0xff] %v3697
        %3730 = vst [vmem:[%s234 + $0x38] sm:$0xff] %v3698
        %3731 = vst [vmem:[%s234 + $0x40] sm:$0xff] %v3699
        %3732 = vst [vmem:[%s234 + $0x48] sm:$0xff] %v3700
        %3733 = vst [vmem:[%s234 + $0x50] sm:$0xff] %v3701
        %3734 = vst [vmem:[%s234 + $0x58] sm:$0xff] %v3702
        %3735 = vst [vmem:[%s234 + $0x60] sm:$0xff] %v3703
        %3736 = vst [vmem:[%s234 + $0x68] sm:$0xff] %v3704
        %3737 = vst [vmem:[%s234 + $0x70] sm:$0xff] %v3705
        %3738 = vst [vmem:[%s234 + $0x78] sm:$0xff] %v3706
        %3739 = vst [vmem:[%s234 + $0x80] sm:$0xff] %v3707
        %3740 = vst [vmem:[%s234 + $0x88] sm:$0xff] %v3708
        %3741 = vst [vmem:[%s234 + $0x90] sm:$0xff] %v3709
        %3742 = vst [vmem:[%s234 + $0x98] sm:$0xff] %v3710
        %3743 = vst [vmem:[%s234 + $0xa0] sm:$0xff] %v3711
        %3744 = vst [vmem:[%s234 + $0xa8] sm:$0xff] %v3712
        %3745 = vst [vmem:[%s234 + $0xb0] sm:$0xff] %v3713
        %3746 = vst [vmem:[%s234 + $0xb8] sm:$0xff] %v3714
        %3747 = vst [vmem:[%s234 + $0xc0] sm:$0xff] %v3715
        %3748 = vst [vmem:[%s234 + $0xc8] sm:$0xff] %v3716
        %3749 = vst [vmem:[%s234 + $0xd0] sm:$0xff] %v3717
        %3750 = vst [vmem:[%s234 + $0xd8] sm:$0xff] %v3718
        %3751 = vst [vmem:[%s234 + $0xe0] sm:$0xff] %v3719
        %3752 = vst [vmem:[%s234 + $0xe8] sm:$0xff] %v3720
        %3753 = vst [vmem:[%s234 + $0xf0] sm:$0xff] %v3721
        %3754 = vst [vmem:[%s234 + $0xf8] sm:$0xff] %v3722
        %s3755 = sand.u32 %s138, 1
        %s3756 = scalar_lea.sflag [#allocation5], %s3755
        %s3757 = sand.u32 %s138, 1
        %s3758 = smul.addr %s3757, 256
        %s3759 = scalar_lea.vmem [#allocation6], %s3758
        // Predicated region
        $region49: #{tpu_custom_call.1} parent=39 // pred_check
          %p3760 = pneg %p148
        $region50: #{tpu_custom_call.1} parent=39 // pred_check_branch
          %3762 = sbr.rel (%p3760) target = $region52
        $region51: #{tpu_custom_call.1} parent=39 // pred_region
          %3764 = vsyncadd %s3756, 0
          %s3765 = smul.addr %s20, 32
          %s3766 = smul.addr %s3765, 8
          %s3767 = scalar_lea.hbm %s5, %s3766
          %s3768 = sshll.u32 %s3759, 4
          %s3769 = int_to_ptr.vmem [resolvable:$true] %s3768
          %s3770 = sshll.u32 %s3767, 4
          %s3771 = int_to_ptr.hbm [resolvable:$true] %s3770
          %3776 = dma.vmem_to_hbm [thread:$0]  %s3769, 4096, %s3771, %s3756, 128, 128, 8
        $region52: #{tpu_custom_call.1} parent=39 // pred_fallthru
          _
      $region40: #{tpu_custom_call.1} parent=5 // pred_fallthru
        _
      %p3777 = scmp.le.s32.totalorder 2, %s15
      // Predicated region
      $region53: #{tpu_custom_call.1} parent=5 // pred_check
        %p3778 = pneg %p3777
      $region54: #{tpu_custom_call.1} parent=5 // pred_check_branch
        %3780 = sbr.rel (%p3778) target = $region56
      $region55: #{tpu_custom_call.1} parent=5 // pred_region
        %s3781 = ssub.s32 %s15, 2
        // Predicated region
        $region57: #{tpu_custom_call.1} parent=55 // pred_check
          %p3782 = pneg %p154
        $region58: #{tpu_custom_call.1} parent=55 // pred_check_branch
          %3784 = sbr.rel (%p3782) target = $region60
        $region59: #{tpu_custom_call.1} parent=55 // pred_region
          %s3785 = sand.u32 %s139, 1
          %s3786 = scalar_lea.sflag [#allocation5], %s3785
          %s3787 = sand.u32 %s139, 1
          %s3788 = smul.addr %s3787, 256
          %s3789 = scalar_lea.vmem [#allocation6], %s3788
          %3791 = dma.done %s3786, 4096
        $region60: #{tpu_custom_call.1} parent=55 // pred_fallthru
          _
      $region56: #{tpu_custom_call.1} parent=5 // pred_fallthru
        _
    $region6: #{tpu_custom_call.1} parent=1 // loop_footer
      %s19 = sadd.s32 1, %s15
    $region7: #{tpu_custom_call.1} parent=1 // loop_footer_branch
      %14 = sbr.rel target = $region3
    $region8: #{tpu_custom_call.1} parent=1 // loop_exit
      _
    %3792 = vsyncpa [#allocation4], 1
    %s3793 = scalar_lea.sflag [#allocation4], 1
    %3794 = vsyncpa %s3793, 1
    %3795 = vsyncpa [#allocation5], 1
    %s3796 = scalar_lea.sflag [#allocation5], 1
    %3797 = vsyncpa %s3796, 1

</llo_original>
